<compile_context>
chip_gen: v6e
topology: v6e:2x2x1
jax: 0.10.0
libtpu: 0.0.40
codegen_flags: <defaults>
</compile_context>

<pallas_src>
import math
from functools import partial

import jax
import jax.numpy as jnp
from jax.experimental import pallas as pl
from jax.experimental.pallas import tpu as pltpu  # noqa: F401  (TPU backend)

d_k = d_v = 2
d_model = 16
n_heads = 8
LN_EPS = 1e-5


def mha_kernel(x_ref, resid_ref, wqkv_ref, wfc_ref, out_ref, attn_ref, *, B, S):
    """Fused MHA forward, single invocation (no grid).

    x_ref    : [B*S, 3*d_model]            packed [input_Q | input_K | input_V]
    resid_ref: [B, S, d_model]             input_Q (residual branch)
    wqkv_ref : [3*d_model, 3*d_model]      block_diag(W_Q.T, W_K.T, W_V.T)
    wfc_ref  : [n_heads*B, d_v, d_model]   W_fc.T.reshape(H, d_v, D) repeated per batch
    out_ref  : [B, S, d_model]
    attn_ref : [n_heads*B, S, S]           n = h*B + b (wrapper reorders to [B,H,S,S])
    """
    H = n_heads

    x = x_ref[...]                                                     # [B*S, 3D]

    # --- fused Q/K/V projection: one MXU push ------------------------------
    qkv = jnp.dot(x, wqkv_ref[...], preferred_element_type=jnp.float32)  # [B*S, 3D]

    # --- re-layout packed heads into a leading batch axis n = h*B + b ------
    # (static sublane/lane slices + leading-axis stack: cheap vector moves)
    def split_heads(off):
        parts = []
        for h in range(H):
            for b in range(B):
                parts.append(
                    qkv[b * S:(b + 1) * S, off + h * d_k: off + (h + 1) * d_k])
        return jnp.stack(parts, axis=0)                                # [H*B, S, d_k]

    q = split_heads(0)
    k = split_heads(d_model)
    v = split_heads(2 * d_model)

    # --- all heads & batches in one batched matmul + one softmax pass ------
    scale = 1.0 / math.sqrt(d_k)
    scores = jnp.einsum("nqd,nkd->nqk", q, k,
                        preferred_element_type=jnp.float32) * scale    # [H*B, S, S]
    m = jnp.max(scores, axis=-1, keepdims=True)
    e = jnp.exp(scores - m)
    denom = jnp.sum(e, axis=-1, keepdims=True)
    attn = e * pl.reciprocal(denom, approx=False)                      # exact, on EUP
    attn_ref[...] = attn.astype(attn_ref.dtype)                        # single store

    ctx = jnp.einsum("nqk,nkd->nqd", attn, v,
                     preferred_element_type=jnp.float32)               # [H*B, S, d_v]

    # --- output projection folded per head (no lane concat) ----------------
    proj = jnp.einsum("nqd,ndo->nqo", ctx, wfc_ref[...],
                      preferred_element_type=jnp.float32)              # [H*B, S, D]
    output = jnp.sum(proj.reshape(H, B, S, d_model), axis=0)           # [B, S, D]

    # --- residual + LayerNorm (gamma=1, beta=0, eps=1e-5) -------------------
    y = output + resid_ref[...]
    mean = jnp.mean(y, axis=-1, keepdims=True)
    var = jnp.mean((y - mean) ** 2, axis=-1, keepdims=True)
    out_ref[...] = ((y - mean) * jax.lax.rsqrt(var + LN_EPS)).astype(out_ref.dtype)


def multi_head_attention(input_Q, input_K, input_V, W_Q, W_K, W_V, W_fc):
    B, S, D = input_Q.shape
    assert D == d_model
    H = n_heads
    f32 = jnp.float32

    # ----- host-side one-time weight / input plumbing (layout, no compute) ---
    zero = jnp.zeros((D, D), f32)
    w_qkv = jnp.block([[W_Q.T, zero, zero],
                       [zero, W_K.T, zero],
                       [zero, zero, W_V.T]]).astype(f32)               # [3D, 3D]
    # W_fc.T split per head and repeated per batch element (n = h*B + b).
    wfc_heads = jnp.repeat(W_fc.T.reshape(H, d_v, D).astype(f32), B, axis=0)
    x = jnp.concatenate([input_Q, input_K, input_V],
                        axis=-1).reshape(B * S, 3 * D).astype(f32)

    out, attn_nqk = pl.pallas_call(
        partial(mha_kernel, B=B, S=S),
        out_shape=(
            jax.ShapeDtypeStruct((B, S, D), f32),
            jax.ShapeDtypeStruct((H * B, S, S), f32),
        ),
    )(x, input_Q.astype(f32), w_qkv, wfc_heads)

    # wrapper-side layout plumbing: [H*B, S, S] (n = h*B + b) -> [B, H, S, S]
    attn = attn_nqk.reshape(H, B, S, S).transpose(1, 0, 2, 3)
    return out, attn


def _ref_mha(input_Q, input_K, input_V, W_Q, W_K, W_V, W_fc):
    """Pure-JAX reference of the PyTorch forward pass."""
    B, S, D = input_Q.shape
    Q = (input_Q @ W_Q.T).reshape(B, S, n_heads, d_k).transpose(0, 2, 1, 3)
    K = (input_K @ W_K.T).reshape(B, S, n_heads, d_k).transpose(0, 2, 1, 3)
    V = (input_V @ W_V.T).reshape(B, S, n_heads, d_v).transpose(0, 2, 1, 3)
    scores = jnp.einsum("bhqd,bhkd->bhqk", Q, K) / jnp.sqrt(jnp.float32(d_k))
    attn = jax.nn.softmax(scores, axis=-1)
    context = jnp.einsum("bhqk,bhkd->bhqd", attn, V)
    context = context.transpose(0, 2, 1, 3).reshape(B, S, n_heads * d_v)
    output = context @ W_fc.T + input_Q
    mean = jnp.mean(output, axis=-1, keepdims=True)
    var = jnp.mean((output - mean) ** 2, axis=-1, keepdims=True)
    return (output - mean) * jax.lax.rsqrt(var + LN_EPS), attn


def _init_linear(key, out_f, in_f):
    # PyTorch nn.Linear default: U(-1/sqrt(in_f), 1/sqrt(in_f)), shape [out, in]
    bound = 1.0 / math.sqrt(in_f)
    return jax.random.uniform(key, (out_f, in_f), jnp.float32, -bound, bound)


if __name__ == "__main__":
    B, S = 2, 8
    key = jax.random.PRNGKey(0)
    kq, kk, kv, kwq, kwk, kwv, kwf = jax.random.split(key, 7)

    input_Q = jax.random.normal(kq, (B, S, d_model), jnp.float32)
    input_K = jax.random.normal(kk, (B, S, d_model), jnp.float32)
    input_V = jax.random.normal(kv, (B, S, d_model), jnp.float32)

    W_Q = _init_linear(kwq, d_k * n_heads, d_model)
    W_K = _init_linear(kwk, d_k * n_heads, d_model)
    W_V = _init_linear(kwv, d_v * n_heads, d_model)
    W_fc = _init_linear(kwf, d_model, n_heads * d_v)

    out, attn = multi_head_attention(input_Q, input_K, input_V,
                                     W_Q, W_K, W_V, W_fc)
    jax.block_until_ready((out, attn))

    out_ref, attn_ref = _ref_mha(input_Q, input_K, input_V,
                                 W_Q, W_K, W_V, W_fc)
    assert jnp.allclose(out, out_ref, atol=1e-4, rtol=1e-4)
    assert jnp.allclose(attn, attn_ref, atol=1e-5, rtol=1e-5)

    print("KERNEL_OK")
</pallas_src>

<mosaic_0001>
module attributes {stable_mosaic.version = 11 : i64} {
  func.func @mha_kernel(%arg0: memref<16x48xf32, #tpu.memory_space<vmem>>, %arg1: memref<2x8x16xf32, #tpu.memory_space<vmem>>, %arg2: memref<48x48xf32, #tpu.memory_space<vmem>>, %arg3: memref<16x2x16xf32, #tpu.memory_space<vmem>>, %arg4: memref<2x8x16xf32, #tpu.memory_space<vmem>>, %arg5: memref<16x8x8xf32, #tpu.memory_space<vmem>>) attributes {dimension_semantics = [], scalar_prefetch = 0 : i64, scratch_operands = 0 : i64, tpu.core_type = #tpu.core_type<tc>} {
    %c0 = arith.constant 0 : index
    %c0_0 = arith.constant 0 : index
    %0 = vector.load %arg0[%c0, %c0_0] : memref<16x48xf32, #tpu.memory_space<vmem>>, vector<16x48xf32>
    %c0_1 = arith.constant 0 : index
    %c0_2 = arith.constant 0 : index
    %1 = vector.load %arg2[%c0_1, %c0_2] : memref<48x48xf32, #tpu.memory_space<vmem>>, vector<48x48xf32>
    %cst = arith.constant dense<0.000000e+00> : vector<16x48xf32>
    %2 = tpu.matmul %0, %1, %cst {dimension_numbers = #tpu.dot_dimension_numbers<[1], [0], [0], [1], [0, 0, 1, 1], [], []>} : vector<16x48xf32>, vector<48x48xf32>, vector<16x48xf32> -> vector<16x48xf32>
    %3 = vector.extract_strided_slice %2 {offsets = [0, 0], sizes = [8, 2], strides = [1, 1]} : vector<16x48xf32> to vector<8x2xf32>
    %4 = vector.extract_strided_slice %2 {offsets = [8, 0], sizes = [8, 2], strides = [1, 1]} : vector<16x48xf32> to vector<8x2xf32>
    %5 = vector.extract_strided_slice %2 {offsets = [0, 2], sizes = [8, 2], strides = [1, 1]} : vector<16x48xf32> to vector<8x2xf32>
    %6 = vector.extract_strided_slice %2 {offsets = [8, 2], sizes = [8, 2], strides = [1, 1]} : vector<16x48xf32> to vector<8x2xf32>
    %7 = vector.extract_strided_slice %2 {offsets = [0, 4], sizes = [8, 2], strides = [1, 1]} : vector<16x48xf32> to vector<8x2xf32>
    %8 = vector.extract_strided_slice %2 {offsets = [8, 4], sizes = [8, 2], strides = [1, 1]} : vector<16x48xf32> to vector<8x2xf32>
    %9 = vector.extract_strided_slice %2 {offsets = [0, 6], sizes = [8, 2], strides = [1, 1]} : vector<16x48xf32> to vector<8x2xf32>
    %10 = vector.extract_strided_slice %2 {offsets = [8, 6], sizes = [8, 2], strides = [1, 1]} : vector<16x48xf32> to vector<8x2xf32>
    %11 = vector.extract_strided_slice %2 {offsets = [0, 8], sizes = [8, 2], strides = [1, 1]} : vector<16x48xf32> to vector<8x2xf32>
    %12 = vector.extract_strided_slice %2 {offsets = [8, 8], sizes = [8, 2], strides = [1, 1]} : vector<16x48xf32> to vector<8x2xf32>
    %13 = vector.extract_strided_slice %2 {offsets = [0, 10], sizes = [8, 2], strides = [1, 1]} : vector<16x48xf32> to vector<8x2xf32>
    %14 = vector.extract_strided_slice %2 {offsets = [8, 10], sizes = [8, 2], strides = [1, 1]} : vector<16x48xf32> to vector<8x2xf32>
    %15 = vector.extract_strided_slice %2 {offsets = [0, 12], sizes = [8, 2], strides = [1, 1]} : vector<16x48xf32> to vector<8x2xf32>
    %16 = vector.extract_strided_slice %2 {offsets = [8, 12], sizes = [8, 2], strides = [1, 1]} : vector<16x48xf32> to vector<8x2xf32>
    %17 = vector.extract_strided_slice %2 {offsets = [0, 14], sizes = [8, 2], strides = [1, 1]} : vector<16x48xf32> to vector<8x2xf32>
    %18 = vector.extract_strided_slice %2 {offsets = [8, 14], sizes = [8, 2], strides = [1, 1]} : vector<16x48xf32> to vector<8x2xf32>
    %19 = vector.shape_cast %3 : vector<8x2xf32> to vector<1x8x2xf32>
    %20 = vector.shape_cast %4 : vector<8x2xf32> to vector<1x8x2xf32>
    %21 = vector.shape_cast %5 : vector<8x2xf32> to vector<1x8x2xf32>
    %22 = vector.shape_cast %6 : vector<8x2xf32> to vector<1x8x2xf32>
    %23 = vector.shape_cast %7 : vector<8x2xf32> to vector<1x8x2xf32>
    %24 = vector.shape_cast %8 : vector<8x2xf32> to vector<1x8x2xf32>
    %25 = vector.shape_cast %9 : vector<8x2xf32> to vector<1x8x2xf32>
    %26 = vector.shape_cast %10 : vector<8x2xf32> to vector<1x8x2xf32>
    %27 = vector.shape_cast %11 : vector<8x2xf32> to vector<1x8x2xf32>
    %28 = vector.shape_cast %12 : vector<8x2xf32> to vector<1x8x2xf32>
    %29 = vector.shape_cast %13 : vector<8x2xf32> to vector<1x8x2xf32>
    %30 = vector.shape_cast %14 : vector<8x2xf32> to vector<1x8x2xf32>
    %31 = vector.shape_cast %15 : vector<8x2xf32> to vector<1x8x2xf32>
    %32 = vector.shape_cast %16 : vector<8x2xf32> to vector<1x8x2xf32>
    %33 = vector.shape_cast %17 : vector<8x2xf32> to vector<1x8x2xf32>
    %34 = vector.shape_cast %18 : vector<8x2xf32> to vector<1x8x2xf32>
    %35 = tpu.concatenate %19, %20, %21, %22, %23, %24, %25, %26, %27, %28, %29, %30, %31, %32, %33, %34 in 0 : vector<1x8x2xf32>, vector<1x8x2xf32>, vector<1x8x2xf32>, vector<1x8x2xf32>, vector<1x8x2xf32>, vector<1x8x2xf32>, vector<1x8x2xf32>, vector<1x8x2xf32>, vector<1x8x2xf32>, vector<1x8x2xf32>, vector<1x8x2xf32>, vector<1x8x2xf32>, vector<1x8x2xf32>, vector<1x8x2xf32>, vector<1x8x2xf32>, vector<1x8x2xf32> -> vector<16x8x2xf32>
    %36 = vector.extract_strided_slice %2 {offsets = [0, 16], sizes = [8, 2], strides = [1, 1]} : vector<16x48xf32> to vector<8x2xf32>
    %37 = vector.extract_strided_slice %2 {offsets = [8, 16], sizes = [8, 2], strides = [1, 1]} : vector<16x48xf32> to vector<8x2xf32>
    %38 = vector.extract_strided_slice %2 {offsets = [0, 18], sizes = [8, 2], strides = [1, 1]} : vector<16x48xf32> to vector<8x2xf32>
    %39 = vector.extract_strided_slice %2 {offsets = [8, 18], sizes = [8, 2], strides = [1, 1]} : vector<16x48xf32> to vector<8x2xf32>
    %40 = vector.extract_strided_slice %2 {offsets = [0, 20], sizes = [8, 2], strides = [1, 1]} : vector<16x48xf32> to vector<8x2xf32>
    %41 = vector.extract_strided_slice %2 {offsets = [8, 20], sizes = [8, 2], strides = [1, 1]} : vector<16x48xf32> to vector<8x2xf32>
    %42 = vector.extract_strided_slice %2 {offsets = [0, 22], sizes = [8, 2], strides = [1, 1]} : vector<16x48xf32> to vector<8x2xf32>
    %43 = vector.extract_strided_slice %2 {offsets = [8, 22], sizes = [8, 2], strides = [1, 1]} : vector<16x48xf32> to vector<8x2xf32>
    %44 = vector.extract_strided_slice %2 {offsets = [0, 24], sizes = [8, 2], strides = [1, 1]} : vector<16x48xf32> to vector<8x2xf32>
    %45 = vector.extract_strided_slice %2 {offsets = [8, 24], sizes = [8, 2], strides = [1, 1]} : vector<16x48xf32> to vector<8x2xf32>
    %46 = vector.extract_strided_slice %2 {offsets = [0, 26], sizes = [8, 2], strides = [1, 1]} : vector<16x48xf32> to vector<8x2xf32>
    %47 = vector.extract_strided_slice %2 {offsets = [8, 26], sizes = [8, 2], strides = [1, 1]} : vector<16x48xf32> to vector<8x2xf32>
    %48 = vector.extract_strided_slice %2 {offsets = [0, 28], sizes = [8, 2], strides = [1, 1]} : vector<16x48xf32> to vector<8x2xf32>
    %49 = vector.extract_strided_slice %2 {offsets = [8, 28], sizes = [8, 2], strides = [1, 1]} : vector<16x48xf32> to vector<8x2xf32>
    %50 = vector.extract_strided_slice %2 {offsets = [0, 30], sizes = [8, 2], strides = [1, 1]} : vector<16x48xf32> to vector<8x2xf32>
    %51 = vector.extract_strided_slice %2 {offsets = [8, 30], sizes = [8, 2], strides = [1, 1]} : vector<16x48xf32> to vector<8x2xf32>
    %52 = vector.shape_cast %36 : vector<8x2xf32> to vector<1x8x2xf32>
    %53 = vector.shape_cast %37 : vector<8x2xf32> to vector<1x8x2xf32>
    %54 = vector.shape_cast %38 : vector<8x2xf32> to vector<1x8x2xf32>
    %55 = vector.shape_cast %39 : vector<8x2xf32> to vector<1x8x2xf32>
    %56 = vector.shape_cast %40 : vector<8x2xf32> to vector<1x8x2xf32>
    %57 = vector.shape_cast %41 : vector<8x2xf32> to vector<1x8x2xf32>
    %58 = vector.shape_cast %42 : vector<8x2xf32> to vector<1x8x2xf32>
    %59 = vector.shape_cast %43 : vector<8x2xf32> to vector<1x8x2xf32>
    %60 = vector.shape_cast %44 : vector<8x2xf32> to vector<1x8x2xf32>
    %61 = vector.shape_cast %45 : vector<8x2xf32> to vector<1x8x2xf32>
    %62 = vector.shape_cast %46 : vector<8x2xf32> to vector<1x8x2xf32>
    %63 = vector.shape_cast %47 : vector<8x2xf32> to vector<1x8x2xf32>
    %64 = vector.shape_cast %48 : vector<8x2xf32> to vector<1x8x2xf32>
    %65 = vector.shape_cast %49 : vector<8x2xf32> to vector<1x8x2xf32>
    %66 = vector.shape_cast %50 : vector<8x2xf32> to vector<1x8x2xf32>
    %67 = vector.shape_cast %51 : vector<8x2xf32> to vector<1x8x2xf32>
    %68 = tpu.concatenate %52, %53, %54, %55, %56, %57, %58, %59, %60, %61, %62, %63, %64, %65, %66, %67 in 0 : vector<1x8x2xf32>, vector<1x8x2xf32>, vector<1x8x2xf32>, vector<1x8x2xf32>, vector<1x8x2xf32>, vector<1x8x2xf32>, vector<1x8x2xf32>, vector<1x8x2xf32>, vector<1x8x2xf32>, vector<1x8x2xf32>, vector<1x8x2xf32>, vector<1x8x2xf32>, vector<1x8x2xf32>, vector<1x8x2xf32>, vector<1x8x2xf32>, vector<1x8x2xf32> -> vector<16x8x2xf32>
    %69 = vector.extract_strided_slice %2 {offsets = [0, 32], sizes = [8, 2], strides = [1, 1]} : vector<16x48xf32> to vector<8x2xf32>
    %70 = vector.extract_strided_slice %2 {offsets = [8, 32], sizes = [8, 2], strides = [1, 1]} : vector<16x48xf32> to vector<8x2xf32>
    %71 = vector.extract_strided_slice %2 {offsets = [0, 34], sizes = [8, 2], strides = [1, 1]} : vector<16x48xf32> to vector<8x2xf32>
    %72 = vector.extract_strided_slice %2 {offsets = [8, 34], sizes = [8, 2], strides = [1, 1]} : vector<16x48xf32> to vector<8x2xf32>
    %73 = vector.extract_strided_slice %2 {offsets = [0, 36], sizes = [8, 2], strides = [1, 1]} : vector<16x48xf32> to vector<8x2xf32>
    %74 = vector.extract_strided_slice %2 {offsets = [8, 36], sizes = [8, 2], strides = [1, 1]} : vector<16x48xf32> to vector<8x2xf32>
    %75 = vector.extract_strided_slice %2 {offsets = [0, 38], sizes = [8, 2], strides = [1, 1]} : vector<16x48xf32> to vector<8x2xf32>
    %76 = vector.extract_strided_slice %2 {offsets = [8, 38], sizes = [8, 2], strides = [1, 1]} : vector<16x48xf32> to vector<8x2xf32>
    %77 = vector.extract_strided_slice %2 {offsets = [0, 40], sizes = [8, 2], strides = [1, 1]} : vector<16x48xf32> to vector<8x2xf32>
    %78 = vector.extract_strided_slice %2 {offsets = [8, 40], sizes = [8, 2], strides = [1, 1]} : vector<16x48xf32> to vector<8x2xf32>
    %79 = vector.extract_strided_slice %2 {offsets = [0, 42], sizes = [8, 2], strides = [1, 1]} : vector<16x48xf32> to vector<8x2xf32>
    %80 = vector.extract_strided_slice %2 {offsets = [8, 42], sizes = [8, 2], strides = [1, 1]} : vector<16x48xf32> to vector<8x2xf32>
    %81 = vector.extract_strided_slice %2 {offsets = [0, 44], sizes = [8, 2], strides = [1, 1]} : vector<16x48xf32> to vector<8x2xf32>
    %82 = vector.extract_strided_slice %2 {offsets = [8, 44], sizes = [8, 2], strides = [1, 1]} : vector<16x48xf32> to vector<8x2xf32>
    %83 = vector.extract_strided_slice %2 {offsets = [0, 46], sizes = [8, 2], strides = [1, 1]} : vector<16x48xf32> to vector<8x2xf32>
    %84 = vector.extract_strided_slice %2 {offsets = [8, 46], sizes = [8, 2], strides = [1, 1]} : vector<16x48xf32> to vector<8x2xf32>
    %85 = vector.shape_cast %69 : vector<8x2xf32> to vector<1x8x2xf32>
    %86 = vector.shape_cast %70 : vector<8x2xf32> to vector<1x8x2xf32>
    %87 = vector.shape_cast %71 : vector<8x2xf32> to vector<1x8x2xf32>
    %88 = vector.shape_cast %72 : vector<8x2xf32> to vector<1x8x2xf32>
    %89 = vector.shape_cast %73 : vector<8x2xf32> to vector<1x8x2xf32>
    %90 = vector.shape_cast %74 : vector<8x2xf32> to vector<1x8x2xf32>
    %91 = vector.shape_cast %75 : vector<8x2xf32> to vector<1x8x2xf32>
    %92 = vector.shape_cast %76 : vector<8x2xf32> to vector<1x8x2xf32>
    %93 = vector.shape_cast %77 : vector<8x2xf32> to vector<1x8x2xf32>
    %94 = vector.shape_cast %78 : vector<8x2xf32> to vector<1x8x2xf32>
    %95 = vector.shape_cast %79 : vector<8x2xf32> to vector<1x8x2xf32>
    %96 = vector.shape_cast %80 : vector<8x2xf32> to vector<1x8x2xf32>
    %97 = vector.shape_cast %81 : vector<8x2xf32> to vector<1x8x2xf32>
    %98 = vector.shape_cast %82 : vector<8x2xf32> to vector<1x8x2xf32>
    %99 = vector.shape_cast %83 : vector<8x2xf32> to vector<1x8x2xf32>
    %100 = vector.shape_cast %84 : vector<8x2xf32> to vector<1x8x2xf32>
    %101 = tpu.concatenate %85, %86, %87, %88, %89, %90, %91, %92, %93, %94, %95, %96, %97, %98, %99, %100 in 0 : vector<1x8x2xf32>, vector<1x8x2xf32>, vector<1x8x2xf32>, vector<1x8x2xf32>, vector<1x8x2xf32>, vector<1x8x2xf32>, vector<1x8x2xf32>, vector<1x8x2xf32>, vector<1x8x2xf32>, vector<1x8x2xf32>, vector<1x8x2xf32>, vector<1x8x2xf32>, vector<1x8x2xf32>, vector<1x8x2xf32>, vector<1x8x2xf32>, vector<1x8x2xf32> -> vector<16x8x2xf32>
    "tpu.trace_start"() <{level = 10 : i32, message = "nqd,nkd->nqk"}> : () -> ()
    %cst_3 = arith.constant dense<0.000000e+00> : vector<16x8x8xf32>
    %102 = tpu.matmul %35, %68, %cst_3 {dimension_numbers = #tpu.dot_dimension_numbers<[2], [2], [1], [1], [0, 0, 0, 1, 1, 1], [0], [0]>} : vector<16x8x2xf32>, vector<16x8x2xf32>, vector<16x8x8xf32> -> vector<16x8x8xf32>
    "tpu.trace_stop"() : () -> ()
    %cst_4 = arith.constant 0.707106769 : f32
    %103 = vector.broadcast %cst_4 : f32 to vector<16x8x8xf32>
    %104 = arith.mulf %102, %103 : vector<16x8x8xf32>
    %cst_5 = arith.constant dense<0xFF800000> : vector<16x8xf32>
    %105 = vector.multi_reduction <maximumf>, %104, %cst_5 [2] : vector<16x8x8xf32> to vector<16x8xf32>
    %106 = vector.shape_cast %105 : vector<16x8xf32> to vector<16x8x1xf32>
    %107 = vector.broadcast %106 : vector<16x8x1xf32> to vector<16x8x8xf32>
    %108 = arith.subf %104, %107 : vector<16x8x8xf32>
    %109 = math.exp %108 : vector<16x8x8xf32>
    %cst_6 = arith.constant dense<0.000000e+00> : vector<16x8xf32>
    %110 = vector.multi_reduction <add>, %109, %cst_6 [2] : vector<16x8x8xf32> to vector<16x8xf32>
    %111 = vector.shape_cast %110 : vector<16x8xf32> to vector<16x8x1xf32>
    %112 = tpu.reciprocal %111 : vector<16x8x1xf32> -> vector<16x8x1xf32>
    %113 = vector.broadcast %112 : vector<16x8x1xf32> to vector<16x8x8xf32>
    %114 = arith.mulf %109, %113 : vector<16x8x8xf32>
    %c0_7 = arith.constant 0 : index
    %c0_8 = arith.constant 0 : index
    %c0_9 = arith.constant 0 : index
    %115 = vector.load %arg5[%c0_7, %c0_8, %c0_9] : memref<16x8x8xf32, #tpu.memory_space<vmem>>, vector<16x8x8xf32>
    tpu.vector_store %arg5[%c0_7, %c0_8, %c0_9], %114 {strides = array<i32>} : memref<16x8x8xf32, #tpu.memory_space<vmem>>, vector<16x8x8xf32>,
    "tpu.trace_start"() <{level = 10 : i32, message = "nqk,nkd->nqd"}> : () -> ()
    %cst_10 = arith.constant dense<0.000000e+00> : vector<16x8x2xf32>
    %116 = tpu.matmul %114, %101, %cst_10 {dimension_numbers = #tpu.dot_dimension_numbers<[2], [1], [1], [2], [0, 0, 0, 1, 1, 2], [0], [0]>} : vector<16x8x8xf32>, vector<16x8x2xf32>, vector<16x8x2xf32> -> vector<16x8x2xf32>
    "tpu.trace_stop"() : () -> ()
    %c0_11 = arith.constant 0 : index
    %c0_12 = arith.constant 0 : index
    %c0_13 = arith.constant 0 : index
    %117 = vector.load %arg3[%c0_11, %c0_12, %c0_13] : memref<16x2x16xf32, #tpu.memory_space<vmem>>, vector<16x2x16xf32>
    "tpu.trace_start"() <{level = 10 : i32, message = "nqd,ndo->nqo"}> : () -> ()
    %cst_14 = arith.constant dense<0.000000e+00> : vector<16x8x16xf32>
    %118 = tpu.matmul %116, %117, %cst_14 {dimension_numbers = #tpu.dot_dimension_numbers<[2], [1], [1], [2], [0, 0, 0, 1, 1, 2], [0], [0]>} : vector<16x8x2xf32>, vector<16x2x16xf32>, vector<16x8x16xf32> -> vector<16x8x16xf32>
    "tpu.trace_stop"() : () -> ()
    %119 = vector.shape_cast %118 : vector<16x8x16xf32> to vector<8x2x8x16xf32>
    %cst_15 = arith.constant dense<0.000000e+00> : vector<2x8x16xf32>
    %120 = vector.multi_reduction <add>, %119, %cst_15 [0] : vector<8x2x8x16xf32> to vector<2x8x16xf32>
    %c0_16 = arith.constant 0 : index
    %c0_17 = arith.constant 0 : index
    %c0_18 = arith.constant 0 : index
    %121 = vector.load %arg1[%c0_16, %c0_17, %c0_18] : memref<2x8x16xf32, #tpu.memory_space<vmem>>, vector<2x8x16xf32>
    %122 = arith.addf %120, %121 : vector<2x8x16xf32>
    %cst_19 = arith.constant dense<0.000000e+00> : vector<2x8xf32>
    %123 = vector.multi_reduction <add>, %122, %cst_19 [2] : vector<2x8x16xf32> to vector<2x8xf32>
    %124 = vector.shape_cast %123 : vector<2x8xf32> to vector<2x8x1xf32>
    %cst_20 = arith.constant 1.600000e+01 : f32
    %125 = vector.broadcast %cst_20 : f32 to vector<2x8x1xf32>
    %126 = arith.divf %124, %125 : vector<2x8x1xf32>
    %127 = vector.broadcast %126 : vector<2x8x1xf32> to vector<2x8x16xf32>
    %128 = arith.subf %122, %127 : vector<2x8x16xf32>
    %129 = arith.mulf %128, %128 : vector<2x8x16xf32>
    %cst_21 = arith.constant dense<0.000000e+00> : vector<2x8xf32>
    %130 = vector.multi_reduction <add>, %129, %cst_21 [2] : vector<2x8x16xf32> to vector<2x8xf32>
    %131 = vector.shape_cast %130 : vector<2x8xf32> to vector<2x8x1xf32>
    %cst_22 = arith.constant 1.600000e+01 : f32
    %132 = vector.broadcast %cst_22 : f32 to vector<2x8x1xf32>
    %133 = arith.divf %131, %132 : vector<2x8x1xf32>
    %134 = vector.broadcast %126 : vector<2x8x1xf32> to vector<2x8x16xf32>
    %135 = arith.subf %122, %134 : vector<2x8x16xf32>
    %cst_23 = arith.constant 9.99999974E-6 : f32
    %136 = vector.broadcast %cst_23 : f32 to vector<2x8x1xf32>
    %137 = arith.addf %133, %136 : vector<2x8x1xf32>
    %138 = math.rsqrt %137 : vector<2x8x1xf32>
    %139 = vector.broadcast %138 : vector<2x8x1xf32> to vector<2x8x16xf32>
    %140 = arith.mulf %135, %139 : vector<2x8x16xf32>
    %c0_24 = arith.constant 0 : index
    %c0_25 = arith.constant 0 : index
    %c0_26 = arith.constant 0 : index
    %141 = vector.load %arg4[%c0_24, %c0_25, %c0_26] : memref<2x8x16xf32, #tpu.memory_space<vmem>>, vector<2x8x16xf32>
    tpu.vector_store %arg4[%c0_24, %c0_25, %c0_26], %140 {strides = array<i32>} : memref<2x8x16xf32, #tpu.memory_space<vmem>>, vector<2x8x16xf32>,
    return
  }
}

</mosaic_0001>

<llo_original>
// kernel: tpu_custom_call.1
$region0: #{tpu_custom_call.1}
  #allocation0 [shape = 'u32[]', space=smem, size = 0x4, offset = 0x4, fixed_abs, tag = 'smem constant byte address 0x4 - core index']
  #allocation1 [shape = 'u32[144,128]{1,0:T(1,128)}', space=vmem, size = 0x12000, scoped, tag = 'internal scratch']
  %s0 = inlined_call_operand.hbm [shape: f32[16,48], index: 0, kind: input, shape index: {}]
  %s1 = inlined_call_operand.hbm [shape: f32[2,8,16], index: 1, kind: input, shape index: {}]
  %s2 = inlined_call_operand.hbm [shape: f32[48,48], index: 2, kind: input, shape index: {}]
  %s3 = inlined_call_operand.hbm [shape: f32[16,2,16], index: 3, kind: input, shape index: {}]
  %s4 = inlined_call_operand.hbm [shape: f32[2,8,16], index: 4, kind: output, shape index: {0}]
  %s5 = inlined_call_operand.vmem [shape: f32[16,8,8], index: 5, kind: output, shape index: {1}]
  %6 = xla_tuple %s4, %s5
  %s7 = sld [smem:[#allocation0]]
  $region50: #{tpu_custom_call.1} parent=0
    _
  %s9 = ssub.s32 1, %s7
  %s10 = scalar_select 0, %s9, %s7
  $region1: #{tpu_custom_call.1} parent=0
    #allocation2 [shape = 'u8[8192]{0}', space=vmem, size = 0x2000, scoped, tag = 'input window, operand 0, single buffered']
    #allocation3 [shape = 's32[1]{0}', space=sflag, size = 0x4, scoped, tag = 'scoped memory for tpu_custom_call.1']
    #allocation4 [shape = 's32[1]{0}', space=sflag, size = 0x4, scoped, tag = 'scoped memory for tpu_custom_call.1']
    #allocation5 [shape = 'u8[8192]{0}', space=vmem, size = 0x2000, scoped, tag = 'input window, operand 1, single buffered']
    #allocation6 [shape = 's32[1]{0}', space=sflag, size = 0x4, scoped, tag = 'scoped memory for tpu_custom_call.1']
    #allocation7 [shape = 'u8[24576]{0}', space=vmem, size = 0x6000, scoped, tag = 'input window, operand 2, single buffered']
    #allocation8 [shape = 'u8[16384]{0}', space=vmem, size = 0x4000, scoped, tag = 'input window, operand 3, single buffered']
    #allocation9 [shape = 's32[1]{0}', space=sflag, size = 0x4, scoped, tag = 'scoped memory for tpu_custom_call.1']
    #allocation10 [shape = 'u8[8192]{0}', space=vmem, size = 0x2000, scoped, tag = 'output window, operand 0, single buffered']
    %11 = vsyncpa [#allocation3], 0
    %12 = vsyncpa [#allocation6], 0
    %13 = vsyncpa [#allocation9], 0
    %14 = vsyncpa [#allocation4], 0
    // Predicated region
    $region2: #{tpu_custom_call.1} parent=1 // pred_check
      _
    $region3: #{tpu_custom_call.1} parent=1 // pred_check_branch
      %16 = sbr.rel (0) target = $region5
    $region4: #{tpu_custom_call.1} parent=1 // pred_region
      %s18 = ssub.s32 256, 256
      %19 = vsyncadd [#allocation3], %s18
      %s20 = sshll.u32 [#allocation2], 4
      %s21 = int_to_ptr.vmem [resolvable:$true] %s20
      %26 = dma.hbm_to_vmem [thread:$0]  %s0, 256, %s21, [#allocation3], 128, 128, 8
    $region5: #{tpu_custom_call.1} parent=1 // pred_fallthru
      _
    // Predicated region
    $region6: #{tpu_custom_call.1} parent=1 // pred_check
      _
    $region7: #{tpu_custom_call.1} parent=1 // pred_check_branch
      %28 = sbr.rel (0) target = $region9
    $region8: #{tpu_custom_call.1} parent=1 // pred_region
      %s30 = ssub.s32 256, 256
      %31 = vsyncadd [#allocation6], %s30
      %s32 = sshll.u32 [#allocation5], 4
      %s33 = int_to_ptr.vmem [resolvable:$true] %s32
      %38 = dma.hbm_to_vmem [thread:$0]  %s1, 256, %s33, [#allocation6], 128, 128, 8
    $region9: #{tpu_custom_call.1} parent=1 // pred_fallthru
      _
    // Predicated region
    $region10: #{tpu_custom_call.1} parent=1 // pred_check
      _
    $region11: #{tpu_custom_call.1} parent=1 // pred_check_branch
      %40 = sbr.rel (0) target = $region13
    $region12: #{tpu_custom_call.1} parent=1 // pred_region
      %s42 = ssub.s32 768, 768
      %43 = vsyncadd [#allocation6], %s42
      %s44 = sshll.u32 [#allocation7], 4
      %s45 = int_to_ptr.vmem [resolvable:$true] %s44
      %50 = dma.hbm_to_vmem [thread:$0]  %s2, 768, %s45, [#allocation6], 128, 128, 8
    $region13: #{tpu_custom_call.1} parent=1 // pred_fallthru
      _
    // Predicated region
    $region14: #{tpu_custom_call.1} parent=1 // pred_check
      _
    $region15: #{tpu_custom_call.1} parent=1 // pred_check_branch
      %52 = sbr.rel (0) target = $region17
    $region16: #{tpu_custom_call.1} parent=1 // pred_region
      %s54 = ssub.s32 512, 512
      %55 = vsyncadd [#allocation9], %s54
      %s56 = sshll.u32 [#allocation8], 4
      %s57 = int_to_ptr.vmem [resolvable:$true] %s56
      %62 = dma.hbm_to_vmem [thread:$0]  %s3, 512, %s57, [#allocation9], 32, 32, 2
    $region17: #{tpu_custom_call.1} parent=1 // pred_fallthru
      _
    // Predicated region
    $region18: #{tpu_custom_call.1} parent=1 // pred_check
      _
    $region19: #{tpu_custom_call.1} parent=1 // pred_check_branch
      %64 = sbr.rel (0) target = $region21
    $region20: #{tpu_custom_call.1} parent=1 // pred_region
      %65 = dma.done [#allocation3], 256
    $region21: #{tpu_custom_call.1} parent=1 // pred_fallthru
      _
    // Predicated region
    $region22: #{tpu_custom_call.1} parent=1 // pred_check
      _
    $region23: #{tpu_custom_call.1} parent=1 // pred_check_branch
      %67 = sbr.rel (0) target = $region25
    $region24: #{tpu_custom_call.1} parent=1 // pred_region
      %68 = dma.done [#allocation6], 256
    $region25: #{tpu_custom_call.1} parent=1 // pred_fallthru
      _
    // Predicated region
    $region26: #{tpu_custom_call.1} parent=1 // pred_check
      _
    $region27: #{tpu_custom_call.1} parent=1 // pred_check_branch
      %70 = sbr.rel (0) target = $region29
    $region28: #{tpu_custom_call.1} parent=1 // pred_region
      %71 = dma.done [#allocation6], 768
    $region29: #{tpu_custom_call.1} parent=1 // pred_fallthru
      _
    // Predicated region
    $region30: #{tpu_custom_call.1} parent=1 // pred_check
      _
    $region31: #{tpu_custom_call.1} parent=1 // pred_check_branch
      %73 = sbr.rel (0) target = $region33
    $region32: #{tpu_custom_call.1} parent=1 // pred_region
      %74 = dma.done [#allocation9], 512
    $region33: #{tpu_custom_call.1} parent=1 // pred_fallthru
      _
    %v75 = vld [vmem:[#allocation2] sm:$0xff]
    %v76 = vld [vmem:[#allocation2 + $0x8] sm:$0xff]
    %v77 = vld [vmem:[#allocation7] sm:$0xff]
    %v78 = vld [vmem:[#allocation7 + $0x8] sm:$0xff]
    %v79 = vld [vmem:[#allocation7 + $0x10] sm:$0xff]
    %v80 = vld [vmem:[#allocation7 + $0x18] sm:$0xff]
    %v81 = vld [vmem:[#allocation7 + $0x20] sm:$0xff]
    %v82 = vld [vmem:[#allocation7 + $0x28] sm:$0xff]
    %vm83 = vcmask 392192
    %v85 = vsel %vm83, %v75, 0
    %v88 = vsel %vm83, %v76, 0
    %90 = vmatprep.subr.mxu0 0.0
    %91 = vmatpush1.msra.mxu0 0.0
    %92 = vmatprep.subr.mxu0 0.0
    %93 = vmatpush1.msra.mxu0 0.0
    %94 = vmatprep.subr.mxu0 0.0
    %95 = vmatpush1.msra.mxu0 0.0
    %96 = vmatprep.subr.mxu0 0.0
    %97 = vmatpush1.msra.mxu0 0.0
    %98 = vmatprep.subr.mxu0 0.0
    %99 = vmatpush1.msra.mxu0 0.0
    %100 = vmatprep.subr.mxu0 0.0
    %101 = vmatpush1.msra.mxu0 0.0
    %102 = vmatprep.subr.mxu0 0.0
    %103 = vmatpush1.msra.mxu0 0.0
    %104 = vmatprep.subr.mxu0 0.0
    %105 = vmatpush1.msra.mxu0 0.0
    %106 = vmatprep.subr.mxu0 0.0
    %107 = vmatpush1.msra.mxu0 0.0
    %108 = vmatprep.subr.mxu0 0.0
    %109 = vmatpush1.msra.mxu0 0.0
    %110 = vmatprep.subr.mxu0 0.0
    %111 = vmatpush1.msra.mxu0 %v82
    %112 = vmatprep.subr.mxu0 0.0
    %113 = vmatpush1.msra.mxu0 %v81
    %114 = vmatprep.subr.mxu0 0.0
    %115 = vmatpush1.msra.mxu0 %v80
    %116 = vmatprep.subr.mxu0 0.0
    %117 = vmatpush1.msra.mxu0 %v79
    %118 = vmatprep.subr.mxu0 0.0
    %119 = vmatpush1.msra.mxu0 %v78
    %120 = vmatprep.subr.mxu0 0.0
    %121 = vmatpush1.msra.mxu0 %v77
    %122 = vmatprep.subr.mxu0 0.0
    %123 = vmatpush2.msra.mxu0 0.0
    %124 = vmatprep.subr.mxu0 0.0
    %125 = vmatpush2.msra.mxu0 0.0
    %126 = vmatprep.subr.mxu0 0.0
    %127 = vmatpush2.msra.mxu0 0.0
    %128 = vmatprep.subr.mxu0 0.0
    %129 = vmatpush2.msra.mxu0 0.0
    %130 = vmatprep.subr.mxu0 0.0
    %131 = vmatpush2.msra.mxu0 0.0
    %132 = vmatprep.subr.mxu0 0.0
    %133 = vmatpush2.msra.mxu0 0.0
    %134 = vmatprep.subr.mxu0 0.0
    %135 = vmatpush2.msra.mxu0 0.0
    %136 = vmatprep.subr.mxu0 0.0
    %137 = vmatpush2.msra.mxu0 0.0
    %138 = vmatprep.subr.mxu0 0.0
    %139 = vmatpush2.msra.mxu0 0.0
    %140 = vmatprep.subr.mxu0 0.0
    %141 = vmatpush2.msra.mxu0 0.0
    %142 = vmatprep.subr.mxu0 0.0
    %143 = vmatpush2.msra.mxu0 0.0
    %144 = vmatprep.subr.mxu0 0.0
    %145 = vmatpush2.msra.mxu0 0.0
    %146 = vmatprep.subr.mxu0 0.0
    %147 = vmatpush2.msra.mxu0 0.0
    %148 = vmatprep.subr.mxu0 0.0
    %149 = vmatpush2.msra.mxu0 0.0
    %150 = vmatprep.subr.mxu0 0.0
    %151 = vmatpush2.msra.mxu0 0.0
    %152 = vmatprep.subr.mxu0 0.0
    %153 = vmatpush2.msra.mxu0 0.0
    %154 = vmatprep.mubr.f32.mxu0 0.0
    %155 = vmatmul.mubr.f32.gmra.mxu0 %v85
    %v156 = vpop.f32.mrf.mxu0
    %v157 = vadd.f32 0.0, %v156
    %v158 = vpop.f32.mrf.mxu0
    %159 = vmatprep.mubr.f32.mxu0 0.0
    %160 = vmatmul.mubr.f32.gmra.mxu0 %v88
    %v161 = vpop.f32.mrf.mxu0
    %v162 = vadd.f32 0.0, %v161
    %v163 = vpop.f32.mrf.mxu0
    %164 = vdwg.mxu0
    %166 = vrot.lane.b32.xlu0 %v157, 126
    %v167 = vpop.permute.xlu0 %166
    %169 = vrot.lane.b32.xlu0 %v162, 126
    %v170 = vpop.permute.xlu0 %169
    %171 = vrot.lane.b32.xlu0 %v157, 124
    %v172 = vpop.permute.xlu0 %171
    %173 = vrot.lane.b32.xlu0 %v162, 124
    %v174 = vpop.permute.xlu0 %173
    %175 = vrot.lane.b32.xlu0 %v157, 122
    %v176 = vpop.permute.xlu0 %175
    %177 = vrot.lane.b32.xlu0 %v162, 122
    %v178 = vpop.permute.xlu0 %177
    %179 = vrot.lane.b32.xlu0 %v157, 120
    %v180 = vpop.permute.xlu0 %179
    %181 = vrot.lane.b32.xlu0 %v162, 120
    %v182 = vpop.permute.xlu0 %181
    %183 = vrot.lane.b32.xlu0 %v157, 118
    %v184 = vpop.permute.xlu0 %183
    %185 = vrot.lane.b32.xlu0 %v162, 118
    %v186 = vpop.permute.xlu0 %185
    %187 = vrot.lane.b32.xlu0 %v157, 116
    %v188 = vpop.permute.xlu0 %187
    %189 = vrot.lane.b32.xlu0 %v162, 116
    %v190 = vpop.permute.xlu0 %189
    %191 = vrot.lane.b32.xlu0 %v157, 114
    %v192 = vpop.permute.xlu0 %191
    %193 = vrot.lane.b32.xlu0 %v162, 114
    %v194 = vpop.permute.xlu0 %193
    %195 = vrot.lane.b32.xlu0 %v157, 112
    %v196 = vpop.permute.xlu0 %195
    %vm197 = vcmask 15360
    %v198 = vsel %vm197, %v157, 0
    %v200 = vsel %vm197, %v196, 0
    %202 = vmatprep.subr.mxu0 0.0
    %203 = vmatpush1.xpose.msra.mxu0 0.0
    %204 = vmatprep.subr.mxu0 0.0
    %205 = vmatpush1.xpose.msra.mxu0 0.0
    %206 = vmatprep.subr.mxu0 0.0
    %207 = vmatpush1.xpose.msra.mxu0 0.0
    %208 = vmatprep.subr.mxu0 0.0
    %209 = vmatpush1.xpose.msra.mxu0 0.0
    %210 = vmatprep.subr.mxu0 0.0
    %211 = vmatpush1.xpose.msra.mxu0 0.0
    %212 = vmatprep.subr.mxu0 0.0
    %213 = vmatpush1.xpose.msra.mxu0 0.0
    %214 = vmatprep.subr.mxu0 0.0
    %215 = vmatpush1.xpose.msra.mxu0 0.0
    %216 = vmatprep.subr.mxu0 0.0
    %217 = vmatpush1.xpose.msra.mxu0 0.0
    %218 = vmatprep.subr.mxu0 0.0
    %219 = vmatpush1.xpose.msra.mxu0 0.0
    %220 = vmatprep.subr.mxu0 0.0
    %221 = vmatpush1.xpose.msra.mxu0 0.0
    %222 = vmatprep.subr.mxu0 0.0
    %223 = vmatpush1.xpose.msra.mxu0 0.0
    %224 = vmatprep.subr.mxu0 0.0
    %225 = vmatpush1.xpose.msra.mxu0 0.0
    %226 = vmatprep.subr.mxu0 0.0
    %227 = vmatpush1.xpose.msra.mxu0 0.0
    %228 = vmatprep.subr.mxu0 0.0
    %229 = vmatpush1.xpose.msra.mxu0 0.0
    %230 = vmatprep.subr.mxu0 0.0
    %231 = vmatpush1.xpose.msra.mxu0 0.0
    %232 = vmatprep.subr.mxu0 0.0
    %233 = vmatpush1.xpose.msra.mxu0 %v200
    %234 = vmatprep.subr.mxu0 0.0
    %235 = vmatpush2.xpose.msra.mxu0 0.0
    %236 = vmatprep.subr.mxu0 0.0
    %237 = vmatpush2.xpose.msra.mxu0 0.0
    %238 = vmatprep.subr.mxu0 0.0
    %239 = vmatpush2.xpose.msra.mxu0 0.0
    %240 = vmatprep.subr.mxu0 0.0
    %241 = vmatpush2.xpose.msra.mxu0 0.0
    %242 = vmatprep.subr.mxu0 0.0
    %243 = vmatpush2.xpose.msra.mxu0 0.0
    %244 = vmatprep.subr.mxu0 0.0
    %245 = vmatpush2.xpose.msra.mxu0 0.0
    %246 = vmatprep.subr.mxu0 0.0
    %247 = vmatpush2.xpose.msra.mxu0 0.0
    %248 = vmatprep.subr.mxu0 0.0
    %249 = vmatpush2.xpose.msra.mxu0 0.0
    %250 = vmatprep.subr.mxu0 0.0
    %251 = vmatpush2.xpose.msra.mxu0 0.0
    %252 = vmatprep.subr.mxu0 0.0
    %253 = vmatpush2.xpose.msra.mxu0 0.0
    %254 = vmatprep.subr.mxu0 0.0
    %255 = vmatpush2.xpose.msra.mxu0 0.0
    %256 = vmatprep.subr.mxu0 0.0
    %257 = vmatpush2.xpose.msra.mxu0 0.0
    %258 = vmatprep.subr.mxu0 0.0
    %259 = vmatpush2.xpose.msra.mxu0 0.0
    %260 = vmatprep.subr.mxu0 0.0
    %261 = vmatpush2.xpose.msra.mxu0 0.0
    %262 = vmatprep.subr.mxu0 0.0
    %263 = vmatpush2.xpose.msra.mxu0 0.0
    %264 = vmatprep.subr.mxu0 0.0
    %265 = vmatpush2.xpose.msra.mxu0 0.0
    %266 = vmatprep.mubr.f32.mxu0 0.0
    %267 = vmatmul.mubr.f32.gmra.mxu0 %v198
    %v268 = vpop.f32.mrf.mxu0
    %v269 = vadd.f32 0.0, %v268
    %v270 = vpop.f32.mrf.mxu0
    %271 = vdwg.mxu0
    %272 = vrot.lane.b32.xlu0 %v162, 112
    %v273 = vpop.permute.xlu0 %272
    %v274 = vsel %vm197, %v162, 0
    %v276 = vsel %vm197, %v273, 0
    %278 = vmatprep.subr.mxu0 0.0
    %279 = vmatpush1.xpose.msra.mxu0 0.0
    %280 = vmatprep.subr.mxu0 0.0
    %281 = vmatpush1.xpose.msra.mxu0 0.0
    %282 = vmatprep.subr.mxu0 0.0
    %283 = vmatpush1.xpose.msra.mxu0 0.0
    %284 = vmatprep.subr.mxu0 0.0
    %285 = vmatpush1.xpose.msra.mxu0 0.0
    %286 = vmatprep.subr.mxu0 0.0
    %287 = vmatpush1.xpose.msra.mxu0 0.0
    %288 = vmatprep.subr.mxu0 0.0
    %289 = vmatpush1.xpose.msra.mxu0 0.0
    %290 = vmatprep.subr.mxu0 0.0
    %291 = vmatpush1.xpose.msra.mxu0 0.0
    %292 = vmatprep.subr.mxu0 0.0
    %293 = vmatpush1.xpose.msra.mxu0 0.0
    %294 = vmatprep.subr.mxu0 0.0
    %295 = vmatpush1.xpose.msra.mxu0 0.0
    %296 = vmatprep.subr.mxu0 0.0
    %297 = vmatpush1.xpose.msra.mxu0 0.0
    %298 = vmatprep.subr.mxu0 0.0
    %299 = vmatpush1.xpose.msra.mxu0 0.0
    %300 = vmatprep.subr.mxu0 0.0
    %301 = vmatpush1.xpose.msra.mxu0 0.0
    %302 = vmatprep.subr.mxu0 0.0
    %303 = vmatpush1.xpose.msra.mxu0 0.0
    %304 = vmatprep.subr.mxu0 0.0
    %305 = vmatpush1.xpose.msra.mxu0 0.0
    %306 = vmatprep.subr.mxu0 0.0
    %307 = vmatpush1.xpose.msra.mxu0 0.0
    %308 = vmatprep.subr.mxu0 0.0
    %309 = vmatpush1.xpose.msra.mxu0 %v276
    %310 = vmatprep.subr.mxu0 0.0
    %311 = vmatpush2.xpose.msra.mxu0 0.0
    %312 = vmatprep.subr.mxu0 0.0
    %313 = vmatpush2.xpose.msra.mxu0 0.0
    %314 = vmatprep.subr.mxu0 0.0
    %315 = vmatpush2.xpose.msra.mxu0 0.0
    %316 = vmatprep.subr.mxu0 0.0
    %317 = vmatpush2.xpose.msra.mxu0 0.0
    %318 = vmatprep.subr.mxu0 0.0
    %319 = vmatpush2.xpose.msra.mxu0 0.0
    %320 = vmatprep.subr.mxu0 0.0
    %321 = vmatpush2.xpose.msra.mxu0 0.0
    %322 = vmatprep.subr.mxu0 0.0
    %323 = vmatpush2.xpose.msra.mxu0 0.0
    %324 = vmatprep.subr.mxu0 0.0
    %325 = vmatpush2.xpose.msra.mxu0 0.0
    %326 = vmatprep.subr.mxu0 0.0
    %327 = vmatpush2.xpose.msra.mxu0 0.0
    %328 = vmatprep.subr.mxu0 0.0
    %329 = vmatpush2.xpose.msra.mxu0 0.0
    %330 = vmatprep.subr.mxu0 0.0
    %331 = vmatpush2.xpose.msra.mxu0 0.0
    %332 = vmatprep.subr.mxu0 0.0
    %333 = vmatpush2.xpose.msra.mxu0 0.0
    %334 = vmatprep.subr.mxu0 0.0
    %335 = vmatpush2.xpose.msra.mxu0 0.0
    %336 = vmatprep.subr.mxu0 0.0
    %337 = vmatpush2.xpose.msra.mxu0 0.0
    %338 = vmatprep.subr.mxu0 0.0
    %339 = vmatpush2.xpose.msra.mxu0 0.0
    %340 = vmatprep.subr.mxu0 0.0
    %341 = vmatpush2.xpose.msra.mxu0 0.0
    %342 = vmatprep.mubr.f32.mxu0 0.0
    %343 = vmatmul.mubr.f32.gmra.mxu0 %v274
    %v344 = vpop.f32.mrf.mxu0
    %v345 = vadd.f32 0.0, %v344
    %v346 = vpop.f32.mrf.mxu0
    %347 = vdwg.mxu0
    %348 = vrot.lane.b32.xlu0 %v167, 112
    %v349 = vpop.permute.xlu0 %348
    %v350 = vsel %vm197, %v167, 0
    %v352 = vsel %vm197, %v349, 0
    %354 = vmatprep.subr.mxu0 0.0
    %355 = vmatpush1.xpose.msra.mxu0 0.0
    %356 = vmatprep.subr.mxu0 0.0
    %357 = vmatpush1.xpose.msra.mxu0 0.0
    %358 = vmatprep.subr.mxu0 0.0
    %359 = vmatpush1.xpose.msra.mxu0 0.0
    %360 = vmatprep.subr.mxu0 0.0
    %361 = vmatpush1.xpose.msra.mxu0 0.0
    %362 = vmatprep.subr.mxu0 0.0
    %363 = vmatpush1.xpose.msra.mxu0 0.0
    %364 = vmatprep.subr.mxu0 0.0
    %365 = vmatpush1.xpose.msra.mxu0 0.0
    %366 = vmatprep.subr.mxu0 0.0
    %367 = vmatpush1.xpose.msra.mxu0 0.0
    %368 = vmatprep.subr.mxu0 0.0
    %369 = vmatpush1.xpose.msra.mxu0 0.0
    %370 = vmatprep.subr.mxu0 0.0
    %371 = vmatpush1.xpose.msra.mxu0 0.0
    %372 = vmatprep.subr.mxu0 0.0
    %373 = vmatpush1.xpose.msra.mxu0 0.0
    %374 = vmatprep.subr.mxu0 0.0
    %375 = vmatpush1.xpose.msra.mxu0 0.0
    %376 = vmatprep.subr.mxu0 0.0
    %377 = vmatpush1.xpose.msra.mxu0 0.0
    %378 = vmatprep.subr.mxu0 0.0
    %379 = vmatpush1.xpose.msra.mxu0 0.0
    %380 = vmatprep.subr.mxu0 0.0
    %381 = vmatpush1.xpose.msra.mxu0 0.0
    %382 = vmatprep.subr.mxu0 0.0
    %383 = vmatpush1.xpose.msra.mxu0 0.0
    %384 = vmatprep.subr.mxu0 0.0
    %385 = vmatpush1.xpose.msra.mxu0 %v352
    %386 = vmatprep.subr.mxu0 0.0
    %387 = vmatpush2.xpose.msra.mxu0 0.0
    %388 = vmatprep.subr.mxu0 0.0
    %389 = vmatpush2.xpose.msra.mxu0 0.0
    %390 = vmatprep.subr.mxu0 0.0
    %391 = vmatpush2.xpose.msra.mxu0 0.0
    %392 = vmatprep.subr.mxu0 0.0
    %393 = vmatpush2.xpose.msra.mxu0 0.0
    %394 = vmatprep.subr.mxu0 0.0
    %395 = vmatpush2.xpose.msra.mxu0 0.0
    %396 = vmatprep.subr.mxu0 0.0
    %397 = vmatpush2.xpose.msra.mxu0 0.0
    %398 = vmatprep.subr.mxu0 0.0
    %399 = vmatpush2.xpose.msra.mxu0 0.0
    %400 = vmatprep.subr.mxu0 0.0
    %401 = vmatpush2.xpose.msra.mxu0 0.0
    %402 = vmatprep.subr.mxu0 0.0
    %403 = vmatpush2.xpose.msra.mxu0 0.0
    %404 = vmatprep.subr.mxu0 0.0
    %405 = vmatpush2.xpose.msra.mxu0 0.0
    %406 = vmatprep.subr.mxu0 0.0
    %407 = vmatpush2.xpose.msra.mxu0 0.0
    %408 = vmatprep.subr.mxu0 0.0
    %409 = vmatpush2.xpose.msra.mxu0 0.0
    %410 = vmatprep.subr.mxu0 0.0
    %411 = vmatpush2.xpose.msra.mxu0 0.0
    %412 = vmatprep.subr.mxu0 0.0
    %413 = vmatpush2.xpose.msra.mxu0 0.0
    %414 = vmatprep.subr.mxu0 0.0
    %415 = vmatpush2.xpose.msra.mxu0 0.0
    %416 = vmatprep.subr.mxu0 0.0
    %417 = vmatpush2.xpose.msra.mxu0 0.0
    %418 = vmatprep.mubr.f32.mxu0 0.0
    %419 = vmatmul.mubr.f32.gmra.mxu0 %v350
    %v420 = vpop.f32.mrf.mxu0
    %v421 = vadd.f32 0.0, %v420
    %v422 = vpop.f32.mrf.mxu0
    %423 = vdwg.mxu0
    %424 = vrot.lane.b32.xlu0 %v170, 112
    %v425 = vpop.permute.xlu0 %424
    %v426 = vsel %vm197, %v170, 0
    %v428 = vsel %vm197, %v425, 0
    %430 = vmatprep.subr.mxu0 0.0
    %431 = vmatpush1.xpose.msra.mxu0 0.0
    %432 = vmatprep.subr.mxu0 0.0
    %433 = vmatpush1.xpose.msra.mxu0 0.0
    %434 = vmatprep.subr.mxu0 0.0
    %435 = vmatpush1.xpose.msra.mxu0 0.0
    %436 = vmatprep.subr.mxu0 0.0
    %437 = vmatpush1.xpose.msra.mxu0 0.0
    %438 = vmatprep.subr.mxu0 0.0
    %439 = vmatpush1.xpose.msra.mxu0 0.0
    %440 = vmatprep.subr.mxu0 0.0
    %441 = vmatpush1.xpose.msra.mxu0 0.0
    %442 = vmatprep.subr.mxu0 0.0
    %443 = vmatpush1.xpose.msra.mxu0 0.0
    %444 = vmatprep.subr.mxu0 0.0
    %445 = vmatpush1.xpose.msra.mxu0 0.0
    %446 = vmatprep.subr.mxu0 0.0
    %447 = vmatpush1.xpose.msra.mxu0 0.0
    %448 = vmatprep.subr.mxu0 0.0
    %449 = vmatpush1.xpose.msra.mxu0 0.0
    %450 = vmatprep.subr.mxu0 0.0
    %451 = vmatpush1.xpose.msra.mxu0 0.0
    %452 = vmatprep.subr.mxu0 0.0
    %453 = vmatpush1.xpose.msra.mxu0 0.0
    %454 = vmatprep.subr.mxu0 0.0
    %455 = vmatpush1.xpose.msra.mxu0 0.0
    %456 = vmatprep.subr.mxu0 0.0
    %457 = vmatpush1.xpose.msra.mxu0 0.0
    %458 = vmatprep.subr.mxu0 0.0
    %459 = vmatpush1.xpose.msra.mxu0 0.0
    %460 = vmatprep.subr.mxu0 0.0
    %461 = vmatpush1.xpose.msra.mxu0 %v428
    %462 = vmatprep.subr.mxu0 0.0
    %463 = vmatpush2.xpose.msra.mxu0 0.0
    %464 = vmatprep.subr.mxu0 0.0
    %465 = vmatpush2.xpose.msra.mxu0 0.0
    %466 = vmatprep.subr.mxu0 0.0
    %467 = vmatpush2.xpose.msra.mxu0 0.0
    %468 = vmatprep.subr.mxu0 0.0
    %469 = vmatpush2.xpose.msra.mxu0 0.0
    %470 = vmatprep.subr.mxu0 0.0
    %471 = vmatpush2.xpose.msra.mxu0 0.0
    %472 = vmatprep.subr.mxu0 0.0
    %473 = vmatpush2.xpose.msra.mxu0 0.0
    %474 = vmatprep.subr.mxu0 0.0
    %475 = vmatpush2.xpose.msra.mxu0 0.0
    %476 = vmatprep.subr.mxu0 0.0
    %477 = vmatpush2.xpose.msra.mxu0 0.0
    %478 = vmatprep.subr.mxu0 0.0
    %479 = vmatpush2.xpose.msra.mxu0 0.0
    %480 = vmatprep.subr.mxu0 0.0
    %481 = vmatpush2.xpose.msra.mxu0 0.0
    %482 = vmatprep.subr.mxu0 0.0
    %483 = vmatpush2.xpose.msra.mxu0 0.0
    %484 = vmatprep.subr.mxu0 0.0
    %485 = vmatpush2.xpose.msra.mxu0 0.0
    %486 = vmatprep.subr.mxu0 0.0
    %487 = vmatpush2.xpose.msra.mxu0 0.0
    %488 = vmatprep.subr.mxu0 0.0
    %489 = vmatpush2.xpose.msra.mxu0 0.0
    %490 = vmatprep.subr.mxu0 0.0
    %491 = vmatpush2.xpose.msra.mxu0 0.0
    %492 = vmatprep.subr.mxu0 0.0
    %493 = vmatpush2.xpose.msra.mxu0 0.0
    %494 = vmatprep.mubr.f32.mxu0 0.0
    %495 = vmatmul.mubr.f32.gmra.mxu0 %v426
    %v496 = vpop.f32.mrf.mxu0
    %v497 = vadd.f32 0.0, %v496
    %v498 = vpop.f32.mrf.mxu0
    %499 = vdwg.mxu0
    %500 = vrot.lane.b32.xlu0 %v172, 112
    %v501 = vpop.permute.xlu0 %500
    %v502 = vsel %vm197, %v172, 0
    %v504 = vsel %vm197, %v501, 0
    %506 = vmatprep.subr.mxu0 0.0
    %507 = vmatpush1.xpose.msra.mxu0 0.0
    %508 = vmatprep.subr.mxu0 0.0
    %509 = vmatpush1.xpose.msra.mxu0 0.0
    %510 = vmatprep.subr.mxu0 0.0
    %511 = vmatpush1.xpose.msra.mxu0 0.0
    %512 = vmatprep.subr.mxu0 0.0
    %513 = vmatpush1.xpose.msra.mxu0 0.0
    %514 = vmatprep.subr.mxu0 0.0
    %515 = vmatpush1.xpose.msra.mxu0 0.0
    %516 = vmatprep.subr.mxu0 0.0
    %517 = vmatpush1.xpose.msra.mxu0 0.0
    %518 = vmatprep.subr.mxu0 0.0
    %519 = vmatpush1.xpose.msra.mxu0 0.0
    %520 = vmatprep.subr.mxu0 0.0
    %521 = vmatpush1.xpose.msra.mxu0 0.0
    %522 = vmatprep.subr.mxu0 0.0
    %523 = vmatpush1.xpose.msra.mxu0 0.0
    %524 = vmatprep.subr.mxu0 0.0
    %525 = vmatpush1.xpose.msra.mxu0 0.0
    %526 = vmatprep.subr.mxu0 0.0
    %527 = vmatpush1.xpose.msra.mxu0 0.0
    %528 = vmatprep.subr.mxu0 0.0
    %529 = vmatpush1.xpose.msra.mxu0 0.0
    %530 = vmatprep.subr.mxu0 0.0
    %531 = vmatpush1.xpose.msra.mxu0 0.0
    %532 = vmatprep.subr.mxu0 0.0
    %533 = vmatpush1.xpose.msra.mxu0 0.0
    %534 = vmatprep.subr.mxu0 0.0
    %535 = vmatpush1.xpose.msra.mxu0 0.0
    %536 = vmatprep.subr.mxu0 0.0
    %537 = vmatpush1.xpose.msra.mxu0 %v504
    %538 = vmatprep.subr.mxu0 0.0
    %539 = vmatpush2.xpose.msra.mxu0 0.0
    %540 = vmatprep.subr.mxu0 0.0
    %541 = vmatpush2.xpose.msra.mxu0 0.0
    %542 = vmatprep.subr.mxu0 0.0
    %543 = vmatpush2.xpose.msra.mxu0 0.0
    %544 = vmatprep.subr.mxu0 0.0
    %545 = vmatpush2.xpose.msra.mxu0 0.0
    %546 = vmatprep.subr.mxu0 0.0
    %547 = vmatpush2.xpose.msra.mxu0 0.0
    %548 = vmatprep.subr.mxu0 0.0
    %549 = vmatpush2.xpose.msra.mxu0 0.0
    %550 = vmatprep.subr.mxu0 0.0
    %551 = vmatpush2.xpose.msra.mxu0 0.0
    %552 = vmatprep.subr.mxu0 0.0
    %553 = vmatpush2.xpose.msra.mxu0 0.0
    %554 = vmatprep.subr.mxu0 0.0
    %555 = vmatpush2.xpose.msra.mxu0 0.0
    %556 = vmatprep.subr.mxu0 0.0
    %557 = vmatpush2.xpose.msra.mxu0 0.0
    %558 = vmatprep.subr.mxu0 0.0
    %559 = vmatpush2.xpose.msra.mxu0 0.0
    %560 = vmatprep.subr.mxu0 0.0
    %561 = vmatpush2.xpose.msra.mxu0 0.0
    %562 = vmatprep.subr.mxu0 0.0
    %563 = vmatpush2.xpose.msra.mxu0 0.0
    %564 = vmatprep.subr.mxu0 0.0
    %565 = vmatpush2.xpose.msra.mxu0 0.0
    %566 = vmatprep.subr.mxu0 0.0
    %567 = vmatpush2.xpose.msra.mxu0 0.0
    %568 = vmatprep.subr.mxu0 0.0
    %569 = vmatpush2.xpose.msra.mxu0 0.0
    %570 = vmatprep.mubr.f32.mxu0 0.0
    %571 = vmatmul.mubr.f32.gmra.mxu0 %v502
    %v572 = vpop.f32.mrf.mxu0
    %v573 = vadd.f32 0.0, %v572
    %v574 = vpop.f32.mrf.mxu0
    %575 = vdwg.mxu0
    %576 = vrot.lane.b32.xlu0 %v174, 112
    %v577 = vpop.permute.xlu0 %576
    %v578 = vsel %vm197, %v174, 0
    %v580 = vsel %vm197, %v577, 0
    %582 = vmatprep.subr.mxu0 0.0
    %583 = vmatpush1.xpose.msra.mxu0 0.0
    %584 = vmatprep.subr.mxu0 0.0
    %585 = vmatpush1.xpose.msra.mxu0 0.0
    %586 = vmatprep.subr.mxu0 0.0
    %587 = vmatpush1.xpose.msra.mxu0 0.0
    %588 = vmatprep.subr.mxu0 0.0
    %589 = vmatpush1.xpose.msra.mxu0 0.0
    %590 = vmatprep.subr.mxu0 0.0
    %591 = vmatpush1.xpose.msra.mxu0 0.0
    %592 = vmatprep.subr.mxu0 0.0
    %593 = vmatpush1.xpose.msra.mxu0 0.0
    %594 = vmatprep.subr.mxu0 0.0
    %595 = vmatpush1.xpose.msra.mxu0 0.0
    %596 = vmatprep.subr.mxu0 0.0
    %597 = vmatpush1.xpose.msra.mxu0 0.0
    %598 = vmatprep.subr.mxu0 0.0
    %599 = vmatpush1.xpose.msra.mxu0 0.0
    %600 = vmatprep.subr.mxu0 0.0
    %601 = vmatpush1.xpose.msra.mxu0 0.0
    %602 = vmatprep.subr.mxu0 0.0
    %603 = vmatpush1.xpose.msra.mxu0 0.0
    %604 = vmatprep.subr.mxu0 0.0
    %605 = vmatpush1.xpose.msra.mxu0 0.0
    %606 = vmatprep.subr.mxu0 0.0
    %607 = vmatpush1.xpose.msra.mxu0 0.0
    %608 = vmatprep.subr.mxu0 0.0
    %609 = vmatpush1.xpose.msra.mxu0 0.0
    %610 = vmatprep.subr.mxu0 0.0
    %611 = vmatpush1.xpose.msra.mxu0 0.0
    %612 = vmatprep.subr.mxu0 0.0
    %613 = vmatpush1.xpose.msra.mxu0 %v580
    %614 = vmatprep.subr.mxu0 0.0
    %615 = vmatpush2.xpose.msra.mxu0 0.0
    %616 = vmatprep.subr.mxu0 0.0
    %617 = vmatpush2.xpose.msra.mxu0 0.0
    %618 = vmatprep.subr.mxu0 0.0
    %619 = vmatpush2.xpose.msra.mxu0 0.0
    %620 = vmatprep.subr.mxu0 0.0
    %621 = vmatpush2.xpose.msra.mxu0 0.0
    %622 = vmatprep.subr.mxu0 0.0
    %623 = vmatpush2.xpose.msra.mxu0 0.0
    %624 = vmatprep.subr.mxu0 0.0
    %625 = vmatpush2.xpose.msra.mxu0 0.0
    %626 = vmatprep.subr.mxu0 0.0
    %627 = vmatpush2.xpose.msra.mxu0 0.0
    %628 = vmatprep.subr.mxu0 0.0
    %629 = vmatpush2.xpose.msra.mxu0 0.0
    %630 = vmatprep.subr.mxu0 0.0
    %631 = vmatpush2.xpose.msra.mxu0 0.0
    %632 = vmatprep.subr.mxu0 0.0
    %633 = vmatpush2.xpose.msra.mxu0 0.0
    %634 = vmatprep.subr.mxu0 0.0
    %635 = vmatpush2.xpose.msra.mxu0 0.0
    %636 = vmatprep.subr.mxu0 0.0
    %637 = vmatpush2.xpose.msra.mxu0 0.0
    %638 = vmatprep.subr.mxu0 0.0
    %639 = vmatpush2.xpose.msra.mxu0 0.0
    %640 = vmatprep.subr.mxu0 0.0
    %641 = vmatpush2.xpose.msra.mxu0 0.0
    %642 = vmatprep.subr.mxu0 0.0
    %643 = vmatpush2.xpose.msra.mxu0 0.0
    %644 = vmatprep.subr.mxu0 0.0
    %645 = vmatpush2.xpose.msra.mxu0 0.0
    %646 = vmatprep.mubr.f32.mxu0 0.0
    %647 = vmatmul.mubr.f32.gmra.mxu0 %v578
    %v648 = vpop.f32.mrf.mxu0
    %v649 = vadd.f32 0.0, %v648
    %v650 = vpop.f32.mrf.mxu0
    %651 = vdwg.mxu0
    %652 = vrot.lane.b32.xlu0 %v176, 112
    %v653 = vpop.permute.xlu0 %652
    %v654 = vsel %vm197, %v176, 0
    %v656 = vsel %vm197, %v653, 0
    %658 = vmatprep.subr.mxu0 0.0
    %659 = vmatpush1.xpose.msra.mxu0 0.0
    %660 = vmatprep.subr.mxu0 0.0
    %661 = vmatpush1.xpose.msra.mxu0 0.0
    %662 = vmatprep.subr.mxu0 0.0
    %663 = vmatpush1.xpose.msra.mxu0 0.0
    %664 = vmatprep.subr.mxu0 0.0
    %665 = vmatpush1.xpose.msra.mxu0 0.0
    %666 = vmatprep.subr.mxu0 0.0
    %667 = vmatpush1.xpose.msra.mxu0 0.0
    %668 = vmatprep.subr.mxu0 0.0
    %669 = vmatpush1.xpose.msra.mxu0 0.0
    %670 = vmatprep.subr.mxu0 0.0
    %671 = vmatpush1.xpose.msra.mxu0 0.0
    %672 = vmatprep.subr.mxu0 0.0
    %673 = vmatpush1.xpose.msra.mxu0 0.0
    %674 = vmatprep.subr.mxu0 0.0
    %675 = vmatpush1.xpose.msra.mxu0 0.0
    %676 = vmatprep.subr.mxu0 0.0
    %677 = vmatpush1.xpose.msra.mxu0 0.0
    %678 = vmatprep.subr.mxu0 0.0
    %679 = vmatpush1.xpose.msra.mxu0 0.0
    %680 = vmatprep.subr.mxu0 0.0
    %681 = vmatpush1.xpose.msra.mxu0 0.0
    %682 = vmatprep.subr.mxu0 0.0
    %683 = vmatpush1.xpose.msra.mxu0 0.0
    %684 = vmatprep.subr.mxu0 0.0
    %685 = vmatpush1.xpose.msra.mxu0 0.0
    %686 = vmatprep.subr.mxu0 0.0
    %687 = vmatpush1.xpose.msra.mxu0 0.0
    %688 = vmatprep.subr.mxu0 0.0
    %689 = vmatpush1.xpose.msra.mxu0 %v656
    %690 = vmatprep.subr.mxu0 0.0
    %691 = vmatpush2.xpose.msra.mxu0 0.0
    %692 = vmatprep.subr.mxu0 0.0
    %693 = vmatpush2.xpose.msra.mxu0 0.0
    %694 = vmatprep.subr.mxu0 0.0
    %695 = vmatpush2.xpose.msra.mxu0 0.0
    %696 = vmatprep.subr.mxu0 0.0
    %697 = vmatpush2.xpose.msra.mxu0 0.0
    %698 = vmatprep.subr.mxu0 0.0
    %699 = vmatpush2.xpose.msra.mxu0 0.0
    %700 = vmatprep.subr.mxu0 0.0
    %701 = vmatpush2.xpose.msra.mxu0 0.0
    %702 = vmatprep.subr.mxu0 0.0
    %703 = vmatpush2.xpose.msra.mxu0 0.0
    %704 = vmatprep.subr.mxu0 0.0
    %705 = vmatpush2.xpose.msra.mxu0 0.0
    %706 = vmatprep.subr.mxu0 0.0
    %707 = vmatpush2.xpose.msra.mxu0 0.0
    %708 = vmatprep.subr.mxu0 0.0
    %709 = vmatpush2.xpose.msra.mxu0 0.0
    %710 = vmatprep.subr.mxu0 0.0
    %711 = vmatpush2.xpose.msra.mxu0 0.0
    %712 = vmatprep.subr.mxu0 0.0
    %713 = vmatpush2.xpose.msra.mxu0 0.0
    %714 = vmatprep.subr.mxu0 0.0
    %715 = vmatpush2.xpose.msra.mxu0 0.0
    %716 = vmatprep.subr.mxu0 0.0
    %717 = vmatpush2.xpose.msra.mxu0 0.0
    %718 = vmatprep.subr.mxu0 0.0
    %719 = vmatpush2.xpose.msra.mxu0 0.0
    %720 = vmatprep.subr.mxu0 0.0
    %721 = vmatpush2.xpose.msra.mxu0 0.0
    %722 = vmatprep.mubr.f32.mxu0 0.0
    %723 = vmatmul.mubr.f32.gmra.mxu0 %v654
    %v724 = vpop.f32.mrf.mxu0
    %v725 = vadd.f32 0.0, %v724
    %v726 = vpop.f32.mrf.mxu0
    %727 = vdwg.mxu0
    %728 = vrot.lane.b32.xlu0 %v178, 112
    %v729 = vpop.permute.xlu0 %728
    %v730 = vsel %vm197, %v178, 0
    %v732 = vsel %vm197, %v729, 0
    %734 = vmatprep.subr.mxu0 0.0
    %735 = vmatpush1.xpose.msra.mxu0 0.0
    %736 = vmatprep.subr.mxu0 0.0
    %737 = vmatpush1.xpose.msra.mxu0 0.0
    %738 = vmatprep.subr.mxu0 0.0
    %739 = vmatpush1.xpose.msra.mxu0 0.0
    %740 = vmatprep.subr.mxu0 0.0
    %741 = vmatpush1.xpose.msra.mxu0 0.0
    %742 = vmatprep.subr.mxu0 0.0
    %743 = vmatpush1.xpose.msra.mxu0 0.0
    %744 = vmatprep.subr.mxu0 0.0
    %745 = vmatpush1.xpose.msra.mxu0 0.0
    %746 = vmatprep.subr.mxu0 0.0
    %747 = vmatpush1.xpose.msra.mxu0 0.0
    %748 = vmatprep.subr.mxu0 0.0
    %749 = vmatpush1.xpose.msra.mxu0 0.0
    %750 = vmatprep.subr.mxu0 0.0
    %751 = vmatpush1.xpose.msra.mxu0 0.0
    %752 = vmatprep.subr.mxu0 0.0
    %753 = vmatpush1.xpose.msra.mxu0 0.0
    %754 = vmatprep.subr.mxu0 0.0
    %755 = vmatpush1.xpose.msra.mxu0 0.0
    %756 = vmatprep.subr.mxu0 0.0
    %757 = vmatpush1.xpose.msra.mxu0 0.0
    %758 = vmatprep.subr.mxu0 0.0
    %759 = vmatpush1.xpose.msra.mxu0 0.0
    %760 = vmatprep.subr.mxu0 0.0
    %761 = vmatpush1.xpose.msra.mxu0 0.0
    %762 = vmatprep.subr.mxu0 0.0
    %763 = vmatpush1.xpose.msra.mxu0 0.0
    %764 = vmatprep.subr.mxu0 0.0
    %765 = vmatpush1.xpose.msra.mxu0 %v732
    %766 = vmatprep.subr.mxu0 0.0
    %767 = vmatpush2.xpose.msra.mxu0 0.0
    %768 = vmatprep.subr.mxu0 0.0
    %769 = vmatpush2.xpose.msra.mxu0 0.0
    %770 = vmatprep.subr.mxu0 0.0
    %771 = vmatpush2.xpose.msra.mxu0 0.0
    %772 = vmatprep.subr.mxu0 0.0
    %773 = vmatpush2.xpose.msra.mxu0 0.0
    %774 = vmatprep.subr.mxu0 0.0
    %775 = vmatpush2.xpose.msra.mxu0 0.0
    %776 = vmatprep.subr.mxu0 0.0
    %777 = vmatpush2.xpose.msra.mxu0 0.0
    %778 = vmatprep.subr.mxu0 0.0
    %779 = vmatpush2.xpose.msra.mxu0 0.0
    %780 = vmatprep.subr.mxu0 0.0
    %781 = vmatpush2.xpose.msra.mxu0 0.0
    %782 = vmatprep.subr.mxu0 0.0
    %783 = vmatpush2.xpose.msra.mxu0 0.0
    %784 = vmatprep.subr.mxu0 0.0
    %785 = vmatpush2.xpose.msra.mxu0 0.0
    %786 = vmatprep.subr.mxu0 0.0
    %787 = vmatpush2.xpose.msra.mxu0 0.0
    %788 = vmatprep.subr.mxu0 0.0
    %789 = vmatpush2.xpose.msra.mxu0 0.0
    %790 = vmatprep.subr.mxu0 0.0
    %791 = vmatpush2.xpose.msra.mxu0 0.0
    %792 = vmatprep.subr.mxu0 0.0
    %793 = vmatpush2.xpose.msra.mxu0 0.0
    %794 = vmatprep.subr.mxu0 0.0
    %795 = vmatpush2.xpose.msra.mxu0 0.0
    %796 = vmatprep.subr.mxu0 0.0
    %797 = vmatpush2.xpose.msra.mxu0 0.0
    %798 = vmatprep.mubr.f32.mxu0 0.0
    %799 = vmatmul.mubr.f32.gmra.mxu0 %v730
    %v800 = vpop.f32.mrf.mxu0
    %v801 = vadd.f32 0.0, %v800
    %v802 = vpop.f32.mrf.mxu0
    %803 = vdwg.mxu0
    %804 = vrot.lane.b32.xlu0 %v180, 112
    %v805 = vpop.permute.xlu0 %804
    %v806 = vsel %vm197, %v180, 0
    %v808 = vsel %vm197, %v805, 0
    %810 = vmatprep.subr.mxu0 0.0
    %811 = vmatpush1.xpose.msra.mxu0 0.0
    %812 = vmatprep.subr.mxu0 0.0
    %813 = vmatpush1.xpose.msra.mxu0 0.0
    %814 = vmatprep.subr.mxu0 0.0
    %815 = vmatpush1.xpose.msra.mxu0 0.0
    %816 = vmatprep.subr.mxu0 0.0
    %817 = vmatpush1.xpose.msra.mxu0 0.0
    %818 = vmatprep.subr.mxu0 0.0
    %819 = vmatpush1.xpose.msra.mxu0 0.0
    %820 = vmatprep.subr.mxu0 0.0
    %821 = vmatpush1.xpose.msra.mxu0 0.0
    %822 = vmatprep.subr.mxu0 0.0
    %823 = vmatpush1.xpose.msra.mxu0 0.0
    %824 = vmatprep.subr.mxu0 0.0
    %825 = vmatpush1.xpose.msra.mxu0 0.0
    %826 = vmatprep.subr.mxu0 0.0
    %827 = vmatpush1.xpose.msra.mxu0 0.0
    %828 = vmatprep.subr.mxu0 0.0
    %829 = vmatpush1.xpose.msra.mxu0 0.0
    %830 = vmatprep.subr.mxu0 0.0
    %831 = vmatpush1.xpose.msra.mxu0 0.0
    %832 = vmatprep.subr.mxu0 0.0
    %833 = vmatpush1.xpose.msra.mxu0 0.0
    %834 = vmatprep.subr.mxu0 0.0
    %835 = vmatpush1.xpose.msra.mxu0 0.0
    %836 = vmatprep.subr.mxu0 0.0
    %837 = vmatpush1.xpose.msra.mxu0 0.0
    %838 = vmatprep.subr.mxu0 0.0
    %839 = vmatpush1.xpose.msra.mxu0 0.0
    %840 = vmatprep.subr.mxu0 0.0
    %841 = vmatpush1.xpose.msra.mxu0 %v808
    %842 = vmatprep.subr.mxu0 0.0
    %843 = vmatpush2.xpose.msra.mxu0 0.0
    %844 = vmatprep.subr.mxu0 0.0
    %845 = vmatpush2.xpose.msra.mxu0 0.0
    %846 = vmatprep.subr.mxu0 0.0
    %847 = vmatpush2.xpose.msra.mxu0 0.0
    %848 = vmatprep.subr.mxu0 0.0
    %849 = vmatpush2.xpose.msra.mxu0 0.0
    %850 = vmatprep.subr.mxu0 0.0
    %851 = vmatpush2.xpose.msra.mxu0 0.0
    %852 = vmatprep.subr.mxu0 0.0
    %853 = vmatpush2.xpose.msra.mxu0 0.0
    %854 = vmatprep.subr.mxu0 0.0
    %855 = vmatpush2.xpose.msra.mxu0 0.0
    %856 = vmatprep.subr.mxu0 0.0
    %857 = vmatpush2.xpose.msra.mxu0 0.0
    %858 = vmatprep.subr.mxu0 0.0
    %859 = vmatpush2.xpose.msra.mxu0 0.0
    %860 = vmatprep.subr.mxu0 0.0
    %861 = vmatpush2.xpose.msra.mxu0 0.0
    %862 = vmatprep.subr.mxu0 0.0
    %863 = vmatpush2.xpose.msra.mxu0 0.0
    %864 = vmatprep.subr.mxu0 0.0
    %865 = vmatpush2.xpose.msra.mxu0 0.0
    %866 = vmatprep.subr.mxu0 0.0
    %867 = vmatpush2.xpose.msra.mxu0 0.0
    %868 = vmatprep.subr.mxu0 0.0
    %869 = vmatpush2.xpose.msra.mxu0 0.0
    %870 = vmatprep.subr.mxu0 0.0
    %871 = vmatpush2.xpose.msra.mxu0 0.0
    %872 = vmatprep.subr.mxu0 0.0
    %873 = vmatpush2.xpose.msra.mxu0 0.0
    %874 = vmatprep.mubr.f32.mxu0 0.0
    %875 = vmatmul.mubr.f32.gmra.mxu0 %v806
    %v876 = vpop.f32.mrf.mxu0
    %v877 = vadd.f32 0.0, %v876
    %v878 = vpop.f32.mrf.mxu0
    %879 = vdwg.mxu0
    %880 = vrot.lane.b32.xlu0 %v182, 112
    %v881 = vpop.permute.xlu0 %880
    %v882 = vsel %vm197, %v182, 0
    %v884 = vsel %vm197, %v881, 0
    %886 = vmatprep.subr.mxu0 0.0
    %887 = vmatpush1.xpose.msra.mxu0 0.0
    %888 = vmatprep.subr.mxu0 0.0
    %889 = vmatpush1.xpose.msra.mxu0 0.0
    %890 = vmatprep.subr.mxu0 0.0
    %891 = vmatpush1.xpose.msra.mxu0 0.0
    %892 = vmatprep.subr.mxu0 0.0
    %893 = vmatpush1.xpose.msra.mxu0 0.0
    %894 = vmatprep.subr.mxu0 0.0
    %895 = vmatpush1.xpose.msra.mxu0 0.0
    %896 = vmatprep.subr.mxu0 0.0
    %897 = vmatpush1.xpose.msra.mxu0 0.0
    %898 = vmatprep.subr.mxu0 0.0
    %899 = vmatpush1.xpose.msra.mxu0 0.0
    %900 = vmatprep.subr.mxu0 0.0
    %901 = vmatpush1.xpose.msra.mxu0 0.0
    %902 = vmatprep.subr.mxu0 0.0
    %903 = vmatpush1.xpose.msra.mxu0 0.0
    %904 = vmatprep.subr.mxu0 0.0
    %905 = vmatpush1.xpose.msra.mxu0 0.0
    %906 = vmatprep.subr.mxu0 0.0
    %907 = vmatpush1.xpose.msra.mxu0 0.0
    %908 = vmatprep.subr.mxu0 0.0
    %909 = vmatpush1.xpose.msra.mxu0 0.0
    %910 = vmatprep.subr.mxu0 0.0
    %911 = vmatpush1.xpose.msra.mxu0 0.0
    %912 = vmatprep.subr.mxu0 0.0
    %913 = vmatpush1.xpose.msra.mxu0 0.0
    %914 = vmatprep.subr.mxu0 0.0
    %915 = vmatpush1.xpose.msra.mxu0 0.0
    %916 = vmatprep.subr.mxu0 0.0
    %917 = vmatpush1.xpose.msra.mxu0 %v884
    %918 = vmatprep.subr.mxu0 0.0
    %919 = vmatpush2.xpose.msra.mxu0 0.0
    %920 = vmatprep.subr.mxu0 0.0
    %921 = vmatpush2.xpose.msra.mxu0 0.0
    %922 = vmatprep.subr.mxu0 0.0
    %923 = vmatpush2.xpose.msra.mxu0 0.0
    %924 = vmatprep.subr.mxu0 0.0
    %925 = vmatpush2.xpose.msra.mxu0 0.0
    %926 = vmatprep.subr.mxu0 0.0
    %927 = vmatpush2.xpose.msra.mxu0 0.0
    %928 = vmatprep.subr.mxu0 0.0
    %929 = vmatpush2.xpose.msra.mxu0 0.0
    %930 = vmatprep.subr.mxu0 0.0
    %931 = vmatpush2.xpose.msra.mxu0 0.0
    %932 = vmatprep.subr.mxu0 0.0
    %933 = vmatpush2.xpose.msra.mxu0 0.0
    %934 = vmatprep.subr.mxu0 0.0
    %935 = vmatpush2.xpose.msra.mxu0 0.0
    %936 = vmatprep.subr.mxu0 0.0
    %937 = vmatpush2.xpose.msra.mxu0 0.0
    %938 = vmatprep.subr.mxu0 0.0
    %939 = vmatpush2.xpose.msra.mxu0 0.0
    %940 = vmatprep.subr.mxu0 0.0
    %941 = vmatpush2.xpose.msra.mxu0 0.0
    %942 = vmatprep.subr.mxu0 0.0
    %943 = vmatpush2.xpose.msra.mxu0 0.0
    %944 = vmatprep.subr.mxu0 0.0
    %945 = vmatpush2.xpose.msra.mxu0 0.0
    %946 = vmatprep.subr.mxu0 0.0
    %947 = vmatpush2.xpose.msra.mxu0 0.0
    %948 = vmatprep.subr.mxu0 0.0
    %949 = vmatpush2.xpose.msra.mxu0 0.0
    %950 = vmatprep.mubr.f32.mxu0 0.0
    %951 = vmatmul.mubr.f32.gmra.mxu0 %v882
    %v952 = vpop.f32.mrf.mxu0
    %v953 = vadd.f32 0.0, %v952
    %v954 = vpop.f32.mrf.mxu0
    %955 = vdwg.mxu0
    %956 = vrot.lane.b32.xlu0 %v184, 112
    %v957 = vpop.permute.xlu0 %956
    %v958 = vsel %vm197, %v184, 0
    %v960 = vsel %vm197, %v957, 0
    %962 = vmatprep.subr.mxu0 0.0
    %963 = vmatpush1.xpose.msra.mxu0 0.0
    %964 = vmatprep.subr.mxu0 0.0
    %965 = vmatpush1.xpose.msra.mxu0 0.0
    %966 = vmatprep.subr.mxu0 0.0
    %967 = vmatpush1.xpose.msra.mxu0 0.0
    %968 = vmatprep.subr.mxu0 0.0
    %969 = vmatpush1.xpose.msra.mxu0 0.0
    %970 = vmatprep.subr.mxu0 0.0
    %971 = vmatpush1.xpose.msra.mxu0 0.0
    %972 = vmatprep.subr.mxu0 0.0
    %973 = vmatpush1.xpose.msra.mxu0 0.0
    %974 = vmatprep.subr.mxu0 0.0
    %975 = vmatpush1.xpose.msra.mxu0 0.0
    %976 = vmatprep.subr.mxu0 0.0
    %977 = vmatpush1.xpose.msra.mxu0 0.0
    %978 = vmatprep.subr.mxu0 0.0
    %979 = vmatpush1.xpose.msra.mxu0 0.0
    %980 = vmatprep.subr.mxu0 0.0
    %981 = vmatpush1.xpose.msra.mxu0 0.0
    %982 = vmatprep.subr.mxu0 0.0
    %983 = vmatpush1.xpose.msra.mxu0 0.0
    %984 = vmatprep.subr.mxu0 0.0
    %985 = vmatpush1.xpose.msra.mxu0 0.0
    %986 = vmatprep.subr.mxu0 0.0
    %987 = vmatpush1.xpose.msra.mxu0 0.0
    %988 = vmatprep.subr.mxu0 0.0
    %989 = vmatpush1.xpose.msra.mxu0 0.0
    %990 = vmatprep.subr.mxu0 0.0
    %991 = vmatpush1.xpose.msra.mxu0 0.0
    %992 = vmatprep.subr.mxu0 0.0
    %993 = vmatpush1.xpose.msra.mxu0 %v960
    %994 = vmatprep.subr.mxu0 0.0
    %995 = vmatpush2.xpose.msra.mxu0 0.0
    %996 = vmatprep.subr.mxu0 0.0
    %997 = vmatpush2.xpose.msra.mxu0 0.0
    %998 = vmatprep.subr.mxu0 0.0
    %999 = vmatpush2.xpose.msra.mxu0 0.0
    %1000 = vmatprep.subr.mxu0 0.0
    %1001 = vmatpush2.xpose.msra.mxu0 0.0
    %1002 = vmatprep.subr.mxu0 0.0
    %1003 = vmatpush2.xpose.msra.mxu0 0.0
    %1004 = vmatprep.subr.mxu0 0.0
    %1005 = vmatpush2.xpose.msra.mxu0 0.0
    %1006 = vmatprep.subr.mxu0 0.0
    %1007 = vmatpush2.xpose.msra.mxu0 0.0
    %1008 = vmatprep.subr.mxu0 0.0
    %1009 = vmatpush2.xpose.msra.mxu0 0.0
    %1010 = vmatprep.subr.mxu0 0.0
    %1011 = vmatpush2.xpose.msra.mxu0 0.0
    %1012 = vmatprep.subr.mxu0 0.0
    %1013 = vmatpush2.xpose.msra.mxu0 0.0
    %1014 = vmatprep.subr.mxu0 0.0
    %1015 = vmatpush2.xpose.msra.mxu0 0.0
    %1016 = vmatprep.subr.mxu0 0.0
    %1017 = vmatpush2.xpose.msra.mxu0 0.0
    %1018 = vmatprep.subr.mxu0 0.0
    %1019 = vmatpush2.xpose.msra.mxu0 0.0
    %1020 = vmatprep.subr.mxu0 0.0
    %1021 = vmatpush2.xpose.msra.mxu0 0.0
    %1022 = vmatprep.subr.mxu0 0.0
    %1023 = vmatpush2.xpose.msra.mxu0 0.0
    %1024 = vmatprep.subr.mxu0 0.0
    %1025 = vmatpush2.xpose.msra.mxu0 0.0
    %1026 = vmatprep.mubr.f32.mxu0 0.0
    %1027 = vmatmul.mubr.f32.gmra.mxu0 %v958
    %v1028 = vpop.f32.mrf.mxu0
    %v1029 = vadd.f32 0.0, %v1028
    %v1030 = vpop.f32.mrf.mxu0
    %1031 = vdwg.mxu0
    %1032 = vrot.lane.b32.xlu0 %v186, 112
    %v1033 = vpop.permute.xlu0 %1032
    %v1034 = vsel %vm197, %v186, 0
    %v1036 = vsel %vm197, %v1033, 0
    %1038 = vmatprep.subr.mxu0 0.0
    %1039 = vmatpush1.xpose.msra.mxu0 0.0
    %1040 = vmatprep.subr.mxu0 0.0
    %1041 = vmatpush1.xpose.msra.mxu0 0.0
    %1042 = vmatprep.subr.mxu0 0.0
    %1043 = vmatpush1.xpose.msra.mxu0 0.0
    %1044 = vmatprep.subr.mxu0 0.0
    %1045 = vmatpush1.xpose.msra.mxu0 0.0
    %1046 = vmatprep.subr.mxu0 0.0
    %1047 = vmatpush1.xpose.msra.mxu0 0.0
    %1048 = vmatprep.subr.mxu0 0.0
    %1049 = vmatpush1.xpose.msra.mxu0 0.0
    %1050 = vmatprep.subr.mxu0 0.0
    %1051 = vmatpush1.xpose.msra.mxu0 0.0
    %1052 = vmatprep.subr.mxu0 0.0
    %1053 = vmatpush1.xpose.msra.mxu0 0.0
    %1054 = vmatprep.subr.mxu0 0.0
    %1055 = vmatpush1.xpose.msra.mxu0 0.0
    %1056 = vmatprep.subr.mxu0 0.0
    %1057 = vmatpush1.xpose.msra.mxu0 0.0
    %1058 = vmatprep.subr.mxu0 0.0
    %1059 = vmatpush1.xpose.msra.mxu0 0.0
    %1060 = vmatprep.subr.mxu0 0.0
    %1061 = vmatpush1.xpose.msra.mxu0 0.0
    %1062 = vmatprep.subr.mxu0 0.0
    %1063 = vmatpush1.xpose.msra.mxu0 0.0
    %1064 = vmatprep.subr.mxu0 0.0
    %1065 = vmatpush1.xpose.msra.mxu0 0.0
    %1066 = vmatprep.subr.mxu0 0.0
    %1067 = vmatpush1.xpose.msra.mxu0 0.0
    %1068 = vmatprep.subr.mxu0 0.0
    %1069 = vmatpush1.xpose.msra.mxu0 %v1036
    %1070 = vmatprep.subr.mxu0 0.0
    %1071 = vmatpush2.xpose.msra.mxu0 0.0
    %1072 = vmatprep.subr.mxu0 0.0
    %1073 = vmatpush2.xpose.msra.mxu0 0.0
    %1074 = vmatprep.subr.mxu0 0.0
    %1075 = vmatpush2.xpose.msra.mxu0 0.0
    %1076 = vmatprep.subr.mxu0 0.0
    %1077 = vmatpush2.xpose.msra.mxu0 0.0
    %1078 = vmatprep.subr.mxu0 0.0
    %1079 = vmatpush2.xpose.msra.mxu0 0.0
    %1080 = vmatprep.subr.mxu0 0.0
    %1081 = vmatpush2.xpose.msra.mxu0 0.0
    %1082 = vmatprep.subr.mxu0 0.0
    %1083 = vmatpush2.xpose.msra.mxu0 0.0
    %1084 = vmatprep.subr.mxu0 0.0
    %1085 = vmatpush2.xpose.msra.mxu0 0.0
    %1086 = vmatprep.subr.mxu0 0.0
    %1087 = vmatpush2.xpose.msra.mxu0 0.0
    %1088 = vmatprep.subr.mxu0 0.0
    %1089 = vmatpush2.xpose.msra.mxu0 0.0
    %1090 = vmatprep.subr.mxu0 0.0
    %1091 = vmatpush2.xpose.msra.mxu0 0.0
    %1092 = vmatprep.subr.mxu0 0.0
    %1093 = vmatpush2.xpose.msra.mxu0 0.0
    %1094 = vmatprep.subr.mxu0 0.0
    %1095 = vmatpush2.xpose.msra.mxu0 0.0
    %1096 = vmatprep.subr.mxu0 0.0
    %1097 = vmatpush2.xpose.msra.mxu0 0.0
    %1098 = vmatprep.subr.mxu0 0.0
    %1099 = vmatpush2.xpose.msra.mxu0 0.0
    %1100 = vmatprep.subr.mxu0 0.0
    %1101 = vmatpush2.xpose.msra.mxu0 0.0
    %1102 = vmatprep.mubr.f32.mxu0 0.0
    %1103 = vmatmul.mubr.f32.gmra.mxu0 %v1034
    %v1104 = vpop.f32.mrf.mxu0
    %v1105 = vadd.f32 0.0, %v1104
    %v1106 = vpop.f32.mrf.mxu0
    %1107 = vdwg.mxu0
    %1108 = vrot.lane.b32.xlu0 %v188, 112
    %v1109 = vpop.permute.xlu0 %1108
    %v1110 = vsel %vm197, %v188, 0
    %v1112 = vsel %vm197, %v1109, 0
    %1114 = vmatprep.subr.mxu0 0.0
    %1115 = vmatpush1.xpose.msra.mxu0 0.0
    %1116 = vmatprep.subr.mxu0 0.0
    %1117 = vmatpush1.xpose.msra.mxu0 0.0
    %1118 = vmatprep.subr.mxu0 0.0
    %1119 = vmatpush1.xpose.msra.mxu0 0.0
    %1120 = vmatprep.subr.mxu0 0.0
    %1121 = vmatpush1.xpose.msra.mxu0 0.0
    %1122 = vmatprep.subr.mxu0 0.0
    %1123 = vmatpush1.xpose.msra.mxu0 0.0
    %1124 = vmatprep.subr.mxu0 0.0
    %1125 = vmatpush1.xpose.msra.mxu0 0.0
    %1126 = vmatprep.subr.mxu0 0.0
    %1127 = vmatpush1.xpose.msra.mxu0 0.0
    %1128 = vmatprep.subr.mxu0 0.0
    %1129 = vmatpush1.xpose.msra.mxu0 0.0
    %1130 = vmatprep.subr.mxu0 0.0
    %1131 = vmatpush1.xpose.msra.mxu0 0.0
    %1132 = vmatprep.subr.mxu0 0.0
    %1133 = vmatpush1.xpose.msra.mxu0 0.0
    %1134 = vmatprep.subr.mxu0 0.0
    %1135 = vmatpush1.xpose.msra.mxu0 0.0
    %1136 = vmatprep.subr.mxu0 0.0
    %1137 = vmatpush1.xpose.msra.mxu0 0.0
    %1138 = vmatprep.subr.mxu0 0.0
    %1139 = vmatpush1.xpose.msra.mxu0 0.0
    %1140 = vmatprep.subr.mxu0 0.0
    %1141 = vmatpush1.xpose.msra.mxu0 0.0
    %1142 = vmatprep.subr.mxu0 0.0
    %1143 = vmatpush1.xpose.msra.mxu0 0.0
    %1144 = vmatprep.subr.mxu0 0.0
    %1145 = vmatpush1.xpose.msra.mxu0 %v1112
    %1146 = vmatprep.subr.mxu0 0.0
    %1147 = vmatpush2.xpose.msra.mxu0 0.0
    %1148 = vmatprep.subr.mxu0 0.0
    %1149 = vmatpush2.xpose.msra.mxu0 0.0
    %1150 = vmatprep.subr.mxu0 0.0
    %1151 = vmatpush2.xpose.msra.mxu0 0.0
    %1152 = vmatprep.subr.mxu0 0.0
    %1153 = vmatpush2.xpose.msra.mxu0 0.0
    %1154 = vmatprep.subr.mxu0 0.0
    %1155 = vmatpush2.xpose.msra.mxu0 0.0
    %1156 = vmatprep.subr.mxu0 0.0
    %1157 = vmatpush2.xpose.msra.mxu0 0.0
    %1158 = vmatprep.subr.mxu0 0.0
    %1159 = vmatpush2.xpose.msra.mxu0 0.0
    %1160 = vmatprep.subr.mxu0 0.0
    %1161 = vmatpush2.xpose.msra.mxu0 0.0
    %1162 = vmatprep.subr.mxu0 0.0
    %1163 = vmatpush2.xpose.msra.mxu0 0.0
    %1164 = vmatprep.subr.mxu0 0.0
    %1165 = vmatpush2.xpose.msra.mxu0 0.0
    %1166 = vmatprep.subr.mxu0 0.0
    %1167 = vmatpush2.xpose.msra.mxu0 0.0
    %1168 = vmatprep.subr.mxu0 0.0
    %1169 = vmatpush2.xpose.msra.mxu0 0.0
    %1170 = vmatprep.subr.mxu0 0.0
    %1171 = vmatpush2.xpose.msra.mxu0 0.0
    %1172 = vmatprep.subr.mxu0 0.0
    %1173 = vmatpush2.xpose.msra.mxu0 0.0
    %1174 = vmatprep.subr.mxu0 0.0
    %1175 = vmatpush2.xpose.msra.mxu0 0.0
    %1176 = vmatprep.subr.mxu0 0.0
    %1177 = vmatpush2.xpose.msra.mxu0 0.0
    %1178 = vmatprep.mubr.f32.mxu0 0.0
    %1179 = vmatmul.mubr.f32.gmra.mxu0 %v1110
    %v1180 = vpop.f32.mrf.mxu0
    %v1181 = vadd.f32 0.0, %v1180
    %v1182 = vpop.f32.mrf.mxu0
    %1183 = vdwg.mxu0
    %1184 = vrot.lane.b32.xlu0 %v190, 112
    %v1185 = vpop.permute.xlu0 %1184
    %v1186 = vsel %vm197, %v190, 0
    %v1188 = vsel %vm197, %v1185, 0
    %1190 = vmatprep.subr.mxu0 0.0
    %1191 = vmatpush1.xpose.msra.mxu0 0.0
    %1192 = vmatprep.subr.mxu0 0.0
    %1193 = vmatpush1.xpose.msra.mxu0 0.0
    %1194 = vmatprep.subr.mxu0 0.0
    %1195 = vmatpush1.xpose.msra.mxu0 0.0
    %1196 = vmatprep.subr.mxu0 0.0
    %1197 = vmatpush1.xpose.msra.mxu0 0.0
    %1198 = vmatprep.subr.mxu0 0.0
    %1199 = vmatpush1.xpose.msra.mxu0 0.0
    %1200 = vmatprep.subr.mxu0 0.0
    %1201 = vmatpush1.xpose.msra.mxu0 0.0
    %1202 = vmatprep.subr.mxu0 0.0
    %1203 = vmatpush1.xpose.msra.mxu0 0.0
    %1204 = vmatprep.subr.mxu0 0.0
    %1205 = vmatpush1.xpose.msra.mxu0 0.0
    %1206 = vmatprep.subr.mxu0 0.0
    %1207 = vmatpush1.xpose.msra.mxu0 0.0
    %1208 = vmatprep.subr.mxu0 0.0
    %1209 = vmatpush1.xpose.msra.mxu0 0.0
    %1210 = vmatprep.subr.mxu0 0.0
    %1211 = vmatpush1.xpose.msra.mxu0 0.0
    %1212 = vmatprep.subr.mxu0 0.0
    %1213 = vmatpush1.xpose.msra.mxu0 0.0
    %1214 = vmatprep.subr.mxu0 0.0
    %1215 = vmatpush1.xpose.msra.mxu0 0.0
    %1216 = vmatprep.subr.mxu0 0.0
    %1217 = vmatpush1.xpose.msra.mxu0 0.0
    %1218 = vmatprep.subr.mxu0 0.0
    %1219 = vmatpush1.xpose.msra.mxu0 0.0
    %1220 = vmatprep.subr.mxu0 0.0
    %1221 = vmatpush1.xpose.msra.mxu0 %v1188
    %1222 = vmatprep.subr.mxu0 0.0
    %1223 = vmatpush2.xpose.msra.mxu0 0.0
    %1224 = vmatprep.subr.mxu0 0.0
    %1225 = vmatpush2.xpose.msra.mxu0 0.0
    %1226 = vmatprep.subr.mxu0 0.0
    %1227 = vmatpush2.xpose.msra.mxu0 0.0
    %1228 = vmatprep.subr.mxu0 0.0
    %1229 = vmatpush2.xpose.msra.mxu0 0.0
    %1230 = vmatprep.subr.mxu0 0.0
    %1231 = vmatpush2.xpose.msra.mxu0 0.0
    %1232 = vmatprep.subr.mxu0 0.0
    %1233 = vmatpush2.xpose.msra.mxu0 0.0
    %1234 = vmatprep.subr.mxu0 0.0
    %1235 = vmatpush2.xpose.msra.mxu0 0.0
    %1236 = vmatprep.subr.mxu0 0.0
    %1237 = vmatpush2.xpose.msra.mxu0 0.0
    %1238 = vmatprep.subr.mxu0 0.0
    %1239 = vmatpush2.xpose.msra.mxu0 0.0
    %1240 = vmatprep.subr.mxu0 0.0
    %1241 = vmatpush2.xpose.msra.mxu0 0.0
    %1242 = vmatprep.subr.mxu0 0.0
    %1243 = vmatpush2.xpose.msra.mxu0 0.0
    %1244 = vmatprep.subr.mxu0 0.0
    %1245 = vmatpush2.xpose.msra.mxu0 0.0
    %1246 = vmatprep.subr.mxu0 0.0
    %1247 = vmatpush2.xpose.msra.mxu0 0.0
    %1248 = vmatprep.subr.mxu0 0.0
    %1249 = vmatpush2.xpose.msra.mxu0 0.0
    %1250 = vmatprep.subr.mxu0 0.0
    %1251 = vmatpush2.xpose.msra.mxu0 0.0
    %1252 = vmatprep.subr.mxu0 0.0
    %1253 = vmatpush2.xpose.msra.mxu0 0.0
    %1254 = vmatprep.mubr.f32.mxu0 0.0
    %1255 = vmatmul.mubr.f32.gmra.mxu0 %v1186
    %v1256 = vpop.f32.mrf.mxu0
    %v1257 = vadd.f32 0.0, %v1256
    %v1258 = vpop.f32.mrf.mxu0
    %1259 = vdwg.mxu0
    %1260 = vrot.lane.b32.xlu0 %v192, 112
    %v1261 = vpop.permute.xlu0 %1260
    %v1262 = vsel %vm197, %v192, 0
    %v1264 = vsel %vm197, %v1261, 0
    %1266 = vmatprep.subr.mxu0 0.0
    %1267 = vmatpush1.xpose.msra.mxu0 0.0
    %1268 = vmatprep.subr.mxu0 0.0
    %1269 = vmatpush1.xpose.msra.mxu0 0.0
    %1270 = vmatprep.subr.mxu0 0.0
    %1271 = vmatpush1.xpose.msra.mxu0 0.0
    %1272 = vmatprep.subr.mxu0 0.0
    %1273 = vmatpush1.xpose.msra.mxu0 0.0
    %1274 = vmatprep.subr.mxu0 0.0
    %1275 = vmatpush1.xpose.msra.mxu0 0.0
    %1276 = vmatprep.subr.mxu0 0.0
    %1277 = vmatpush1.xpose.msra.mxu0 0.0
    %1278 = vmatprep.subr.mxu0 0.0
    %1279 = vmatpush1.xpose.msra.mxu0 0.0
    %1280 = vmatprep.subr.mxu0 0.0
    %1281 = vmatpush1.xpose.msra.mxu0 0.0
    %1282 = vmatprep.subr.mxu0 0.0
    %1283 = vmatpush1.xpose.msra.mxu0 0.0
    %1284 = vmatprep.subr.mxu0 0.0
    %1285 = vmatpush1.xpose.msra.mxu0 0.0
    %1286 = vmatprep.subr.mxu0 0.0
    %1287 = vmatpush1.xpose.msra.mxu0 0.0
    %1288 = vmatprep.subr.mxu0 0.0
    %1289 = vmatpush1.xpose.msra.mxu0 0.0
    %1290 = vmatprep.subr.mxu0 0.0
    %1291 = vmatpush1.xpose.msra.mxu0 0.0
    %1292 = vmatprep.subr.mxu0 0.0
    %1293 = vmatpush1.xpose.msra.mxu0 0.0
    %1294 = vmatprep.subr.mxu0 0.0
    %1295 = vmatpush1.xpose.msra.mxu0 0.0
    %1296 = vmatprep.subr.mxu0 0.0
    %1297 = vmatpush1.xpose.msra.mxu0 %v1264
    %1298 = vmatprep.subr.mxu0 0.0
    %1299 = vmatpush2.xpose.msra.mxu0 0.0
    %1300 = vmatprep.subr.mxu0 0.0
    %1301 = vmatpush2.xpose.msra.mxu0 0.0
    %1302 = vmatprep.subr.mxu0 0.0
    %1303 = vmatpush2.xpose.msra.mxu0 0.0
    %1304 = vmatprep.subr.mxu0 0.0
    %1305 = vmatpush2.xpose.msra.mxu0 0.0
    %1306 = vmatprep.subr.mxu0 0.0
    %1307 = vmatpush2.xpose.msra.mxu0 0.0
    %1308 = vmatprep.subr.mxu0 0.0
    %1309 = vmatpush2.xpose.msra.mxu0 0.0
    %1310 = vmatprep.subr.mxu0 0.0
    %1311 = vmatpush2.xpose.msra.mxu0 0.0
    %1312 = vmatprep.subr.mxu0 0.0
    %1313 = vmatpush2.xpose.msra.mxu0 0.0
    %1314 = vmatprep.subr.mxu0 0.0
    %1315 = vmatpush2.xpose.msra.mxu0 0.0
    %1316 = vmatprep.subr.mxu0 0.0
    %1317 = vmatpush2.xpose.msra.mxu0 0.0
    %1318 = vmatprep.subr.mxu0 0.0
    %1319 = vmatpush2.xpose.msra.mxu0 0.0
    %1320 = vmatprep.subr.mxu0 0.0
    %1321 = vmatpush2.xpose.msra.mxu0 0.0
    %1322 = vmatprep.subr.mxu0 0.0
    %1323 = vmatpush2.xpose.msra.mxu0 0.0
    %1324 = vmatprep.subr.mxu0 0.0
    %1325 = vmatpush2.xpose.msra.mxu0 0.0
    %1326 = vmatprep.subr.mxu0 0.0
    %1327 = vmatpush2.xpose.msra.mxu0 0.0
    %1328 = vmatprep.subr.mxu0 0.0
    %1329 = vmatpush2.xpose.msra.mxu0 0.0
    %1330 = vmatprep.mubr.f32.mxu0 0.0
    %1331 = vmatmul.mubr.f32.gmra.mxu0 %v1262
    %v1332 = vpop.f32.mrf.mxu0
    %v1333 = vadd.f32 0.0, %v1332
    %v1334 = vpop.f32.mrf.mxu0
    %1335 = vdwg.mxu0
    %1336 = vrot.lane.b32.xlu0 %v194, 112
    %v1337 = vpop.permute.xlu0 %1336
    %v1338 = vsel %vm197, %v194, 0
    %v1340 = vsel %vm197, %v1337, 0
    %1342 = vmatprep.subr.mxu0 0.0
    %1343 = vmatpush1.xpose.msra.mxu0 0.0
    %1344 = vmatprep.subr.mxu0 0.0
    %1345 = vmatpush1.xpose.msra.mxu0 0.0
    %1346 = vmatprep.subr.mxu0 0.0
    %1347 = vmatpush1.xpose.msra.mxu0 0.0
    %1348 = vmatprep.subr.mxu0 0.0
    %1349 = vmatpush1.xpose.msra.mxu0 0.0
    %1350 = vmatprep.subr.mxu0 0.0
    %1351 = vmatpush1.xpose.msra.mxu0 0.0
    %1352 = vmatprep.subr.mxu0 0.0
    %1353 = vmatpush1.xpose.msra.mxu0 0.0
    %1354 = vmatprep.subr.mxu0 0.0
    %1355 = vmatpush1.xpose.msra.mxu0 0.0
    %1356 = vmatprep.subr.mxu0 0.0
    %1357 = vmatpush1.xpose.msra.mxu0 0.0
    %1358 = vmatprep.subr.mxu0 0.0
    %1359 = vmatpush1.xpose.msra.mxu0 0.0
    %1360 = vmatprep.subr.mxu0 0.0
    %1361 = vmatpush1.xpose.msra.mxu0 0.0
    %1362 = vmatprep.subr.mxu0 0.0
    %1363 = vmatpush1.xpose.msra.mxu0 0.0
    %1364 = vmatprep.subr.mxu0 0.0
    %1365 = vmatpush1.xpose.msra.mxu0 0.0
    %1366 = vmatprep.subr.mxu0 0.0
    %1367 = vmatpush1.xpose.msra.mxu0 0.0
    %1368 = vmatprep.subr.mxu0 0.0
    %1369 = vmatpush1.xpose.msra.mxu0 0.0
    %1370 = vmatprep.subr.mxu0 0.0
    %1371 = vmatpush1.xpose.msra.mxu0 0.0
    %1372 = vmatprep.subr.mxu0 0.0
    %1373 = vmatpush1.xpose.msra.mxu0 %v1340
    %1374 = vmatprep.subr.mxu0 0.0
    %1375 = vmatpush2.xpose.msra.mxu0 0.0
    %1376 = vmatprep.subr.mxu0 0.0
    %1377 = vmatpush2.xpose.msra.mxu0 0.0
    %1378 = vmatprep.subr.mxu0 0.0
    %1379 = vmatpush2.xpose.msra.mxu0 0.0
    %1380 = vmatprep.subr.mxu0 0.0
    %1381 = vmatpush2.xpose.msra.mxu0 0.0
    %1382 = vmatprep.subr.mxu0 0.0
    %1383 = vmatpush2.xpose.msra.mxu0 0.0
    %1384 = vmatprep.subr.mxu0 0.0
    %1385 = vmatpush2.xpose.msra.mxu0 0.0
    %1386 = vmatprep.subr.mxu0 0.0
    %1387 = vmatpush2.xpose.msra.mxu0 0.0
    %1388 = vmatprep.subr.mxu0 0.0
    %1389 = vmatpush2.xpose.msra.mxu0 0.0
    %1390 = vmatprep.subr.mxu0 0.0
    %1391 = vmatpush2.xpose.msra.mxu0 0.0
    %1392 = vmatprep.subr.mxu0 0.0
    %1393 = vmatpush2.xpose.msra.mxu0 0.0
    %1394 = vmatprep.subr.mxu0 0.0
    %1395 = vmatpush2.xpose.msra.mxu0 0.0
    %1396 = vmatprep.subr.mxu0 0.0
    %1397 = vmatpush2.xpose.msra.mxu0 0.0
    %1398 = vmatprep.subr.mxu0 0.0
    %1399 = vmatpush2.xpose.msra.mxu0 0.0
    %1400 = vmatprep.subr.mxu0 0.0
    %1401 = vmatpush2.xpose.msra.mxu0 0.0
    %1402 = vmatprep.subr.mxu0 0.0
    %1403 = vmatpush2.xpose.msra.mxu0 0.0
    %1404 = vmatprep.subr.mxu0 0.0
    %1405 = vmatpush2.xpose.msra.mxu0 0.0
    %1406 = vmatprep.mubr.f32.mxu0 0.0
    %1407 = vmatmul.mubr.f32.gmra.mxu0 %v1338
    %v1408 = vpop.f32.mrf.mxu0
    %v1409 = vadd.f32 0.0, %v1408
    %v1410 = vpop.f32.mrf.mxu0
    %1411 = vdwg.mxu0
    %v1412 = vmul.f32 %v269, 0.70710677
    %v1413 = vmul.f32 %v345, 0.70710677
    %v1414 = vmul.f32 %v421, 0.70710677
    %v1415 = vmul.f32 %v497, 0.70710677
    %v1416 = vmul.f32 %v573, 0.70710677
    %v1417 = vmul.f32 %v649, 0.70710677
    %v1418 = vmul.f32 %v725, 0.70710677
    %v1419 = vmul.f32 %v801, 0.70710677
    %v1420 = vmul.f32 %v877, 0.70710677
    %v1421 = vmul.f32 %v953, 0.70710677
    %v1422 = vmul.f32 %v1029, 0.70710677
    %v1423 = vmul.f32 %v1105, 0.70710677
    %v1424 = vmul.f32 %v1181, 0.70710677
    %v1425 = vmul.f32 %v1257, 0.70710677
    %v1426 = vmul.f32 %v1333, 0.70710677
    %v1427 = vmul.f32 %v1409, 0.70710677
    %vm1428 = vcmask 64512
    %v1429 = vsel %vm1428, %v1412, -inf
    %1430 = vmax.xlane.f32.xlu0 %v1429
    %v1431 = vpop.xlane.xlu0 %1430
    %v1432 = vsel %vm1428, %v1413, -inf
    %1433 = vmax.xlane.f32.xlu0 %v1432
    %v1434 = vpop.xlane.xlu0 %1433
    %v1435 = vsel %vm1428, %v1414, -inf
    %1436 = vmax.xlane.f32.xlu0 %v1435
    %v1437 = vpop.xlane.xlu0 %1436
    %v1438 = vsel %vm1428, %v1415, -inf
    %1439 = vmax.xlane.f32.xlu0 %v1438
    %v1440 = vpop.xlane.xlu0 %1439
    %v1441 = vsel %vm1428, %v1416, -inf
    %1442 = vmax.xlane.f32.xlu0 %v1441
    %v1443 = vpop.xlane.xlu0 %1442
    %v1444 = vsel %vm1428, %v1417, -inf
    %1445 = vmax.xlane.f32.xlu0 %v1444
    %v1446 = vpop.xlane.xlu0 %1445
    %v1447 = vsel %vm1428, %v1418, -inf
    %1448 = vmax.xlane.f32.xlu0 %v1447
    %v1449 = vpop.xlane.xlu0 %1448
    %v1450 = vsel %vm1428, %v1419, -inf
    %1451 = vmax.xlane.f32.xlu0 %v1450
    %v1452 = vpop.xlane.xlu0 %1451
    %v1453 = vsel %vm1428, %v1420, -inf
    %1454 = vmax.xlane.f32.xlu0 %v1453
    %v1455 = vpop.xlane.xlu0 %1454
    %v1456 = vsel %vm1428, %v1421, -inf
    %1457 = vmax.xlane.f32.xlu0 %v1456
    %v1458 = vpop.xlane.xlu0 %1457
    %v1459 = vsel %vm1428, %v1422, -inf
    %1460 = vmax.xlane.f32.xlu0 %v1459
    %v1461 = vpop.xlane.xlu0 %1460
    %v1462 = vsel %vm1428, %v1423, -inf
    %1463 = vmax.xlane.f32.xlu0 %v1462
    %v1464 = vpop.xlane.xlu0 %1463
    %v1465 = vsel %vm1428, %v1424, -inf
    %1466 = vmax.xlane.f32.xlu0 %v1465
    %v1467 = vpop.xlane.xlu0 %1466
    %v1468 = vsel %vm1428, %v1425, -inf
    %1469 = vmax.xlane.f32.xlu0 %v1468
    %v1470 = vpop.xlane.xlu0 %1469
    %v1471 = vsel %vm1428, %v1426, -inf
    %1472 = vmax.xlane.f32.xlu0 %v1471
    %v1473 = vpop.xlane.xlu0 %1472
    %v1474 = vsel %vm1428, %v1427, -inf
    %1475 = vmax.xlane.f32.xlu0 %v1474
    %v1476 = vpop.xlane.xlu0 %1475
    %v1477 = vsub.f32 %v1412, %v1431
    %v1478 = vsub.f32 %v1413, %v1434
    %v1479 = vsub.f32 %v1414, %v1437
    %v1480 = vsub.f32 %v1415, %v1440
    %v1481 = vsub.f32 %v1416, %v1443
    %v1482 = vsub.f32 %v1417, %v1446
    %v1483 = vsub.f32 %v1418, %v1449
    %v1484 = vsub.f32 %v1419, %v1452
    %v1485 = vsub.f32 %v1420, %v1455
    %v1486 = vsub.f32 %v1421, %v1458
    %v1487 = vsub.f32 %v1422, %v1461
    %v1488 = vsub.f32 %v1423, %v1464
    %v1489 = vsub.f32 %v1424, %v1467
    %v1490 = vsub.f32 %v1425, %v1470
    %v1491 = vsub.f32 %v1426, %v1473
    %v1492 = vsub.f32 %v1427, %v1476
    %v1493 = vmul.f32 %v1477, 1.442695
    %v1494 = vpow.pop %v1493
    %v1495 = vmul.f32 %v1478, 1.442695
    %v1496 = vpow.pop %v1495
    %v1497 = vmul.f32 %v1479, 1.442695
    %v1498 = vpow.pop %v1497
    %v1499 = vmul.f32 %v1480, 1.442695
    %v1500 = vpow.pop %v1499
    %v1501 = vmul.f32 %v1481, 1.442695
    %v1502 = vpow.pop %v1501
    %v1503 = vmul.f32 %v1482, 1.442695
    %v1504 = vpow.pop %v1503
    %v1505 = vmul.f32 %v1483, 1.442695
    %v1506 = vpow.pop %v1505
    %v1507 = vmul.f32 %v1484, 1.442695
    %v1508 = vpow.pop %v1507
    %v1509 = vmul.f32 %v1485, 1.442695
    %v1510 = vpow.pop %v1509
    %v1511 = vmul.f32 %v1486, 1.442695
    %v1512 = vpow.pop %v1511
    %v1513 = vmul.f32 %v1487, 1.442695
    %v1514 = vpow.pop %v1513
    %v1515 = vmul.f32 %v1488, 1.442695
    %v1516 = vpow.pop %v1515
    %v1517 = vmul.f32 %v1489, 1.442695
    %v1518 = vpow.pop %v1517
    %v1519 = vmul.f32 %v1490, 1.442695
    %v1520 = vpow.pop %v1519
    %v1521 = vmul.f32 %v1491, 1.442695
    %v1522 = vpow.pop %v1521
    %v1523 = vmul.f32 %v1492, 1.442695
    %v1524 = vpow.pop %v1523
    %v1525 = vsel %vm1428, %v1494, 0.0
    %1526 = vadd.xlane.f32.xlu0 %v1525
    %v1527 = vpop.xlane.xlu0 %1526
    %v1528 = vsel %vm1428, %v1496, 0.0
    %1529 = vadd.xlane.f32.xlu0 %v1528
    %v1530 = vpop.xlane.xlu0 %1529
    %v1531 = vsel %vm1428, %v1498, 0.0
    %1532 = vadd.xlane.f32.xlu0 %v1531
    %v1533 = vpop.xlane.xlu0 %1532
    %v1534 = vsel %vm1428, %v1500, 0.0
    %1535 = vadd.xlane.f32.xlu0 %v1534
    %v1536 = vpop.xlane.xlu0 %1535
    %v1537 = vsel %vm1428, %v1502, 0.0
    %1538 = vadd.xlane.f32.xlu0 %v1537
    %v1539 = vpop.xlane.xlu0 %1538
    %v1540 = vsel %vm1428, %v1504, 0.0
    %1541 = vadd.xlane.f32.xlu0 %v1540
    %v1542 = vpop.xlane.xlu0 %1541
    %v1543 = vsel %vm1428, %v1506, 0.0
    %1544 = vadd.xlane.f32.xlu0 %v1543
    %v1545 = vpop.xlane.xlu0 %1544
    %v1546 = vsel %vm1428, %v1508, 0.0
    %1547 = vadd.xlane.f32.xlu0 %v1546
    %v1548 = vpop.xlane.xlu0 %1547
    %v1549 = vsel %vm1428, %v1510, 0.0
    %1550 = vadd.xlane.f32.xlu0 %v1549
    %v1551 = vpop.xlane.xlu0 %1550
    %v1552 = vsel %vm1428, %v1512, 0.0
    %1553 = vadd.xlane.f32.xlu0 %v1552
    %v1554 = vpop.xlane.xlu0 %1553
    %v1555 = vsel %vm1428, %v1514, 0.0
    %1556 = vadd.xlane.f32.xlu0 %v1555
    %v1557 = vpop.xlane.xlu0 %1556
    %v1558 = vsel %vm1428, %v1516, 0.0
    %1559 = vadd.xlane.f32.xlu0 %v1558
    %v1560 = vpop.xlane.xlu0 %1559
    %v1561 = vsel %vm1428, %v1518, 0.0
    %1562 = vadd.xlane.f32.xlu0 %v1561
    %v1563 = vpop.xlane.xlu0 %1562
    %v1564 = vsel %vm1428, %v1520, 0.0
    %1565 = vadd.xlane.f32.xlu0 %v1564
    %v1566 = vpop.xlane.xlu0 %1565
    %v1567 = vsel %vm1428, %v1522, 0.0
    %1568 = vadd.xlane.f32.xlu0 %v1567
    %v1569 = vpop.xlane.xlu0 %1568
    %v1570 = vsel %vm1428, %v1524, 0.0
    %1571 = vadd.xlane.f32.xlu0 %v1570
    %v1572 = vpop.xlane.xlu0 %1571
    %v1573 = vrcp.pop %v1527
    %v1574 = vrcp.pop %v1530
    %v1575 = vrcp.pop %v1533
    %v1576 = vrcp.pop %v1536
    %v1577 = vrcp.pop %v1539
    %v1578 = vrcp.pop %v1542
    %v1579 = vrcp.pop %v1545
    %v1580 = vrcp.pop %v1548
    %v1581 = vrcp.pop %v1551
    %v1582 = vrcp.pop %v1554
    %v1583 = vrcp.pop %v1557
    %v1584 = vrcp.pop %v1560
    %v1585 = vrcp.pop %v1563
    %v1586 = vrcp.pop %v1566
    %v1587 = vrcp.pop %v1569
    %v1588 = vrcp.pop %v1572
    %v1589 = vmul.f32 %v1494, %v1573
    %v1590 = vmul.f32 %v1496, %v1574
    %v1591 = vmul.f32 %v1498, %v1575
    %v1592 = vmul.f32 %v1500, %v1576
    %v1593 = vmul.f32 %v1502, %v1577
    %v1594 = vmul.f32 %v1504, %v1578
    %v1595 = vmul.f32 %v1506, %v1579
    %v1596 = vmul.f32 %v1508, %v1580
    %v1597 = vmul.f32 %v1510, %v1581
    %v1598 = vmul.f32 %v1512, %v1582
    %v1599 = vmul.f32 %v1514, %v1583
    %v1600 = vmul.f32 %v1516, %v1584
    %v1601 = vmul.f32 %v1518, %v1585
    %v1602 = vmul.f32 %v1520, %v1586
    %v1603 = vmul.f32 %v1522, %v1587
    %v1604 = vmul.f32 %v1524, %v1588
    %1605 = vst.msk [vmem:[%s5] sm:$0xff] %vm1428, %v1589
    %1606 = vst.msk [vmem:[%s5 + $0x8] sm:$0xff] %vm1428, %v1590
    %1607 = vst.msk [vmem:[%s5 + $0x10] sm:$0xff] %vm1428, %v1591
    %1608 = vst.msk [vmem:[%s5 + $0x18] sm:$0xff] %vm1428, %v1592
    %1609 = vst.msk [vmem:[%s5 + $0x20] sm:$0xff] %vm1428, %v1593
    %1610 = vst.msk [vmem:[%s5 + $0x28] sm:$0xff] %vm1428, %v1594
    %1611 = vst.msk [vmem:[%s5 + $0x30] sm:$0xff] %vm1428, %v1595
    %1612 = vst.msk [vmem:[%s5 + $0x38] sm:$0xff] %vm1428, %v1596
    %1613 = vst.msk [vmem:[%s5 + $0x40] sm:$0xff] %vm1428, %v1597
    %1614 = vst.msk [vmem:[%s5 + $0x48] sm:$0xff] %vm1428, %v1598
    %1615 = vst.msk [vmem:[%s5 + $0x50] sm:$0xff] %vm1428, %v1599
    %1616 = vst.msk [vmem:[%s5 + $0x58] sm:$0xff] %vm1428, %v1600
    %1617 = vst.msk [vmem:[%s5 + $0x60] sm:$0xff] %vm1428, %v1601
    %1618 = vst.msk [vmem:[%s5 + $0x68] sm:$0xff] %vm1428, %v1602
    %1619 = vst.msk [vmem:[%s5 + $0x70] sm:$0xff] %vm1428, %v1603
    %1620 = vst.msk [vmem:[%s5 + $0x78] sm:$0xff] %vm1428, %v1604
    %1621 = vrot.lane.b32.xlu0 %v157, 96
    %v1622 = vpop.permute.xlu0 %1621
    %v1625 = vsel %vm1428, %v1589, 0
    %1627 = vmatprep.subr.mxu0 0.0
    %1628 = vmatpush1.msra.mxu0 0.0
    %1629 = vmatprep.subr.mxu0 0.0
    %1630 = vmatpush1.msra.mxu0 0.0
    %1631 = vmatprep.subr.mxu0 0.0
    %1632 = vmatpush1.msra.mxu0 0.0
    %1633 = vmatprep.subr.mxu0 0.0
    %1634 = vmatpush1.msra.mxu0 0.0
    %1635 = vmatprep.subr.mxu0 0.0
    %1636 = vmatpush1.msra.mxu0 0.0
    %1637 = vmatprep.subr.mxu0 0.0
    %1638 = vmatpush1.msra.mxu0 0.0
    %1639 = vmatprep.subr.mxu0 0.0
    %1640 = vmatpush1.msra.mxu0 0.0
    %1641 = vmatprep.subr.mxu0 0.0
    %1642 = vmatpush1.msra.mxu0 0.0
    %1643 = vmatprep.subr.mxu0 0.0
    %1644 = vmatpush1.msra.mxu0 0.0
    %1645 = vmatprep.subr.mxu0 0.0
    %1646 = vmatpush1.msra.mxu0 0.0
    %1647 = vmatprep.subr.mxu0 0.0
    %1648 = vmatpush1.msra.mxu0 0.0
    %1649 = vmatprep.subr.mxu0 0.0
    %1650 = vmatpush1.msra.mxu0 0.0
    %1651 = vmatprep.subr.mxu0 0.0
    %1652 = vmatpush1.msra.mxu0 0.0
    %1653 = vmatprep.subr.mxu0 0.0
    %1654 = vmatpush1.msra.mxu0 0.0
    %1655 = vmatprep.subr.mxu0 0.0
    %1656 = vmatpush1.msra.mxu0 0.0
    %1657 = vmatprep.subr.mxu0 0.0
    %1658 = vmatpush1.msra.mxu0 %v1622
    %1659 = vmatprep.subr.mxu0 0.0
    %1660 = vmatpush2.msra.mxu0 0.0
    %1661 = vmatprep.subr.mxu0 0.0
    %1662 = vmatpush2.msra.mxu0 0.0
    %1663 = vmatprep.subr.mxu0 0.0
    %1664 = vmatpush2.msra.mxu0 0.0
    %1665 = vmatprep.subr.mxu0 0.0
    %1666 = vmatpush2.msra.mxu0 0.0
    %1667 = vmatprep.subr.mxu0 0.0
    %1668 = vmatpush2.msra.mxu0 0.0
    %1669 = vmatprep.subr.mxu0 0.0
    %1670 = vmatpush2.msra.mxu0 0.0
    %1671 = vmatprep.subr.mxu0 0.0
    %1672 = vmatpush2.msra.mxu0 0.0
    %1673 = vmatprep.subr.mxu0 0.0
    %1674 = vmatpush2.msra.mxu0 0.0
    %1675 = vmatprep.subr.mxu0 0.0
    %1676 = vmatpush2.msra.mxu0 0.0
    %1677 = vmatprep.subr.mxu0 0.0
    %1678 = vmatpush2.msra.mxu0 0.0
    %1679 = vmatprep.subr.mxu0 0.0
    %1680 = vmatpush2.msra.mxu0 0.0
    %1681 = vmatprep.subr.mxu0 0.0
    %1682 = vmatpush2.msra.mxu0 0.0
    %1683 = vmatprep.subr.mxu0 0.0
    %1684 = vmatpush2.msra.mxu0 0.0
    %1685 = vmatprep.subr.mxu0 0.0
    %1686 = vmatpush2.msra.mxu0 0.0
    %1687 = vmatprep.subr.mxu0 0.0
    %1688 = vmatpush2.msra.mxu0 0.0
    %1689 = vmatprep.subr.mxu0 0.0
    %1690 = vmatpush2.msra.mxu0 0.0
    %1691 = vmatprep.mubr.f32.mxu0 0.0
    %1692 = vmatmul.mubr.f32.gmra.mxu0 %v1625
    %v1693 = vpop.f32.mrf.mxu0
    %v1694 = vadd.f32 0.0, %v1693
    %v1695 = vpop.f32.mrf.mxu0
    %1696 = vdwg.mxu0
    %1697 = vrot.lane.b32.xlu0 %v162, 96
    %v1698 = vpop.permute.xlu0 %1697
    %v1701 = vsel %vm1428, %v1590, 0
    %1703 = vmatprep.subr.mxu0 0.0
    %1704 = vmatpush1.msra.mxu0 0.0
    %1705 = vmatprep.subr.mxu0 0.0
    %1706 = vmatpush1.msra.mxu0 0.0
    %1707 = vmatprep.subr.mxu0 0.0
    %1708 = vmatpush1.msra.mxu0 0.0
    %1709 = vmatprep.subr.mxu0 0.0
    %1710 = vmatpush1.msra.mxu0 0.0
    %1711 = vmatprep.subr.mxu0 0.0
    %1712 = vmatpush1.msra.mxu0 0.0
    %1713 = vmatprep.subr.mxu0 0.0
    %1714 = vmatpush1.msra.mxu0 0.0
    %1715 = vmatprep.subr.mxu0 0.0
    %1716 = vmatpush1.msra.mxu0 0.0
    %1717 = vmatprep.subr.mxu0 0.0
    %1718 = vmatpush1.msra.mxu0 0.0
    %1719 = vmatprep.subr.mxu0 0.0
    %1720 = vmatpush1.msra.mxu0 0.0
    %1721 = vmatprep.subr.mxu0 0.0
    %1722 = vmatpush1.msra.mxu0 0.0
    %1723 = vmatprep.subr.mxu0 0.0
    %1724 = vmatpush1.msra.mxu0 0.0
    %1725 = vmatprep.subr.mxu0 0.0
    %1726 = vmatpush1.msra.mxu0 0.0
    %1727 = vmatprep.subr.mxu0 0.0
    %1728 = vmatpush1.msra.mxu0 0.0
    %1729 = vmatprep.subr.mxu0 0.0
    %1730 = vmatpush1.msra.mxu0 0.0
    %1731 = vmatprep.subr.mxu0 0.0
    %1732 = vmatpush1.msra.mxu0 0.0
    %1733 = vmatprep.subr.mxu0 0.0
    %1734 = vmatpush1.msra.mxu0 %v1698
    %1735 = vmatprep.subr.mxu0 0.0
    %1736 = vmatpush2.msra.mxu0 0.0
    %1737 = vmatprep.subr.mxu0 0.0
    %1738 = vmatpush2.msra.mxu0 0.0
    %1739 = vmatprep.subr.mxu0 0.0
    %1740 = vmatpush2.msra.mxu0 0.0
    %1741 = vmatprep.subr.mxu0 0.0
    %1742 = vmatpush2.msra.mxu0 0.0
    %1743 = vmatprep.subr.mxu0 0.0
    %1744 = vmatpush2.msra.mxu0 0.0
    %1745 = vmatprep.subr.mxu0 0.0
    %1746 = vmatpush2.msra.mxu0 0.0
    %1747 = vmatprep.subr.mxu0 0.0
    %1748 = vmatpush2.msra.mxu0 0.0
    %1749 = vmatprep.subr.mxu0 0.0
    %1750 = vmatpush2.msra.mxu0 0.0
    %1751 = vmatprep.subr.mxu0 0.0
    %1752 = vmatpush2.msra.mxu0 0.0
    %1753 = vmatprep.subr.mxu0 0.0
    %1754 = vmatpush2.msra.mxu0 0.0
    %1755 = vmatprep.subr.mxu0 0.0
    %1756 = vmatpush2.msra.mxu0 0.0
    %1757 = vmatprep.subr.mxu0 0.0
    %1758 = vmatpush2.msra.mxu0 0.0
    %1759 = vmatprep.subr.mxu0 0.0
    %1760 = vmatpush2.msra.mxu0 0.0
    %1761 = vmatprep.subr.mxu0 0.0
    %1762 = vmatpush2.msra.mxu0 0.0
    %1763 = vmatprep.subr.mxu0 0.0
    %1764 = vmatpush2.msra.mxu0 0.0
    %1765 = vmatprep.subr.mxu0 0.0
    %1766 = vmatpush2.msra.mxu0 0.0
    %1767 = vmatprep.mubr.f32.mxu0 0.0
    %1768 = vmatmul.mubr.f32.gmra.mxu0 %v1701
    %v1769 = vpop.f32.mrf.mxu0
    %v1770 = vadd.f32 0.0, %v1769
    %v1771 = vpop.f32.mrf.mxu0
    %1772 = vdwg.mxu0
    %1773 = vrot.lane.b32.xlu0 %v167, 96
    %v1774 = vpop.permute.xlu0 %1773
    %v1777 = vsel %vm1428, %v1591, 0
    %1779 = vmatprep.subr.mxu0 0.0
    %1780 = vmatpush1.msra.mxu0 0.0
    %1781 = vmatprep.subr.mxu0 0.0
    %1782 = vmatpush1.msra.mxu0 0.0
    %1783 = vmatprep.subr.mxu0 0.0
    %1784 = vmatpush1.msra.mxu0 0.0
    %1785 = vmatprep.subr.mxu0 0.0
    %1786 = vmatpush1.msra.mxu0 0.0
    %1787 = vmatprep.subr.mxu0 0.0
    %1788 = vmatpush1.msra.mxu0 0.0
    %1789 = vmatprep.subr.mxu0 0.0
    %1790 = vmatpush1.msra.mxu0 0.0
    %1791 = vmatprep.subr.mxu0 0.0
    %1792 = vmatpush1.msra.mxu0 0.0
    %1793 = vmatprep.subr.mxu0 0.0
    %1794 = vmatpush1.msra.mxu0 0.0
    %1795 = vmatprep.subr.mxu0 0.0
    %1796 = vmatpush1.msra.mxu0 0.0
    %1797 = vmatprep.subr.mxu0 0.0
    %1798 = vmatpush1.msra.mxu0 0.0
    %1799 = vmatprep.subr.mxu0 0.0
    %1800 = vmatpush1.msra.mxu0 0.0
    %1801 = vmatprep.subr.mxu0 0.0
    %1802 = vmatpush1.msra.mxu0 0.0
    %1803 = vmatprep.subr.mxu0 0.0
    %1804 = vmatpush1.msra.mxu0 0.0
    %1805 = vmatprep.subr.mxu0 0.0
    %1806 = vmatpush1.msra.mxu0 0.0
    %1807 = vmatprep.subr.mxu0 0.0
    %1808 = vmatpush1.msra.mxu0 0.0
    %1809 = vmatprep.subr.mxu0 0.0
    %1810 = vmatpush1.msra.mxu0 %v1774
    %1811 = vmatprep.subr.mxu0 0.0
    %1812 = vmatpush2.msra.mxu0 0.0
    %1813 = vmatprep.subr.mxu0 0.0
    %1814 = vmatpush2.msra.mxu0 0.0
    %1815 = vmatprep.subr.mxu0 0.0
    %1816 = vmatpush2.msra.mxu0 0.0
    %1817 = vmatprep.subr.mxu0 0.0
    %1818 = vmatpush2.msra.mxu0 0.0
    %1819 = vmatprep.subr.mxu0 0.0
    %1820 = vmatpush2.msra.mxu0 0.0
    %1821 = vmatprep.subr.mxu0 0.0
    %1822 = vmatpush2.msra.mxu0 0.0
    %1823 = vmatprep.subr.mxu0 0.0
    %1824 = vmatpush2.msra.mxu0 0.0
    %1825 = vmatprep.subr.mxu0 0.0
    %1826 = vmatpush2.msra.mxu0 0.0
    %1827 = vmatprep.subr.mxu0 0.0
    %1828 = vmatpush2.msra.mxu0 0.0
    %1829 = vmatprep.subr.mxu0 0.0
    %1830 = vmatpush2.msra.mxu0 0.0
    %1831 = vmatprep.subr.mxu0 0.0
    %1832 = vmatpush2.msra.mxu0 0.0
    %1833 = vmatprep.subr.mxu0 0.0
    %1834 = vmatpush2.msra.mxu0 0.0
    %1835 = vmatprep.subr.mxu0 0.0
    %1836 = vmatpush2.msra.mxu0 0.0
    %1837 = vmatprep.subr.mxu0 0.0
    %1838 = vmatpush2.msra.mxu0 0.0
    %1839 = vmatprep.subr.mxu0 0.0
    %1840 = vmatpush2.msra.mxu0 0.0
    %1841 = vmatprep.subr.mxu0 0.0
    %1842 = vmatpush2.msra.mxu0 0.0
    %1843 = vmatprep.mubr.f32.mxu0 0.0
    %1844 = vmatmul.mubr.f32.gmra.mxu0 %v1777
    %v1845 = vpop.f32.mrf.mxu0
    %v1846 = vadd.f32 0.0, %v1845
    %v1847 = vpop.f32.mrf.mxu0
    %1848 = vdwg.mxu0
    %1849 = vrot.lane.b32.xlu0 %v170, 96
    %v1850 = vpop.permute.xlu0 %1849
    %v1853 = vsel %vm1428, %v1592, 0
    %1855 = vmatprep.subr.mxu0 0.0
    %1856 = vmatpush1.msra.mxu0 0.0
    %1857 = vmatprep.subr.mxu0 0.0
    %1858 = vmatpush1.msra.mxu0 0.0
    %1859 = vmatprep.subr.mxu0 0.0
    %1860 = vmatpush1.msra.mxu0 0.0
    %1861 = vmatprep.subr.mxu0 0.0
    %1862 = vmatpush1.msra.mxu0 0.0
    %1863 = vmatprep.subr.mxu0 0.0
    %1864 = vmatpush1.msra.mxu0 0.0
    %1865 = vmatprep.subr.mxu0 0.0
    %1866 = vmatpush1.msra.mxu0 0.0
    %1867 = vmatprep.subr.mxu0 0.0
    %1868 = vmatpush1.msra.mxu0 0.0
    %1869 = vmatprep.subr.mxu0 0.0
    %1870 = vmatpush1.msra.mxu0 0.0
    %1871 = vmatprep.subr.mxu0 0.0
    %1872 = vmatpush1.msra.mxu0 0.0
    %1873 = vmatprep.subr.mxu0 0.0
    %1874 = vmatpush1.msra.mxu0 0.0
    %1875 = vmatprep.subr.mxu0 0.0
    %1876 = vmatpush1.msra.mxu0 0.0
    %1877 = vmatprep.subr.mxu0 0.0
    %1878 = vmatpush1.msra.mxu0 0.0
    %1879 = vmatprep.subr.mxu0 0.0
    %1880 = vmatpush1.msra.mxu0 0.0
    %1881 = vmatprep.subr.mxu0 0.0
    %1882 = vmatpush1.msra.mxu0 0.0
    %1883 = vmatprep.subr.mxu0 0.0
    %1884 = vmatpush1.msra.mxu0 0.0
    %1885 = vmatprep.subr.mxu0 0.0
    %1886 = vmatpush1.msra.mxu0 %v1850
    %1887 = vmatprep.subr.mxu0 0.0
    %1888 = vmatpush2.msra.mxu0 0.0
    %1889 = vmatprep.subr.mxu0 0.0
    %1890 = vmatpush2.msra.mxu0 0.0
    %1891 = vmatprep.subr.mxu0 0.0
    %1892 = vmatpush2.msra.mxu0 0.0
    %1893 = vmatprep.subr.mxu0 0.0
    %1894 = vmatpush2.msra.mxu0 0.0
    %1895 = vmatprep.subr.mxu0 0.0
    %1896 = vmatpush2.msra.mxu0 0.0
    %1897 = vmatprep.subr.mxu0 0.0
    %1898 = vmatpush2.msra.mxu0 0.0
    %1899 = vmatprep.subr.mxu0 0.0
    %1900 = vmatpush2.msra.mxu0 0.0
    %1901 = vmatprep.subr.mxu0 0.0
    %1902 = vmatpush2.msra.mxu0 0.0
    %1903 = vmatprep.subr.mxu0 0.0
    %1904 = vmatpush2.msra.mxu0 0.0
    %1905 = vmatprep.subr.mxu0 0.0
    %1906 = vmatpush2.msra.mxu0 0.0
    %1907 = vmatprep.subr.mxu0 0.0
    %1908 = vmatpush2.msra.mxu0 0.0
    %1909 = vmatprep.subr.mxu0 0.0
    %1910 = vmatpush2.msra.mxu0 0.0
    %1911 = vmatprep.subr.mxu0 0.0
    %1912 = vmatpush2.msra.mxu0 0.0
    %1913 = vmatprep.subr.mxu0 0.0
    %1914 = vmatpush2.msra.mxu0 0.0
    %1915 = vmatprep.subr.mxu0 0.0
    %1916 = vmatpush2.msra.mxu0 0.0
    %1917 = vmatprep.subr.mxu0 0.0
    %1918 = vmatpush2.msra.mxu0 0.0
    %1919 = vmatprep.mubr.f32.mxu0 0.0
    %1920 = vmatmul.mubr.f32.gmra.mxu0 %v1853
    %v1921 = vpop.f32.mrf.mxu0
    %v1922 = vadd.f32 0.0, %v1921
    %v1923 = vpop.f32.mrf.mxu0
    %1924 = vdwg.mxu0
    %1925 = vrot.lane.b32.xlu0 %v172, 96
    %v1926 = vpop.permute.xlu0 %1925
    %v1929 = vsel %vm1428, %v1593, 0
    %1931 = vmatprep.subr.mxu0 0.0
    %1932 = vmatpush1.msra.mxu0 0.0
    %1933 = vmatprep.subr.mxu0 0.0
    %1934 = vmatpush1.msra.mxu0 0.0
    %1935 = vmatprep.subr.mxu0 0.0
    %1936 = vmatpush1.msra.mxu0 0.0
    %1937 = vmatprep.subr.mxu0 0.0
    %1938 = vmatpush1.msra.mxu0 0.0
    %1939 = vmatprep.subr.mxu0 0.0
    %1940 = vmatpush1.msra.mxu0 0.0
    %1941 = vmatprep.subr.mxu0 0.0
    %1942 = vmatpush1.msra.mxu0 0.0
    %1943 = vmatprep.subr.mxu0 0.0
    %1944 = vmatpush1.msra.mxu0 0.0
    %1945 = vmatprep.subr.mxu0 0.0
    %1946 = vmatpush1.msra.mxu0 0.0
    %1947 = vmatprep.subr.mxu0 0.0
    %1948 = vmatpush1.msra.mxu0 0.0
    %1949 = vmatprep.subr.mxu0 0.0
    %1950 = vmatpush1.msra.mxu0 0.0
    %1951 = vmatprep.subr.mxu0 0.0
    %1952 = vmatpush1.msra.mxu0 0.0
    %1953 = vmatprep.subr.mxu0 0.0
    %1954 = vmatpush1.msra.mxu0 0.0
    %1955 = vmatprep.subr.mxu0 0.0
    %1956 = vmatpush1.msra.mxu0 0.0
    %1957 = vmatprep.subr.mxu0 0.0
    %1958 = vmatpush1.msra.mxu0 0.0
    %1959 = vmatprep.subr.mxu0 0.0
    %1960 = vmatpush1.msra.mxu0 0.0
    %1961 = vmatprep.subr.mxu0 0.0
    %1962 = vmatpush1.msra.mxu0 %v1926
    %1963 = vmatprep.subr.mxu0 0.0
    %1964 = vmatpush2.msra.mxu0 0.0
    %1965 = vmatprep.subr.mxu0 0.0
    %1966 = vmatpush2.msra.mxu0 0.0
    %1967 = vmatprep.subr.mxu0 0.0
    %1968 = vmatpush2.msra.mxu0 0.0
    %1969 = vmatprep.subr.mxu0 0.0
    %1970 = vmatpush2.msra.mxu0 0.0
    %1971 = vmatprep.subr.mxu0 0.0
    %1972 = vmatpush2.msra.mxu0 0.0
    %1973 = vmatprep.subr.mxu0 0.0
    %1974 = vmatpush2.msra.mxu0 0.0
    %1975 = vmatprep.subr.mxu0 0.0
    %1976 = vmatpush2.msra.mxu0 0.0
    %1977 = vmatprep.subr.mxu0 0.0
    %1978 = vmatpush2.msra.mxu0 0.0
    %1979 = vmatprep.subr.mxu0 0.0
    %1980 = vmatpush2.msra.mxu0 0.0
    %1981 = vmatprep.subr.mxu0 0.0
    %1982 = vmatpush2.msra.mxu0 0.0
    %1983 = vmatprep.subr.mxu0 0.0
    %1984 = vmatpush2.msra.mxu0 0.0
    %1985 = vmatprep.subr.mxu0 0.0
    %1986 = vmatpush2.msra.mxu0 0.0
    %1987 = vmatprep.subr.mxu0 0.0
    %1988 = vmatpush2.msra.mxu0 0.0
    %1989 = vmatprep.subr.mxu0 0.0
    %1990 = vmatpush2.msra.mxu0 0.0
    %1991 = vmatprep.subr.mxu0 0.0
    %1992 = vmatpush2.msra.mxu0 0.0
    %1993 = vmatprep.subr.mxu0 0.0
    %1994 = vmatpush2.msra.mxu0 0.0
    %1995 = vmatprep.mubr.f32.mxu0 0.0
    %1996 = vmatmul.mubr.f32.gmra.mxu0 %v1929
    %v1997 = vpop.f32.mrf.mxu0
    %v1998 = vadd.f32 0.0, %v1997
    %v1999 = vpop.f32.mrf.mxu0
    %2000 = vdwg.mxu0
    %2001 = vrot.lane.b32.xlu0 %v174, 96
    %v2002 = vpop.permute.xlu0 %2001
    %v2005 = vsel %vm1428, %v1594, 0
    %2007 = vmatprep.subr.mxu0 0.0
    %2008 = vmatpush1.msra.mxu0 0.0
    %2009 = vmatprep.subr.mxu0 0.0
    %2010 = vmatpush1.msra.mxu0 0.0
    %2011 = vmatprep.subr.mxu0 0.0
    %2012 = vmatpush1.msra.mxu0 0.0
    %2013 = vmatprep.subr.mxu0 0.0
    %2014 = vmatpush1.msra.mxu0 0.0
    %2015 = vmatprep.subr.mxu0 0.0
    %2016 = vmatpush1.msra.mxu0 0.0
    %2017 = vmatprep.subr.mxu0 0.0
    %2018 = vmatpush1.msra.mxu0 0.0
    %2019 = vmatprep.subr.mxu0 0.0
    %2020 = vmatpush1.msra.mxu0 0.0
    %2021 = vmatprep.subr.mxu0 0.0
    %2022 = vmatpush1.msra.mxu0 0.0
    %2023 = vmatprep.subr.mxu0 0.0
    %2024 = vmatpush1.msra.mxu0 0.0
    %2025 = vmatprep.subr.mxu0 0.0
    %2026 = vmatpush1.msra.mxu0 0.0
    %2027 = vmatprep.subr.mxu0 0.0
    %2028 = vmatpush1.msra.mxu0 0.0
    %2029 = vmatprep.subr.mxu0 0.0
    %2030 = vmatpush1.msra.mxu0 0.0
    %2031 = vmatprep.subr.mxu0 0.0
    %2032 = vmatpush1.msra.mxu0 0.0
    %2033 = vmatprep.subr.mxu0 0.0
    %2034 = vmatpush1.msra.mxu0 0.0
    %2035 = vmatprep.subr.mxu0 0.0
    %2036 = vmatpush1.msra.mxu0 0.0
    %2037 = vmatprep.subr.mxu0 0.0
    %2038 = vmatpush1.msra.mxu0 %v2002
    %2039 = vmatprep.subr.mxu0 0.0
    %2040 = vmatpush2.msra.mxu0 0.0
    %2041 = vmatprep.subr.mxu0 0.0
    %2042 = vmatpush2.msra.mxu0 0.0
    %2043 = vmatprep.subr.mxu0 0.0
    %2044 = vmatpush2.msra.mxu0 0.0
    %2045 = vmatprep.subr.mxu0 0.0
    %2046 = vmatpush2.msra.mxu0 0.0
    %2047 = vmatprep.subr.mxu0 0.0
    %2048 = vmatpush2.msra.mxu0 0.0
    %2049 = vmatprep.subr.mxu0 0.0
    %2050 = vmatpush2.msra.mxu0 0.0
    %2051 = vmatprep.subr.mxu0 0.0
    %2052 = vmatpush2.msra.mxu0 0.0
    %2053 = vmatprep.subr.mxu0 0.0
    %2054 = vmatpush2.msra.mxu0 0.0
    %2055 = vmatprep.subr.mxu0 0.0
    %2056 = vmatpush2.msra.mxu0 0.0
    %2057 = vmatprep.subr.mxu0 0.0
    %2058 = vmatpush2.msra.mxu0 0.0
    %2059 = vmatprep.subr.mxu0 0.0
    %2060 = vmatpush2.msra.mxu0 0.0
    %2061 = vmatprep.subr.mxu0 0.0
    %2062 = vmatpush2.msra.mxu0 0.0
    %2063 = vmatprep.subr.mxu0 0.0
    %2064 = vmatpush2.msra.mxu0 0.0
    %2065 = vmatprep.subr.mxu0 0.0
    %2066 = vmatpush2.msra.mxu0 0.0
    %2067 = vmatprep.subr.mxu0 0.0
    %2068 = vmatpush2.msra.mxu0 0.0
    %2069 = vmatprep.subr.mxu0 0.0
    %2070 = vmatpush2.msra.mxu0 0.0
    %2071 = vmatprep.mubr.f32.mxu0 0.0
    %2072 = vmatmul.mubr.f32.gmra.mxu0 %v2005
    %v2073 = vpop.f32.mrf.mxu0
    %v2074 = vadd.f32 0.0, %v2073
    %v2075 = vpop.f32.mrf.mxu0
    %2076 = vdwg.mxu0
    %2077 = vrot.lane.b32.xlu0 %v176, 96
    %v2078 = vpop.permute.xlu0 %2077
    %v2081 = vsel %vm1428, %v1595, 0
    %2083 = vmatprep.subr.mxu0 0.0
    %2084 = vmatpush1.msra.mxu0 0.0
    %2085 = vmatprep.subr.mxu0 0.0
    %2086 = vmatpush1.msra.mxu0 0.0
    %2087 = vmatprep.subr.mxu0 0.0
    %2088 = vmatpush1.msra.mxu0 0.0
    %2089 = vmatprep.subr.mxu0 0.0
    %2090 = vmatpush1.msra.mxu0 0.0
    %2091 = vmatprep.subr.mxu0 0.0
    %2092 = vmatpush1.msra.mxu0 0.0
    %2093 = vmatprep.subr.mxu0 0.0
    %2094 = vmatpush1.msra.mxu0 0.0
    %2095 = vmatprep.subr.mxu0 0.0
    %2096 = vmatpush1.msra.mxu0 0.0
    %2097 = vmatprep.subr.mxu0 0.0
    %2098 = vmatpush1.msra.mxu0 0.0
    %2099 = vmatprep.subr.mxu0 0.0
    %2100 = vmatpush1.msra.mxu0 0.0
    %2101 = vmatprep.subr.mxu0 0.0
    %2102 = vmatpush1.msra.mxu0 0.0
    %2103 = vmatprep.subr.mxu0 0.0
    %2104 = vmatpush1.msra.mxu0 0.0
    %2105 = vmatprep.subr.mxu0 0.0
    %2106 = vmatpush1.msra.mxu0 0.0
    %2107 = vmatprep.subr.mxu0 0.0
    %2108 = vmatpush1.msra.mxu0 0.0
    %2109 = vmatprep.subr.mxu0 0.0
    %2110 = vmatpush1.msra.mxu0 0.0
    %2111 = vmatprep.subr.mxu0 0.0
    %2112 = vmatpush1.msra.mxu0 0.0
    %2113 = vmatprep.subr.mxu0 0.0
    %2114 = vmatpush1.msra.mxu0 %v2078
    %2115 = vmatprep.subr.mxu0 0.0
    %2116 = vmatpush2.msra.mxu0 0.0
    %2117 = vmatprep.subr.mxu0 0.0
    %2118 = vmatpush2.msra.mxu0 0.0
    %2119 = vmatprep.subr.mxu0 0.0
    %2120 = vmatpush2.msra.mxu0 0.0
    %2121 = vmatprep.subr.mxu0 0.0
    %2122 = vmatpush2.msra.mxu0 0.0
    %2123 = vmatprep.subr.mxu0 0.0
    %2124 = vmatpush2.msra.mxu0 0.0
    %2125 = vmatprep.subr.mxu0 0.0
    %2126 = vmatpush2.msra.mxu0 0.0
    %2127 = vmatprep.subr.mxu0 0.0
    %2128 = vmatpush2.msra.mxu0 0.0
    %2129 = vmatprep.subr.mxu0 0.0
    %2130 = vmatpush2.msra.mxu0 0.0
    %2131 = vmatprep.subr.mxu0 0.0
    %2132 = vmatpush2.msra.mxu0 0.0
    %2133 = vmatprep.subr.mxu0 0.0
    %2134 = vmatpush2.msra.mxu0 0.0
    %2135 = vmatprep.subr.mxu0 0.0
    %2136 = vmatpush2.msra.mxu0 0.0
    %2137 = vmatprep.subr.mxu0 0.0
    %2138 = vmatpush2.msra.mxu0 0.0
    %2139 = vmatprep.subr.mxu0 0.0
    %2140 = vmatpush2.msra.mxu0 0.0
    %2141 = vmatprep.subr.mxu0 0.0
    %2142 = vmatpush2.msra.mxu0 0.0
    %2143 = vmatprep.subr.mxu0 0.0
    %2144 = vmatpush2.msra.mxu0 0.0
    %2145 = vmatprep.subr.mxu0 0.0
    %2146 = vmatpush2.msra.mxu0 0.0
    %2147 = vmatprep.mubr.f32.mxu0 0.0
    %2148 = vmatmul.mubr.f32.gmra.mxu0 %v2081
    %v2149 = vpop.f32.mrf.mxu0
    %v2150 = vadd.f32 0.0, %v2149
    %v2151 = vpop.f32.mrf.mxu0
    %2152 = vdwg.mxu0
    %2153 = vrot.lane.b32.xlu0 %v178, 96
    %v2154 = vpop.permute.xlu0 %2153
    %v2157 = vsel %vm1428, %v1596, 0
    %2159 = vmatprep.subr.mxu0 0.0
    %2160 = vmatpush1.msra.mxu0 0.0
    %2161 = vmatprep.subr.mxu0 0.0
    %2162 = vmatpush1.msra.mxu0 0.0
    %2163 = vmatprep.subr.mxu0 0.0
    %2164 = vmatpush1.msra.mxu0 0.0
    %2165 = vmatprep.subr.mxu0 0.0
    %2166 = vmatpush1.msra.mxu0 0.0
    %2167 = vmatprep.subr.mxu0 0.0
    %2168 = vmatpush1.msra.mxu0 0.0
    %2169 = vmatprep.subr.mxu0 0.0
    %2170 = vmatpush1.msra.mxu0 0.0
    %2171 = vmatprep.subr.mxu0 0.0
    %2172 = vmatpush1.msra.mxu0 0.0
    %2173 = vmatprep.subr.mxu0 0.0
    %2174 = vmatpush1.msra.mxu0 0.0
    %2175 = vmatprep.subr.mxu0 0.0
    %2176 = vmatpush1.msra.mxu0 0.0
    %2177 = vmatprep.subr.mxu0 0.0
    %2178 = vmatpush1.msra.mxu0 0.0
    %2179 = vmatprep.subr.mxu0 0.0
    %2180 = vmatpush1.msra.mxu0 0.0
    %2181 = vmatprep.subr.mxu0 0.0
    %2182 = vmatpush1.msra.mxu0 0.0
    %2183 = vmatprep.subr.mxu0 0.0
    %2184 = vmatpush1.msra.mxu0 0.0
    %2185 = vmatprep.subr.mxu0 0.0
    %2186 = vmatpush1.msra.mxu0 0.0
    %2187 = vmatprep.subr.mxu0 0.0
    %2188 = vmatpush1.msra.mxu0 0.0
    %2189 = vmatprep.subr.mxu0 0.0
    %2190 = vmatpush1.msra.mxu0 %v2154
    %2191 = vmatprep.subr.mxu0 0.0
    %2192 = vmatpush2.msra.mxu0 0.0
    %2193 = vmatprep.subr.mxu0 0.0
    %2194 = vmatpush2.msra.mxu0 0.0
    %2195 = vmatprep.subr.mxu0 0.0
    %2196 = vmatpush2.msra.mxu0 0.0
    %2197 = vmatprep.subr.mxu0 0.0
    %2198 = vmatpush2.msra.mxu0 0.0
    %2199 = vmatprep.subr.mxu0 0.0
    %2200 = vmatpush2.msra.mxu0 0.0
    %2201 = vmatprep.subr.mxu0 0.0
    %2202 = vmatpush2.msra.mxu0 0.0
    %2203 = vmatprep.subr.mxu0 0.0
    %2204 = vmatpush2.msra.mxu0 0.0
    %2205 = vmatprep.subr.mxu0 0.0
    %2206 = vmatpush2.msra.mxu0 0.0
    %2207 = vmatprep.subr.mxu0 0.0
    %2208 = vmatpush2.msra.mxu0 0.0
    %2209 = vmatprep.subr.mxu0 0.0
    %2210 = vmatpush2.msra.mxu0 0.0
    %2211 = vmatprep.subr.mxu0 0.0
    %2212 = vmatpush2.msra.mxu0 0.0
    %2213 = vmatprep.subr.mxu0 0.0
    %2214 = vmatpush2.msra.mxu0 0.0
    %2215 = vmatprep.subr.mxu0 0.0
    %2216 = vmatpush2.msra.mxu0 0.0
    %2217 = vmatprep.subr.mxu0 0.0
    %2218 = vmatpush2.msra.mxu0 0.0
    %2219 = vmatprep.subr.mxu0 0.0
    %2220 = vmatpush2.msra.mxu0 0.0
    %2221 = vmatprep.subr.mxu0 0.0
    %2222 = vmatpush2.msra.mxu0 0.0
    %2223 = vmatprep.mubr.f32.mxu0 0.0
    %2224 = vmatmul.mubr.f32.gmra.mxu0 %v2157
    %v2225 = vpop.f32.mrf.mxu0
    %v2226 = vadd.f32 0.0, %v2225
    %v2227 = vpop.f32.mrf.mxu0
    %2228 = vdwg.mxu0
    %2229 = vrot.lane.b32.xlu0 %v180, 96
    %v2230 = vpop.permute.xlu0 %2229
    %v2233 = vsel %vm1428, %v1597, 0
    %2235 = vmatprep.subr.mxu0 0.0
    %2236 = vmatpush1.msra.mxu0 0.0
    %2237 = vmatprep.subr.mxu0 0.0
    %2238 = vmatpush1.msra.mxu0 0.0
    %2239 = vmatprep.subr.mxu0 0.0
    %2240 = vmatpush1.msra.mxu0 0.0
    %2241 = vmatprep.subr.mxu0 0.0
    %2242 = vmatpush1.msra.mxu0 0.0
    %2243 = vmatprep.subr.mxu0 0.0
    %2244 = vmatpush1.msra.mxu0 0.0
    %2245 = vmatprep.subr.mxu0 0.0
    %2246 = vmatpush1.msra.mxu0 0.0
    %2247 = vmatprep.subr.mxu0 0.0
    %2248 = vmatpush1.msra.mxu0 0.0
    %2249 = vmatprep.subr.mxu0 0.0
    %2250 = vmatpush1.msra.mxu0 0.0
    %2251 = vmatprep.subr.mxu0 0.0
    %2252 = vmatpush1.msra.mxu0 0.0
    %2253 = vmatprep.subr.mxu0 0.0
    %2254 = vmatpush1.msra.mxu0 0.0
    %2255 = vmatprep.subr.mxu0 0.0
    %2256 = vmatpush1.msra.mxu0 0.0
    %2257 = vmatprep.subr.mxu0 0.0
    %2258 = vmatpush1.msra.mxu0 0.0
    %2259 = vmatprep.subr.mxu0 0.0
    %2260 = vmatpush1.msra.mxu0 0.0
    %2261 = vmatprep.subr.mxu0 0.0
    %2262 = vmatpush1.msra.mxu0 0.0
    %2263 = vmatprep.subr.mxu0 0.0
    %2264 = vmatpush1.msra.mxu0 0.0
    %2265 = vmatprep.subr.mxu0 0.0
    %2266 = vmatpush1.msra.mxu0 %v2230
    %2267 = vmatprep.subr.mxu0 0.0
    %2268 = vmatpush2.msra.mxu0 0.0
    %2269 = vmatprep.subr.mxu0 0.0
    %2270 = vmatpush2.msra.mxu0 0.0
    %2271 = vmatprep.subr.mxu0 0.0
    %2272 = vmatpush2.msra.mxu0 0.0
    %2273 = vmatprep.subr.mxu0 0.0
    %2274 = vmatpush2.msra.mxu0 0.0
    %2275 = vmatprep.subr.mxu0 0.0
    %2276 = vmatpush2.msra.mxu0 0.0
    %2277 = vmatprep.subr.mxu0 0.0
    %2278 = vmatpush2.msra.mxu0 0.0
    %2279 = vmatprep.subr.mxu0 0.0
    %2280 = vmatpush2.msra.mxu0 0.0
    %2281 = vmatprep.subr.mxu0 0.0
    %2282 = vmatpush2.msra.mxu0 0.0
    %2283 = vmatprep.subr.mxu0 0.0
    %2284 = vmatpush2.msra.mxu0 0.0
    %2285 = vmatprep.subr.mxu0 0.0
    %2286 = vmatpush2.msra.mxu0 0.0
    %2287 = vmatprep.subr.mxu0 0.0
    %2288 = vmatpush2.msra.mxu0 0.0
    %2289 = vmatprep.subr.mxu0 0.0
    %2290 = vmatpush2.msra.mxu0 0.0
    %2291 = vmatprep.subr.mxu0 0.0
    %2292 = vmatpush2.msra.mxu0 0.0
    %2293 = vmatprep.subr.mxu0 0.0
    %2294 = vmatpush2.msra.mxu0 0.0
    %2295 = vmatprep.subr.mxu0 0.0
    %2296 = vmatpush2.msra.mxu0 0.0
    %2297 = vmatprep.subr.mxu0 0.0
    %2298 = vmatpush2.msra.mxu0 0.0
    %2299 = vmatprep.mubr.f32.mxu0 0.0
    %2300 = vmatmul.mubr.f32.gmra.mxu0 %v2233
    %v2301 = vpop.f32.mrf.mxu0
    %v2302 = vadd.f32 0.0, %v2301
    %v2303 = vpop.f32.mrf.mxu0
    %2304 = vdwg.mxu0
    %2305 = vrot.lane.b32.xlu0 %v182, 96
    %v2306 = vpop.permute.xlu0 %2305
    %v2309 = vsel %vm1428, %v1598, 0
    %2311 = vmatprep.subr.mxu0 0.0
    %2312 = vmatpush1.msra.mxu0 0.0
    %2313 = vmatprep.subr.mxu0 0.0
    %2314 = vmatpush1.msra.mxu0 0.0
    %2315 = vmatprep.subr.mxu0 0.0
    %2316 = vmatpush1.msra.mxu0 0.0
    %2317 = vmatprep.subr.mxu0 0.0
    %2318 = vmatpush1.msra.mxu0 0.0
    %2319 = vmatprep.subr.mxu0 0.0
    %2320 = vmatpush1.msra.mxu0 0.0
    %2321 = vmatprep.subr.mxu0 0.0
    %2322 = vmatpush1.msra.mxu0 0.0
    %2323 = vmatprep.subr.mxu0 0.0
    %2324 = vmatpush1.msra.mxu0 0.0
    %2325 = vmatprep.subr.mxu0 0.0
    %2326 = vmatpush1.msra.mxu0 0.0
    %2327 = vmatprep.subr.mxu0 0.0
    %2328 = vmatpush1.msra.mxu0 0.0
    %2329 = vmatprep.subr.mxu0 0.0
    %2330 = vmatpush1.msra.mxu0 0.0
    %2331 = vmatprep.subr.mxu0 0.0
    %2332 = vmatpush1.msra.mxu0 0.0
    %2333 = vmatprep.subr.mxu0 0.0
    %2334 = vmatpush1.msra.mxu0 0.0
    %2335 = vmatprep.subr.mxu0 0.0
    %2336 = vmatpush1.msra.mxu0 0.0
    %2337 = vmatprep.subr.mxu0 0.0
    %2338 = vmatpush1.msra.mxu0 0.0
    %2339 = vmatprep.subr.mxu0 0.0
    %2340 = vmatpush1.msra.mxu0 0.0
    %2341 = vmatprep.subr.mxu0 0.0
    %2342 = vmatpush1.msra.mxu0 %v2306
    %2343 = vmatprep.subr.mxu0 0.0
    %2344 = vmatpush2.msra.mxu0 0.0
    %2345 = vmatprep.subr.mxu0 0.0
    %2346 = vmatpush2.msra.mxu0 0.0
    %2347 = vmatprep.subr.mxu0 0.0
    %2348 = vmatpush2.msra.mxu0 0.0
    %2349 = vmatprep.subr.mxu0 0.0
    %2350 = vmatpush2.msra.mxu0 0.0
    %2351 = vmatprep.subr.mxu0 0.0
    %2352 = vmatpush2.msra.mxu0 0.0
    %2353 = vmatprep.subr.mxu0 0.0
    %2354 = vmatpush2.msra.mxu0 0.0
    %2355 = vmatprep.subr.mxu0 0.0
    %2356 = vmatpush2.msra.mxu0 0.0
    %2357 = vmatprep.subr.mxu0 0.0
    %2358 = vmatpush2.msra.mxu0 0.0
    %2359 = vmatprep.subr.mxu0 0.0
    %2360 = vmatpush2.msra.mxu0 0.0
    %2361 = vmatprep.subr.mxu0 0.0
    %2362 = vmatpush2.msra.mxu0 0.0
    %2363 = vmatprep.subr.mxu0 0.0
    %2364 = vmatpush2.msra.mxu0 0.0
    %2365 = vmatprep.subr.mxu0 0.0
    %2366 = vmatpush2.msra.mxu0 0.0
    %2367 = vmatprep.subr.mxu0 0.0
    %2368 = vmatpush2.msra.mxu0 0.0
    %2369 = vmatprep.subr.mxu0 0.0
    %2370 = vmatpush2.msra.mxu0 0.0
    %2371 = vmatprep.subr.mxu0 0.0
    %2372 = vmatpush2.msra.mxu0 0.0
    %2373 = vmatprep.subr.mxu0 0.0
    %2374 = vmatpush2.msra.mxu0 0.0
    %2375 = vmatprep.mubr.f32.mxu0 0.0
    %2376 = vmatmul.mubr.f32.gmra.mxu0 %v2309
    %v2377 = vpop.f32.mrf.mxu0
    %v2378 = vadd.f32 0.0, %v2377
    %v2379 = vpop.f32.mrf.mxu0
    %2380 = vdwg.mxu0
    %2381 = vrot.lane.b32.xlu0 %v184, 96
    %v2382 = vpop.permute.xlu0 %2381
    %v2385 = vsel %vm1428, %v1599, 0
    %2387 = vmatprep.subr.mxu0 0.0
    %2388 = vmatpush1.msra.mxu0 0.0
    %2389 = vmatprep.subr.mxu0 0.0
    %2390 = vmatpush1.msra.mxu0 0.0
    %2391 = vmatprep.subr.mxu0 0.0
    %2392 = vmatpush1.msra.mxu0 0.0
    %2393 = vmatprep.subr.mxu0 0.0
    %2394 = vmatpush1.msra.mxu0 0.0
    %2395 = vmatprep.subr.mxu0 0.0
    %2396 = vmatpush1.msra.mxu0 0.0
    %2397 = vmatprep.subr.mxu0 0.0
    %2398 = vmatpush1.msra.mxu0 0.0
    %2399 = vmatprep.subr.mxu0 0.0
    %2400 = vmatpush1.msra.mxu0 0.0
    %2401 = vmatprep.subr.mxu0 0.0
    %2402 = vmatpush1.msra.mxu0 0.0
    %2403 = vmatprep.subr.mxu0 0.0
    %2404 = vmatpush1.msra.mxu0 0.0
    %2405 = vmatprep.subr.mxu0 0.0
    %2406 = vmatpush1.msra.mxu0 0.0
    %2407 = vmatprep.subr.mxu0 0.0
    %2408 = vmatpush1.msra.mxu0 0.0
    %2409 = vmatprep.subr.mxu0 0.0
    %2410 = vmatpush1.msra.mxu0 0.0
    %2411 = vmatprep.subr.mxu0 0.0
    %2412 = vmatpush1.msra.mxu0 0.0
    %2413 = vmatprep.subr.mxu0 0.0
    %2414 = vmatpush1.msra.mxu0 0.0
    %2415 = vmatprep.subr.mxu0 0.0
    %2416 = vmatpush1.msra.mxu0 0.0
    %2417 = vmatprep.subr.mxu0 0.0
    %2418 = vmatpush1.msra.mxu0 %v2382
    %2419 = vmatprep.subr.mxu0 0.0
    %2420 = vmatpush2.msra.mxu0 0.0
    %2421 = vmatprep.subr.mxu0 0.0
    %2422 = vmatpush2.msra.mxu0 0.0
    %2423 = vmatprep.subr.mxu0 0.0
    %2424 = vmatpush2.msra.mxu0 0.0
    %2425 = vmatprep.subr.mxu0 0.0
    %2426 = vmatpush2.msra.mxu0 0.0
    %2427 = vmatprep.subr.mxu0 0.0
    %2428 = vmatpush2.msra.mxu0 0.0
    %2429 = vmatprep.subr.mxu0 0.0
    %2430 = vmatpush2.msra.mxu0 0.0
    %2431 = vmatprep.subr.mxu0 0.0
    %2432 = vmatpush2.msra.mxu0 0.0
    %2433 = vmatprep.subr.mxu0 0.0
    %2434 = vmatpush2.msra.mxu0 0.0
    %2435 = vmatprep.subr.mxu0 0.0
    %2436 = vmatpush2.msra.mxu0 0.0
    %2437 = vmatprep.subr.mxu0 0.0
    %2438 = vmatpush2.msra.mxu0 0.0
    %2439 = vmatprep.subr.mxu0 0.0
    %2440 = vmatpush2.msra.mxu0 0.0
    %2441 = vmatprep.subr.mxu0 0.0
    %2442 = vmatpush2.msra.mxu0 0.0
    %2443 = vmatprep.subr.mxu0 0.0
    %2444 = vmatpush2.msra.mxu0 0.0
    %2445 = vmatprep.subr.mxu0 0.0
    %2446 = vmatpush2.msra.mxu0 0.0
    %2447 = vmatprep.subr.mxu0 0.0
    %2448 = vmatpush2.msra.mxu0 0.0
    %2449 = vmatprep.subr.mxu0 0.0
    %2450 = vmatpush2.msra.mxu0 0.0
    %2451 = vmatprep.mubr.f32.mxu0 0.0
    %2452 = vmatmul.mubr.f32.gmra.mxu0 %v2385
    %v2453 = vpop.f32.mrf.mxu0
    %v2454 = vadd.f32 0.0, %v2453
    %v2455 = vpop.f32.mrf.mxu0
    %2456 = vdwg.mxu0
    %2457 = vrot.lane.b32.xlu0 %v186, 96
    %v2458 = vpop.permute.xlu0 %2457
    %v2461 = vsel %vm1428, %v1600, 0
    %2463 = vmatprep.subr.mxu0 0.0
    %2464 = vmatpush1.msra.mxu0 0.0
    %2465 = vmatprep.subr.mxu0 0.0
    %2466 = vmatpush1.msra.mxu0 0.0
    %2467 = vmatprep.subr.mxu0 0.0
    %2468 = vmatpush1.msra.mxu0 0.0
    %2469 = vmatprep.subr.mxu0 0.0
    %2470 = vmatpush1.msra.mxu0 0.0
    %2471 = vmatprep.subr.mxu0 0.0
    %2472 = vmatpush1.msra.mxu0 0.0
    %2473 = vmatprep.subr.mxu0 0.0
    %2474 = vmatpush1.msra.mxu0 0.0
    %2475 = vmatprep.subr.mxu0 0.0
    %2476 = vmatpush1.msra.mxu0 0.0
    %2477 = vmatprep.subr.mxu0 0.0
    %2478 = vmatpush1.msra.mxu0 0.0
    %2479 = vmatprep.subr.mxu0 0.0
    %2480 = vmatpush1.msra.mxu0 0.0
    %2481 = vmatprep.subr.mxu0 0.0
    %2482 = vmatpush1.msra.mxu0 0.0
    %2483 = vmatprep.subr.mxu0 0.0
    %2484 = vmatpush1.msra.mxu0 0.0
    %2485 = vmatprep.subr.mxu0 0.0
    %2486 = vmatpush1.msra.mxu0 0.0
    %2487 = vmatprep.subr.mxu0 0.0
    %2488 = vmatpush1.msra.mxu0 0.0
    %2489 = vmatprep.subr.mxu0 0.0
    %2490 = vmatpush1.msra.mxu0 0.0
    %2491 = vmatprep.subr.mxu0 0.0
    %2492 = vmatpush1.msra.mxu0 0.0
    %2493 = vmatprep.subr.mxu0 0.0
    %2494 = vmatpush1.msra.mxu0 %v2458
    %2495 = vmatprep.subr.mxu0 0.0
    %2496 = vmatpush2.msra.mxu0 0.0
    %2497 = vmatprep.subr.mxu0 0.0
    %2498 = vmatpush2.msra.mxu0 0.0
    %2499 = vmatprep.subr.mxu0 0.0
    %2500 = vmatpush2.msra.mxu0 0.0
    %2501 = vmatprep.subr.mxu0 0.0
    %2502 = vmatpush2.msra.mxu0 0.0
    %2503 = vmatprep.subr.mxu0 0.0
    %2504 = vmatpush2.msra.mxu0 0.0
    %2505 = vmatprep.subr.mxu0 0.0
    %2506 = vmatpush2.msra.mxu0 0.0
    %2507 = vmatprep.subr.mxu0 0.0
    %2508 = vmatpush2.msra.mxu0 0.0
    %2509 = vmatprep.subr.mxu0 0.0
    %2510 = vmatpush2.msra.mxu0 0.0
    %2511 = vmatprep.subr.mxu0 0.0
    %2512 = vmatpush2.msra.mxu0 0.0
    %2513 = vmatprep.subr.mxu0 0.0
    %2514 = vmatpush2.msra.mxu0 0.0
    %2515 = vmatprep.subr.mxu0 0.0
    %2516 = vmatpush2.msra.mxu0 0.0
    %2517 = vmatprep.subr.mxu0 0.0
    %2518 = vmatpush2.msra.mxu0 0.0
    %2519 = vmatprep.subr.mxu0 0.0
    %2520 = vmatpush2.msra.mxu0 0.0
    %2521 = vmatprep.subr.mxu0 0.0
    %2522 = vmatpush2.msra.mxu0 0.0
    %2523 = vmatprep.subr.mxu0 0.0
    %2524 = vmatpush2.msra.mxu0 0.0
    %2525 = vmatprep.subr.mxu0 0.0
    %2526 = vmatpush2.msra.mxu0 0.0
    %2527 = vmatprep.mubr.f32.mxu0 0.0
    %2528 = vmatmul.mubr.f32.gmra.mxu0 %v2461
    %v2529 = vpop.f32.mrf.mxu0
    %v2530 = vadd.f32 0.0, %v2529
    %v2531 = vpop.f32.mrf.mxu0
    %2532 = vdwg.mxu0
    %2533 = vrot.lane.b32.xlu0 %v188, 96
    %v2534 = vpop.permute.xlu0 %2533
    %v2537 = vsel %vm1428, %v1601, 0
    %2539 = vmatprep.subr.mxu0 0.0
    %2540 = vmatpush1.msra.mxu0 0.0
    %2541 = vmatprep.subr.mxu0 0.0
    %2542 = vmatpush1.msra.mxu0 0.0
    %2543 = vmatprep.subr.mxu0 0.0
    %2544 = vmatpush1.msra.mxu0 0.0
    %2545 = vmatprep.subr.mxu0 0.0
    %2546 = vmatpush1.msra.mxu0 0.0
    %2547 = vmatprep.subr.mxu0 0.0
    %2548 = vmatpush1.msra.mxu0 0.0
    %2549 = vmatprep.subr.mxu0 0.0
    %2550 = vmatpush1.msra.mxu0 0.0
    %2551 = vmatprep.subr.mxu0 0.0
    %2552 = vmatpush1.msra.mxu0 0.0
    %2553 = vmatprep.subr.mxu0 0.0
    %2554 = vmatpush1.msra.mxu0 0.0
    %2555 = vmatprep.subr.mxu0 0.0
    %2556 = vmatpush1.msra.mxu0 0.0
    %2557 = vmatprep.subr.mxu0 0.0
    %2558 = vmatpush1.msra.mxu0 0.0
    %2559 = vmatprep.subr.mxu0 0.0
    %2560 = vmatpush1.msra.mxu0 0.0
    %2561 = vmatprep.subr.mxu0 0.0
    %2562 = vmatpush1.msra.mxu0 0.0
    %2563 = vmatprep.subr.mxu0 0.0
    %2564 = vmatpush1.msra.mxu0 0.0
    %2565 = vmatprep.subr.mxu0 0.0
    %2566 = vmatpush1.msra.mxu0 0.0
    %2567 = vmatprep.subr.mxu0 0.0
    %2568 = vmatpush1.msra.mxu0 0.0
    %2569 = vmatprep.subr.mxu0 0.0
    %2570 = vmatpush1.msra.mxu0 %v2534
    %2571 = vmatprep.subr.mxu0 0.0
    %2572 = vmatpush2.msra.mxu0 0.0
    %2573 = vmatprep.subr.mxu0 0.0
    %2574 = vmatpush2.msra.mxu0 0.0
    %2575 = vmatprep.subr.mxu0 0.0
    %2576 = vmatpush2.msra.mxu0 0.0
    %2577 = vmatprep.subr.mxu0 0.0
    %2578 = vmatpush2.msra.mxu0 0.0
    %2579 = vmatprep.subr.mxu0 0.0
    %2580 = vmatpush2.msra.mxu0 0.0
    %2581 = vmatprep.subr.mxu0 0.0
    %2582 = vmatpush2.msra.mxu0 0.0
    %2583 = vmatprep.subr.mxu0 0.0
    %2584 = vmatpush2.msra.mxu0 0.0
    %2585 = vmatprep.subr.mxu0 0.0
    %2586 = vmatpush2.msra.mxu0 0.0
    %2587 = vmatprep.subr.mxu0 0.0
    %2588 = vmatpush2.msra.mxu0 0.0
    %2589 = vmatprep.subr.mxu0 0.0
    %2590 = vmatpush2.msra.mxu0 0.0
    %2591 = vmatprep.subr.mxu0 0.0
    %2592 = vmatpush2.msra.mxu0 0.0
    %2593 = vmatprep.subr.mxu0 0.0
    %2594 = vmatpush2.msra.mxu0 0.0
    %2595 = vmatprep.subr.mxu0 0.0
    %2596 = vmatpush2.msra.mxu0 0.0
    %2597 = vmatprep.subr.mxu0 0.0
    %2598 = vmatpush2.msra.mxu0 0.0
    %2599 = vmatprep.subr.mxu0 0.0
    %2600 = vmatpush2.msra.mxu0 0.0
    %2601 = vmatprep.subr.mxu0 0.0
    %2602 = vmatpush2.msra.mxu0 0.0
    %2603 = vmatprep.mubr.f32.mxu0 0.0
    %2604 = vmatmul.mubr.f32.gmra.mxu0 %v2537
    %v2605 = vpop.f32.mrf.mxu0
    %v2606 = vadd.f32 0.0, %v2605
    %v2607 = vpop.f32.mrf.mxu0
    %2608 = vdwg.mxu0
    %2609 = vrot.lane.b32.xlu0 %v190, 96
    %v2610 = vpop.permute.xlu0 %2609
    %v2613 = vsel %vm1428, %v1602, 0
    %2615 = vmatprep.subr.mxu0 0.0
    %2616 = vmatpush1.msra.mxu0 0.0
    %2617 = vmatprep.subr.mxu0 0.0
    %2618 = vmatpush1.msra.mxu0 0.0
    %2619 = vmatprep.subr.mxu0 0.0
    %2620 = vmatpush1.msra.mxu0 0.0
    %2621 = vmatprep.subr.mxu0 0.0
    %2622 = vmatpush1.msra.mxu0 0.0
    %2623 = vmatprep.subr.mxu0 0.0
    %2624 = vmatpush1.msra.mxu0 0.0
    %2625 = vmatprep.subr.mxu0 0.0
    %2626 = vmatpush1.msra.mxu0 0.0
    %2627 = vmatprep.subr.mxu0 0.0
    %2628 = vmatpush1.msra.mxu0 0.0
    %2629 = vmatprep.subr.mxu0 0.0
    %2630 = vmatpush1.msra.mxu0 0.0
    %2631 = vmatprep.subr.mxu0 0.0
    %2632 = vmatpush1.msra.mxu0 0.0
    %2633 = vmatprep.subr.mxu0 0.0
    %2634 = vmatpush1.msra.mxu0 0.0
    %2635 = vmatprep.subr.mxu0 0.0
    %2636 = vmatpush1.msra.mxu0 0.0
    %2637 = vmatprep.subr.mxu0 0.0
    %2638 = vmatpush1.msra.mxu0 0.0
    %2639 = vmatprep.subr.mxu0 0.0
    %2640 = vmatpush1.msra.mxu0 0.0
    %2641 = vmatprep.subr.mxu0 0.0
    %2642 = vmatpush1.msra.mxu0 0.0
    %2643 = vmatprep.subr.mxu0 0.0
    %2644 = vmatpush1.msra.mxu0 0.0
    %2645 = vmatprep.subr.mxu0 0.0
    %2646 = vmatpush1.msra.mxu0 %v2610
    %2647 = vmatprep.subr.mxu0 0.0
    %2648 = vmatpush2.msra.mxu0 0.0
    %2649 = vmatprep.subr.mxu0 0.0
    %2650 = vmatpush2.msra.mxu0 0.0
    %2651 = vmatprep.subr.mxu0 0.0
    %2652 = vmatpush2.msra.mxu0 0.0
    %2653 = vmatprep.subr.mxu0 0.0
    %2654 = vmatpush2.msra.mxu0 0.0
    %2655 = vmatprep.subr.mxu0 0.0
    %2656 = vmatpush2.msra.mxu0 0.0
    %2657 = vmatprep.subr.mxu0 0.0
    %2658 = vmatpush2.msra.mxu0 0.0
    %2659 = vmatprep.subr.mxu0 0.0
    %2660 = vmatpush2.msra.mxu0 0.0
    %2661 = vmatprep.subr.mxu0 0.0
    %2662 = vmatpush2.msra.mxu0 0.0
    %2663 = vmatprep.subr.mxu0 0.0
    %2664 = vmatpush2.msra.mxu0 0.0
    %2665 = vmatprep.subr.mxu0 0.0
    %2666 = vmatpush2.msra.mxu0 0.0
    %2667 = vmatprep.subr.mxu0 0.0
    %2668 = vmatpush2.msra.mxu0 0.0
    %2669 = vmatprep.subr.mxu0 0.0
    %2670 = vmatpush2.msra.mxu0 0.0
    %2671 = vmatprep.subr.mxu0 0.0
    %2672 = vmatpush2.msra.mxu0 0.0
    %2673 = vmatprep.subr.mxu0 0.0
    %2674 = vmatpush2.msra.mxu0 0.0
    %2675 = vmatprep.subr.mxu0 0.0
    %2676 = vmatpush2.msra.mxu0 0.0
    %2677 = vmatprep.subr.mxu0 0.0
    %2678 = vmatpush2.msra.mxu0 0.0
    %2679 = vmatprep.mubr.f32.mxu0 0.0
    %2680 = vmatmul.mubr.f32.gmra.mxu0 %v2613
    %v2681 = vpop.f32.mrf.mxu0
    %v2682 = vadd.f32 0.0, %v2681
    %v2683 = vpop.f32.mrf.mxu0
    %2684 = vdwg.mxu0
    %2685 = vrot.lane.b32.xlu0 %v192, 96
    %v2686 = vpop.permute.xlu0 %2685
    %v2689 = vsel %vm1428, %v1603, 0
    %2691 = vmatprep.subr.mxu0 0.0
    %2692 = vmatpush1.msra.mxu0 0.0
    %2693 = vmatprep.subr.mxu0 0.0
    %2694 = vmatpush1.msra.mxu0 0.0
    %2695 = vmatprep.subr.mxu0 0.0
    %2696 = vmatpush1.msra.mxu0 0.0
    %2697 = vmatprep.subr.mxu0 0.0
    %2698 = vmatpush1.msra.mxu0 0.0
    %2699 = vmatprep.subr.mxu0 0.0
    %2700 = vmatpush1.msra.mxu0 0.0
    %2701 = vmatprep.subr.mxu0 0.0
    %2702 = vmatpush1.msra.mxu0 0.0
    %2703 = vmatprep.subr.mxu0 0.0
    %2704 = vmatpush1.msra.mxu0 0.0
    %2705 = vmatprep.subr.mxu0 0.0
    %2706 = vmatpush1.msra.mxu0 0.0
    %2707 = vmatprep.subr.mxu0 0.0
    %2708 = vmatpush1.msra.mxu0 0.0
    %2709 = vmatprep.subr.mxu0 0.0
    %2710 = vmatpush1.msra.mxu0 0.0
    %2711 = vmatprep.subr.mxu0 0.0
    %2712 = vmatpush1.msra.mxu0 0.0
    %2713 = vmatprep.subr.mxu0 0.0
    %2714 = vmatpush1.msra.mxu0 0.0
    %2715 = vmatprep.subr.mxu0 0.0
    %2716 = vmatpush1.msra.mxu0 0.0
    %2717 = vmatprep.subr.mxu0 0.0
    %2718 = vmatpush1.msra.mxu0 0.0
    %2719 = vmatprep.subr.mxu0 0.0
    %2720 = vmatpush1.msra.mxu0 0.0
    %2721 = vmatprep.subr.mxu0 0.0
    %2722 = vmatpush1.msra.mxu0 %v2686
    %2723 = vmatprep.subr.mxu0 0.0
    %2724 = vmatpush2.msra.mxu0 0.0
    %2725 = vmatprep.subr.mxu0 0.0
    %2726 = vmatpush2.msra.mxu0 0.0
    %2727 = vmatprep.subr.mxu0 0.0
    %2728 = vmatpush2.msra.mxu0 0.0
    %2729 = vmatprep.subr.mxu0 0.0
    %2730 = vmatpush2.msra.mxu0 0.0
    %2731 = vmatprep.subr.mxu0 0.0
    %2732 = vmatpush2.msra.mxu0 0.0
    %2733 = vmatprep.subr.mxu0 0.0
    %2734 = vmatpush2.msra.mxu0 0.0
    %2735 = vmatprep.subr.mxu0 0.0
    %2736 = vmatpush2.msra.mxu0 0.0
    %2737 = vmatprep.subr.mxu0 0.0
    %2738 = vmatpush2.msra.mxu0 0.0
    %2739 = vmatprep.subr.mxu0 0.0
    %2740 = vmatpush2.msra.mxu0 0.0
    %2741 = vmatprep.subr.mxu0 0.0
    %2742 = vmatpush2.msra.mxu0 0.0
    %2743 = vmatprep.subr.mxu0 0.0
    %2744 = vmatpush2.msra.mxu0 0.0
    %2745 = vmatprep.subr.mxu0 0.0
    %2746 = vmatpush2.msra.mxu0 0.0
    %2747 = vmatprep.subr.mxu0 0.0
    %2748 = vmatpush2.msra.mxu0 0.0
    %2749 = vmatprep.subr.mxu0 0.0
    %2750 = vmatpush2.msra.mxu0 0.0
    %2751 = vmatprep.subr.mxu0 0.0
    %2752 = vmatpush2.msra.mxu0 0.0
    %2753 = vmatprep.subr.mxu0 0.0
    %2754 = vmatpush2.msra.mxu0 0.0
    %2755 = vmatprep.mubr.f32.mxu0 0.0
    %2756 = vmatmul.mubr.f32.gmra.mxu0 %v2689
    %v2757 = vpop.f32.mrf.mxu0
    %v2758 = vadd.f32 0.0, %v2757
    %v2759 = vpop.f32.mrf.mxu0
    %2760 = vdwg.mxu0
    %2761 = vrot.lane.b32.xlu0 %v194, 96
    %v2762 = vpop.permute.xlu0 %2761
    %v2765 = vsel %vm1428, %v1604, 0
    %2767 = vmatprep.subr.mxu0 0.0
    %2768 = vmatpush1.msra.mxu0 0.0
    %2769 = vmatprep.subr.mxu0 0.0
    %2770 = vmatpush1.msra.mxu0 0.0
    %2771 = vmatprep.subr.mxu0 0.0
    %2772 = vmatpush1.msra.mxu0 0.0
    %2773 = vmatprep.subr.mxu0 0.0
    %2774 = vmatpush1.msra.mxu0 0.0
    %2775 = vmatprep.subr.mxu0 0.0
    %2776 = vmatpush1.msra.mxu0 0.0
    %2777 = vmatprep.subr.mxu0 0.0
    %2778 = vmatpush1.msra.mxu0 0.0
    %2779 = vmatprep.subr.mxu0 0.0
    %2780 = vmatpush1.msra.mxu0 0.0
    %2781 = vmatprep.subr.mxu0 0.0
    %2782 = vmatpush1.msra.mxu0 0.0
    %2783 = vmatprep.subr.mxu0 0.0
    %2784 = vmatpush1.msra.mxu0 0.0
    %2785 = vmatprep.subr.mxu0 0.0
    %2786 = vmatpush1.msra.mxu0 0.0
    %2787 = vmatprep.subr.mxu0 0.0
    %2788 = vmatpush1.msra.mxu0 0.0
    %2789 = vmatprep.subr.mxu0 0.0
    %2790 = vmatpush1.msra.mxu0 0.0
    %2791 = vmatprep.subr.mxu0 0.0
    %2792 = vmatpush1.msra.mxu0 0.0
    %2793 = vmatprep.subr.mxu0 0.0
    %2794 = vmatpush1.msra.mxu0 0.0
    %2795 = vmatprep.subr.mxu0 0.0
    %2796 = vmatpush1.msra.mxu0 0.0
    %2797 = vmatprep.subr.mxu0 0.0
    %2798 = vmatpush1.msra.mxu0 %v2762
    %2799 = vmatprep.subr.mxu0 0.0
    %2800 = vmatpush2.msra.mxu0 0.0
    %2801 = vmatprep.subr.mxu0 0.0
    %2802 = vmatpush2.msra.mxu0 0.0
    %2803 = vmatprep.subr.mxu0 0.0
    %2804 = vmatpush2.msra.mxu0 0.0
    %2805 = vmatprep.subr.mxu0 0.0
    %2806 = vmatpush2.msra.mxu0 0.0
    %2807 = vmatprep.subr.mxu0 0.0
    %2808 = vmatpush2.msra.mxu0 0.0
    %2809 = vmatprep.subr.mxu0 0.0
    %2810 = vmatpush2.msra.mxu0 0.0
    %2811 = vmatprep.subr.mxu0 0.0
    %2812 = vmatpush2.msra.mxu0 0.0
    %2813 = vmatprep.subr.mxu0 0.0
    %2814 = vmatpush2.msra.mxu0 0.0
    %2815 = vmatprep.subr.mxu0 0.0
    %2816 = vmatpush2.msra.mxu0 0.0
    %2817 = vmatprep.subr.mxu0 0.0
    %2818 = vmatpush2.msra.mxu0 0.0
    %2819 = vmatprep.subr.mxu0 0.0
    %2820 = vmatpush2.msra.mxu0 0.0
    %2821 = vmatprep.subr.mxu0 0.0
    %2822 = vmatpush2.msra.mxu0 0.0
    %2823 = vmatprep.subr.mxu0 0.0
    %2824 = vmatpush2.msra.mxu0 0.0
    %2825 = vmatprep.subr.mxu0 0.0
    %2826 = vmatpush2.msra.mxu0 0.0
    %2827 = vmatprep.subr.mxu0 0.0
    %2828 = vmatpush2.msra.mxu0 0.0
    %2829 = vmatprep.subr.mxu0 0.0
    %2830 = vmatpush2.msra.mxu0 0.0
    %2831 = vmatprep.mubr.f32.mxu0 0.0
    %2832 = vmatmul.mubr.f32.gmra.mxu0 %v2765
    %v2833 = vpop.f32.mrf.mxu0
    %v2834 = vadd.f32 0.0, %v2833
    %v2835 = vpop.f32.mrf.mxu0
    %2836 = vdwg.mxu0
    %v2837 = vld [vmem:[#allocation8] sm:$0x3]
    %v2838 = vld [vmem:[#allocation8 + $0x2] sm:$0x3]
    %v2839 = vld [vmem:[#allocation8 + $0x4] sm:$0x3]
    %v2840 = vld [vmem:[#allocation8 + $0x6] sm:$0x3]
    %v2841 = vld [vmem:[#allocation8 + $0x8] sm:$0x3]
    %v2842 = vld [vmem:[#allocation8 + $0xa] sm:$0x3]
    %v2843 = vld [vmem:[#allocation8 + $0xc] sm:$0x3]
    %v2844 = vld [vmem:[#allocation8 + $0xe] sm:$0x3]
    %v2845 = vld [vmem:[#allocation8 + $0x10] sm:$0x3]
    %v2846 = vld [vmem:[#allocation8 + $0x12] sm:$0x3]
    %v2847 = vld [vmem:[#allocation8 + $0x14] sm:$0x3]
    %v2848 = vld [vmem:[#allocation8 + $0x16] sm:$0x3]
    %v2849 = vld [vmem:[#allocation8 + $0x18] sm:$0x3]
    %v2850 = vld [vmem:[#allocation8 + $0x1a] sm:$0x3]
    %v2851 = vld [vmem:[#allocation8 + $0x1c] sm:$0x3]
    %v2852 = vld [vmem:[#allocation8 + $0x1e] sm:$0x3]
    %v2854 = vsel %vm197, %v1694, 0
    %vm2856 = vcmask 1041408
    %v2858 = vsel %vm2856, %v2837, 0
    %2860 = vmatprep.subr.mxu0 0.0
    %2861 = vmatpush1.msra.mxu0 0.0
    %2862 = vmatprep.subr.mxu0 0.0
    %2863 = vmatpush1.msra.mxu0 0.0
    %2864 = vmatprep.subr.mxu0 0.0
    %2865 = vmatpush1.msra.mxu0 0.0
    %2866 = vmatprep.subr.mxu0 0.0
    %2867 = vmatpush1.msra.mxu0 0.0
    %2868 = vmatprep.subr.mxu0 0.0
    %2869 = vmatpush1.msra.mxu0 0.0
    %2870 = vmatprep.subr.mxu0 0.0
    %2871 = vmatpush1.msra.mxu0 0.0
    %2872 = vmatprep.subr.mxu0 0.0
    %2873 = vmatpush1.msra.mxu0 0.0
    %2874 = vmatprep.subr.mxu0 0.0
    %2875 = vmatpush1.msra.mxu0 0.0
    %2876 = vmatprep.subr.mxu0 0.0
    %2877 = vmatpush1.msra.mxu0 0.0
    %2878 = vmatprep.subr.mxu0 0.0
    %2879 = vmatpush1.msra.mxu0 0.0
    %2880 = vmatprep.subr.mxu0 0.0
    %2881 = vmatpush1.msra.mxu0 0.0
    %2882 = vmatprep.subr.mxu0 0.0
    %2883 = vmatpush1.msra.mxu0 0.0
    %2884 = vmatprep.subr.mxu0 0.0
    %2885 = vmatpush1.msra.mxu0 0.0
    %2886 = vmatprep.subr.mxu0 0.0
    %2887 = vmatpush1.msra.mxu0 0.0
    %2888 = vmatprep.subr.mxu0 0.0
    %2889 = vmatpush1.msra.mxu0 0.0
    %2890 = vmatprep.subr.mxu0 0.0
    %2891 = vmatpush1.msra.mxu0 %v2858
    %2892 = vmatprep.subr.mxu0 0.0
    %2893 = vmatpush2.msra.mxu0 0.0
    %2894 = vmatprep.subr.mxu0 0.0
    %2895 = vmatpush2.msra.mxu0 0.0
    %2896 = vmatprep.subr.mxu0 0.0
    %2897 = vmatpush2.msra.mxu0 0.0
    %2898 = vmatprep.subr.mxu0 0.0
    %2899 = vmatpush2.msra.mxu0 0.0
    %2900 = vmatprep.subr.mxu0 0.0
    %2901 = vmatpush2.msra.mxu0 0.0
    %2902 = vmatprep.subr.mxu0 0.0
    %2903 = vmatpush2.msra.mxu0 0.0
    %2904 = vmatprep.subr.mxu0 0.0
    %2905 = vmatpush2.msra.mxu0 0.0
    %2906 = vmatprep.subr.mxu0 0.0
    %2907 = vmatpush2.msra.mxu0 0.0
    %2908 = vmatprep.subr.mxu0 0.0
    %2909 = vmatpush2.msra.mxu0 0.0
    %2910 = vmatprep.subr.mxu0 0.0
    %2911 = vmatpush2.msra.mxu0 0.0
    %2912 = vmatprep.subr.mxu0 0.0
    %2913 = vmatpush2.msra.mxu0 0.0
    %2914 = vmatprep.subr.mxu0 0.0
    %2915 = vmatpush2.msra.mxu0 0.0
    %2916 = vmatprep.subr.mxu0 0.0
    %2917 = vmatpush2.msra.mxu0 0.0
    %2918 = vmatprep.subr.mxu0 0.0
    %2919 = vmatpush2.msra.mxu0 0.0
    %2920 = vmatprep.subr.mxu0 0.0
    %2921 = vmatpush2.msra.mxu0 0.0
    %2922 = vmatprep.subr.mxu0 0.0
    %2923 = vmatpush2.msra.mxu0 0.0
    %2924 = vmatprep.mubr.f32.mxu0 0.0
    %2925 = vmatmul.mubr.f32.gmra.mxu0 %v2854
    %v2926 = vpop.f32.mrf.mxu0
    %v2927 = vadd.f32 0.0, %v2926
    %v2928 = vpop.f32.mrf.mxu0
    %2929 = vdwg.mxu0
    %v2931 = vsel %vm197, %v1770, 0
    %v2934 = vsel %vm2856, %v2838, 0
    %2936 = vmatprep.subr.mxu0 0.0
    %2937 = vmatpush1.msra.mxu0 0.0
    %2938 = vmatprep.subr.mxu0 0.0
    %2939 = vmatpush1.msra.mxu0 0.0
    %2940 = vmatprep.subr.mxu0 0.0
    %2941 = vmatpush1.msra.mxu0 0.0
    %2942 = vmatprep.subr.mxu0 0.0
    %2943 = vmatpush1.msra.mxu0 0.0
    %2944 = vmatprep.subr.mxu0 0.0
    %2945 = vmatpush1.msra.mxu0 0.0
    %2946 = vmatprep.subr.mxu0 0.0
    %2947 = vmatpush1.msra.mxu0 0.0
    %2948 = vmatprep.subr.mxu0 0.0
    %2949 = vmatpush1.msra.mxu0 0.0
    %2950 = vmatprep.subr.mxu0 0.0
    %2951 = vmatpush1.msra.mxu0 0.0
    %2952 = vmatprep.subr.mxu0 0.0
    %2953 = vmatpush1.msra.mxu0 0.0
    %2954 = vmatprep.subr.mxu0 0.0
    %2955 = vmatpush1.msra.mxu0 0.0
    %2956 = vmatprep.subr.mxu0 0.0
    %2957 = vmatpush1.msra.mxu0 0.0
    %2958 = vmatprep.subr.mxu0 0.0
    %2959 = vmatpush1.msra.mxu0 0.0
    %2960 = vmatprep.subr.mxu0 0.0
    %2961 = vmatpush1.msra.mxu0 0.0
    %2962 = vmatprep.subr.mxu0 0.0
    %2963 = vmatpush1.msra.mxu0 0.0
    %2964 = vmatprep.subr.mxu0 0.0
    %2965 = vmatpush1.msra.mxu0 0.0
    %2966 = vmatprep.subr.mxu0 0.0
    %2967 = vmatpush1.msra.mxu0 %v2934
    %2968 = vmatprep.subr.mxu0 0.0
    %2969 = vmatpush2.msra.mxu0 0.0
    %2970 = vmatprep.subr.mxu0 0.0
    %2971 = vmatpush2.msra.mxu0 0.0
    %2972 = vmatprep.subr.mxu0 0.0
    %2973 = vmatpush2.msra.mxu0 0.0
    %2974 = vmatprep.subr.mxu0 0.0
    %2975 = vmatpush2.msra.mxu0 0.0
    %2976 = vmatprep.subr.mxu0 0.0
    %2977 = vmatpush2.msra.mxu0 0.0
    %2978 = vmatprep.subr.mxu0 0.0
    %2979 = vmatpush2.msra.mxu0 0.0
    %2980 = vmatprep.subr.mxu0 0.0
    %2981 = vmatpush2.msra.mxu0 0.0
    %2982 = vmatprep.subr.mxu0 0.0
    %2983 = vmatpush2.msra.mxu0 0.0
    %2984 = vmatprep.subr.mxu0 0.0
    %2985 = vmatpush2.msra.mxu0 0.0
    %2986 = vmatprep.subr.mxu0 0.0
    %2987 = vmatpush2.msra.mxu0 0.0
    %2988 = vmatprep.subr.mxu0 0.0
    %2989 = vmatpush2.msra.mxu0 0.0
    %2990 = vmatprep.subr.mxu0 0.0
    %2991 = vmatpush2.msra.mxu0 0.0
    %2992 = vmatprep.subr.mxu0 0.0
    %2993 = vmatpush2.msra.mxu0 0.0
    %2994 = vmatprep.subr.mxu0 0.0
    %2995 = vmatpush2.msra.mxu0 0.0
    %2996 = vmatprep.subr.mxu0 0.0
    %2997 = vmatpush2.msra.mxu0 0.0
    %2998 = vmatprep.subr.mxu0 0.0
    %2999 = vmatpush2.msra.mxu0 0.0
    %3000 = vmatprep.mubr.f32.mxu0 0.0
    %3001 = vmatmul.mubr.f32.gmra.mxu0 %v2931
    %v3002 = vpop.f32.mrf.mxu0
    %v3003 = vadd.f32 0.0, %v3002
    %v3004 = vpop.f32.mrf.mxu0
    %3005 = vdwg.mxu0
    %v3007 = vsel %vm197, %v1846, 0
    %v3010 = vsel %vm2856, %v2839, 0
    %3012 = vmatprep.subr.mxu0 0.0
    %3013 = vmatpush1.msra.mxu0 0.0
    %3014 = vmatprep.subr.mxu0 0.0
    %3015 = vmatpush1.msra.mxu0 0.0
    %3016 = vmatprep.subr.mxu0 0.0
    %3017 = vmatpush1.msra.mxu0 0.0
    %3018 = vmatprep.subr.mxu0 0.0
    %3019 = vmatpush1.msra.mxu0 0.0
    %3020 = vmatprep.subr.mxu0 0.0
    %3021 = vmatpush1.msra.mxu0 0.0
    %3022 = vmatprep.subr.mxu0 0.0
    %3023 = vmatpush1.msra.mxu0 0.0
    %3024 = vmatprep.subr.mxu0 0.0
    %3025 = vmatpush1.msra.mxu0 0.0
    %3026 = vmatprep.subr.mxu0 0.0
    %3027 = vmatpush1.msra.mxu0 0.0
    %3028 = vmatprep.subr.mxu0 0.0
    %3029 = vmatpush1.msra.mxu0 0.0
    %3030 = vmatprep.subr.mxu0 0.0
    %3031 = vmatpush1.msra.mxu0 0.0
    %3032 = vmatprep.subr.mxu0 0.0
    %3033 = vmatpush1.msra.mxu0 0.0
    %3034 = vmatprep.subr.mxu0 0.0
    %3035 = vmatpush1.msra.mxu0 0.0
    %3036 = vmatprep.subr.mxu0 0.0
    %3037 = vmatpush1.msra.mxu0 0.0
    %3038 = vmatprep.subr.mxu0 0.0
    %3039 = vmatpush1.msra.mxu0 0.0
    %3040 = vmatprep.subr.mxu0 0.0
    %3041 = vmatpush1.msra.mxu0 0.0
    %3042 = vmatprep.subr.mxu0 0.0
    %3043 = vmatpush1.msra.mxu0 %v3010
    %3044 = vmatprep.subr.mxu0 0.0
    %3045 = vmatpush2.msra.mxu0 0.0
    %3046 = vmatprep.subr.mxu0 0.0
    %3047 = vmatpush2.msra.mxu0 0.0
    %3048 = vmatprep.subr.mxu0 0.0
    %3049 = vmatpush2.msra.mxu0 0.0
    %3050 = vmatprep.subr.mxu0 0.0
    %3051 = vmatpush2.msra.mxu0 0.0
    %3052 = vmatprep.subr.mxu0 0.0
    %3053 = vmatpush2.msra.mxu0 0.0
    %3054 = vmatprep.subr.mxu0 0.0
    %3055 = vmatpush2.msra.mxu0 0.0
    %3056 = vmatprep.subr.mxu0 0.0
    %3057 = vmatpush2.msra.mxu0 0.0
    %3058 = vmatprep.subr.mxu0 0.0
    %3059 = vmatpush2.msra.mxu0 0.0
    %3060 = vmatprep.subr.mxu0 0.0
    %3061 = vmatpush2.msra.mxu0 0.0
    %3062 = vmatprep.subr.mxu0 0.0
    %3063 = vmatpush2.msra.mxu0 0.0
    %3064 = vmatprep.subr.mxu0 0.0
    %3065 = vmatpush2.msra.mxu0 0.0
    %3066 = vmatprep.subr.mxu0 0.0
    %3067 = vmatpush2.msra.mxu0 0.0
    %3068 = vmatprep.subr.mxu0 0.0
    %3069 = vmatpush2.msra.mxu0 0.0
    %3070 = vmatprep.subr.mxu0 0.0
    %3071 = vmatpush2.msra.mxu0 0.0
    %3072 = vmatprep.subr.mxu0 0.0
    %3073 = vmatpush2.msra.mxu0 0.0
    %3074 = vmatprep.subr.mxu0 0.0
    %3075 = vmatpush2.msra.mxu0 0.0
    %3076 = vmatprep.mubr.f32.mxu0 0.0
    %3077 = vmatmul.mubr.f32.gmra.mxu0 %v3007
    %v3078 = vpop.f32.mrf.mxu0
    %v3079 = vadd.f32 0.0, %v3078
    %v3080 = vpop.f32.mrf.mxu0
    %3081 = vdwg.mxu0
    %v3083 = vsel %vm197, %v1922, 0
    %v3086 = vsel %vm2856, %v2840, 0
    %3088 = vmatprep.subr.mxu0 0.0
    %3089 = vmatpush1.msra.mxu0 0.0
    %3090 = vmatprep.subr.mxu0 0.0
    %3091 = vmatpush1.msra.mxu0 0.0
    %3092 = vmatprep.subr.mxu0 0.0
    %3093 = vmatpush1.msra.mxu0 0.0
    %3094 = vmatprep.subr.mxu0 0.0
    %3095 = vmatpush1.msra.mxu0 0.0
    %3096 = vmatprep.subr.mxu0 0.0
    %3097 = vmatpush1.msra.mxu0 0.0
    %3098 = vmatprep.subr.mxu0 0.0
    %3099 = vmatpush1.msra.mxu0 0.0
    %3100 = vmatprep.subr.mxu0 0.0
    %3101 = vmatpush1.msra.mxu0 0.0
    %3102 = vmatprep.subr.mxu0 0.0
    %3103 = vmatpush1.msra.mxu0 0.0
    %3104 = vmatprep.subr.mxu0 0.0
    %3105 = vmatpush1.msra.mxu0 0.0
    %3106 = vmatprep.subr.mxu0 0.0
    %3107 = vmatpush1.msra.mxu0 0.0
    %3108 = vmatprep.subr.mxu0 0.0
    %3109 = vmatpush1.msra.mxu0 0.0
    %3110 = vmatprep.subr.mxu0 0.0
    %3111 = vmatpush1.msra.mxu0 0.0
    %3112 = vmatprep.subr.mxu0 0.0
    %3113 = vmatpush1.msra.mxu0 0.0
    %3114 = vmatprep.subr.mxu0 0.0
    %3115 = vmatpush1.msra.mxu0 0.0
    %3116 = vmatprep.subr.mxu0 0.0
    %3117 = vmatpush1.msra.mxu0 0.0
    %3118 = vmatprep.subr.mxu0 0.0
    %3119 = vmatpush1.msra.mxu0 %v3086
    %3120 = vmatprep.subr.mxu0 0.0
    %3121 = vmatpush2.msra.mxu0 0.0
    %3122 = vmatprep.subr.mxu0 0.0
    %3123 = vmatpush2.msra.mxu0 0.0
    %3124 = vmatprep.subr.mxu0 0.0
    %3125 = vmatpush2.msra.mxu0 0.0
    %3126 = vmatprep.subr.mxu0 0.0
    %3127 = vmatpush2.msra.mxu0 0.0
    %3128 = vmatprep.subr.mxu0 0.0
    %3129 = vmatpush2.msra.mxu0 0.0
    %3130 = vmatprep.subr.mxu0 0.0
    %3131 = vmatpush2.msra.mxu0 0.0
    %3132 = vmatprep.subr.mxu0 0.0
    %3133 = vmatpush2.msra.mxu0 0.0
    %3134 = vmatprep.subr.mxu0 0.0
    %3135 = vmatpush2.msra.mxu0 0.0
    %3136 = vmatprep.subr.mxu0 0.0
    %3137 = vmatpush2.msra.mxu0 0.0
    %3138 = vmatprep.subr.mxu0 0.0
    %3139 = vmatpush2.msra.mxu0 0.0
    %3140 = vmatprep.subr.mxu0 0.0
    %3141 = vmatpush2.msra.mxu0 0.0
    %3142 = vmatprep.subr.mxu0 0.0
    %3143 = vmatpush2.msra.mxu0 0.0
    %3144 = vmatprep.subr.mxu0 0.0
    %3145 = vmatpush2.msra.mxu0 0.0
    %3146 = vmatprep.subr.mxu0 0.0
    %3147 = vmatpush2.msra.mxu0 0.0
    %3148 = vmatprep.subr.mxu0 0.0
    %3149 = vmatpush2.msra.mxu0 0.0
    %3150 = vmatprep.subr.mxu0 0.0
    %3151 = vmatpush2.msra.mxu0 0.0
    %3152 = vmatprep.mubr.f32.mxu0 0.0
    %3153 = vmatmul.mubr.f32.gmra.mxu0 %v3083
    %v3154 = vpop.f32.mrf.mxu0
    %v3155 = vadd.f32 0.0, %v3154
    %v3156 = vpop.f32.mrf.mxu0
    %3157 = vdwg.mxu0
    %v3159 = vsel %vm197, %v1998, 0
    %v3162 = vsel %vm2856, %v2841, 0
    %3164 = vmatprep.subr.mxu0 0.0
    %3165 = vmatpush1.msra.mxu0 0.0
    %3166 = vmatprep.subr.mxu0 0.0
    %3167 = vmatpush1.msra.mxu0 0.0
    %3168 = vmatprep.subr.mxu0 0.0
    %3169 = vmatpush1.msra.mxu0 0.0
    %3170 = vmatprep.subr.mxu0 0.0
    %3171 = vmatpush1.msra.mxu0 0.0
    %3172 = vmatprep.subr.mxu0 0.0
    %3173 = vmatpush1.msra.mxu0 0.0
    %3174 = vmatprep.subr.mxu0 0.0
    %3175 = vmatpush1.msra.mxu0 0.0
    %3176 = vmatprep.subr.mxu0 0.0
    %3177 = vmatpush1.msra.mxu0 0.0
    %3178 = vmatprep.subr.mxu0 0.0
    %3179 = vmatpush1.msra.mxu0 0.0
    %3180 = vmatprep.subr.mxu0 0.0
    %3181 = vmatpush1.msra.mxu0 0.0
    %3182 = vmatprep.subr.mxu0 0.0
    %3183 = vmatpush1.msra.mxu0 0.0
    %3184 = vmatprep.subr.mxu0 0.0
    %3185 = vmatpush1.msra.mxu0 0.0
    %3186 = vmatprep.subr.mxu0 0.0
    %3187 = vmatpush1.msra.mxu0 0.0
    %3188 = vmatprep.subr.mxu0 0.0
    %3189 = vmatpush1.msra.mxu0 0.0
    %3190 = vmatprep.subr.mxu0 0.0
    %3191 = vmatpush1.msra.mxu0 0.0
    %3192 = vmatprep.subr.mxu0 0.0
    %3193 = vmatpush1.msra.mxu0 0.0
    %3194 = vmatprep.subr.mxu0 0.0
    %3195 = vmatpush1.msra.mxu0 %v3162
    %3196 = vmatprep.subr.mxu0 0.0
    %3197 = vmatpush2.msra.mxu0 0.0
    %3198 = vmatprep.subr.mxu0 0.0
    %3199 = vmatpush2.msra.mxu0 0.0
    %3200 = vmatprep.subr.mxu0 0.0
    %3201 = vmatpush2.msra.mxu0 0.0
    %3202 = vmatprep.subr.mxu0 0.0
    %3203 = vmatpush2.msra.mxu0 0.0
    %3204 = vmatprep.subr.mxu0 0.0
    %3205 = vmatpush2.msra.mxu0 0.0
    %3206 = vmatprep.subr.mxu0 0.0
    %3207 = vmatpush2.msra.mxu0 0.0
    %3208 = vmatprep.subr.mxu0 0.0
    %3209 = vmatpush2.msra.mxu0 0.0
    %3210 = vmatprep.subr.mxu0 0.0
    %3211 = vmatpush2.msra.mxu0 0.0
    %3212 = vmatprep.subr.mxu0 0.0
    %3213 = vmatpush2.msra.mxu0 0.0
    %3214 = vmatprep.subr.mxu0 0.0
    %3215 = vmatpush2.msra.mxu0 0.0
    %3216 = vmatprep.subr.mxu0 0.0
    %3217 = vmatpush2.msra.mxu0 0.0
    %3218 = vmatprep.subr.mxu0 0.0
    %3219 = vmatpush2.msra.mxu0 0.0
    %3220 = vmatprep.subr.mxu0 0.0
    %3221 = vmatpush2.msra.mxu0 0.0
    %3222 = vmatprep.subr.mxu0 0.0
    %3223 = vmatpush2.msra.mxu0 0.0
    %3224 = vmatprep.subr.mxu0 0.0
    %3225 = vmatpush2.msra.mxu0 0.0
    %3226 = vmatprep.subr.mxu0 0.0
    %3227 = vmatpush2.msra.mxu0 0.0
    %3228 = vmatprep.mubr.f32.mxu0 0.0
    %3229 = vmatmul.mubr.f32.gmra.mxu0 %v3159
    %v3230 = vpop.f32.mrf.mxu0
    %v3231 = vadd.f32 0.0, %v3230
    %v3232 = vpop.f32.mrf.mxu0
    %3233 = vdwg.mxu0
    %v3235 = vsel %vm197, %v2074, 0
    %v3238 = vsel %vm2856, %v2842, 0
    %3240 = vmatprep.subr.mxu0 0.0
    %3241 = vmatpush1.msra.mxu0 0.0
    %3242 = vmatprep.subr.mxu0 0.0
    %3243 = vmatpush1.msra.mxu0 0.0
    %3244 = vmatprep.subr.mxu0 0.0
    %3245 = vmatpush1.msra.mxu0 0.0
    %3246 = vmatprep.subr.mxu0 0.0
    %3247 = vmatpush1.msra.mxu0 0.0
    %3248 = vmatprep.subr.mxu0 0.0
    %3249 = vmatpush1.msra.mxu0 0.0
    %3250 = vmatprep.subr.mxu0 0.0
    %3251 = vmatpush1.msra.mxu0 0.0
    %3252 = vmatprep.subr.mxu0 0.0
    %3253 = vmatpush1.msra.mxu0 0.0
    %3254 = vmatprep.subr.mxu0 0.0
    %3255 = vmatpush1.msra.mxu0 0.0
    %3256 = vmatprep.subr.mxu0 0.0
    %3257 = vmatpush1.msra.mxu0 0.0
    %3258 = vmatprep.subr.mxu0 0.0
    %3259 = vmatpush1.msra.mxu0 0.0
    %3260 = vmatprep.subr.mxu0 0.0
    %3261 = vmatpush1.msra.mxu0 0.0
    %3262 = vmatprep.subr.mxu0 0.0
    %3263 = vmatpush1.msra.mxu0 0.0
    %3264 = vmatprep.subr.mxu0 0.0
    %3265 = vmatpush1.msra.mxu0 0.0
    %3266 = vmatprep.subr.mxu0 0.0
    %3267 = vmatpush1.msra.mxu0 0.0
    %3268 = vmatprep.subr.mxu0 0.0
    %3269 = vmatpush1.msra.mxu0 0.0
    %3270 = vmatprep.subr.mxu0 0.0
    %3271 = vmatpush1.msra.mxu0 %v3238
    %3272 = vmatprep.subr.mxu0 0.0
    %3273 = vmatpush2.msra.mxu0 0.0
    %3274 = vmatprep.subr.mxu0 0.0
    %3275 = vmatpush2.msra.mxu0 0.0
    %3276 = vmatprep.subr.mxu0 0.0
    %3277 = vmatpush2.msra.mxu0 0.0
    %3278 = vmatprep.subr.mxu0 0.0
    %3279 = vmatpush2.msra.mxu0 0.0
    %3280 = vmatprep.subr.mxu0 0.0
    %3281 = vmatpush2.msra.mxu0 0.0
    %3282 = vmatprep.subr.mxu0 0.0
    %3283 = vmatpush2.msra.mxu0 0.0
    %3284 = vmatprep.subr.mxu0 0.0
    %3285 = vmatpush2.msra.mxu0 0.0
    %3286 = vmatprep.subr.mxu0 0.0
    %3287 = vmatpush2.msra.mxu0 0.0
    %3288 = vmatprep.subr.mxu0 0.0
    %3289 = vmatpush2.msra.mxu0 0.0
    %3290 = vmatprep.subr.mxu0 0.0
    %3291 = vmatpush2.msra.mxu0 0.0
    %3292 = vmatprep.subr.mxu0 0.0
    %3293 = vmatpush2.msra.mxu0 0.0
    %3294 = vmatprep.subr.mxu0 0.0
    %3295 = vmatpush2.msra.mxu0 0.0
    %3296 = vmatprep.subr.mxu0 0.0
    %3297 = vmatpush2.msra.mxu0 0.0
    %3298 = vmatprep.subr.mxu0 0.0
    %3299 = vmatpush2.msra.mxu0 0.0
    %3300 = vmatprep.subr.mxu0 0.0
    %3301 = vmatpush2.msra.mxu0 0.0
    %3302 = vmatprep.subr.mxu0 0.0
    %3303 = vmatpush2.msra.mxu0 0.0
    %3304 = vmatprep.mubr.f32.mxu0 0.0
    %3305 = vmatmul.mubr.f32.gmra.mxu0 %v3235
    %v3306 = vpop.f32.mrf.mxu0
    %v3307 = vadd.f32 0.0, %v3306
    %v3308 = vpop.f32.mrf.mxu0
    %3309 = vdwg.mxu0
    %v3311 = vsel %vm197, %v2150, 0
    %v3314 = vsel %vm2856, %v2843, 0
    %3316 = vmatprep.subr.mxu0 0.0
    %3317 = vmatpush1.msra.mxu0 0.0
    %3318 = vmatprep.subr.mxu0 0.0
    %3319 = vmatpush1.msra.mxu0 0.0
    %3320 = vmatprep.subr.mxu0 0.0
    %3321 = vmatpush1.msra.mxu0 0.0
    %3322 = vmatprep.subr.mxu0 0.0
    %3323 = vmatpush1.msra.mxu0 0.0
    %3324 = vmatprep.subr.mxu0 0.0
    %3325 = vmatpush1.msra.mxu0 0.0
    %3326 = vmatprep.subr.mxu0 0.0
    %3327 = vmatpush1.msra.mxu0 0.0
    %3328 = vmatprep.subr.mxu0 0.0
    %3329 = vmatpush1.msra.mxu0 0.0
    %3330 = vmatprep.subr.mxu0 0.0
    %3331 = vmatpush1.msra.mxu0 0.0
    %3332 = vmatprep.subr.mxu0 0.0
    %3333 = vmatpush1.msra.mxu0 0.0
    %3334 = vmatprep.subr.mxu0 0.0
    %3335 = vmatpush1.msra.mxu0 0.0
    %3336 = vmatprep.subr.mxu0 0.0
    %3337 = vmatpush1.msra.mxu0 0.0
    %3338 = vmatprep.subr.mxu0 0.0
    %3339 = vmatpush1.msra.mxu0 0.0
    %3340 = vmatprep.subr.mxu0 0.0
    %3341 = vmatpush1.msra.mxu0 0.0
    %3342 = vmatprep.subr.mxu0 0.0
    %3343 = vmatpush1.msra.mxu0 0.0
    %3344 = vmatprep.subr.mxu0 0.0
    %3345 = vmatpush1.msra.mxu0 0.0
    %3346 = vmatprep.subr.mxu0 0.0
    %3347 = vmatpush1.msra.mxu0 %v3314
    %3348 = vmatprep.subr.mxu0 0.0
    %3349 = vmatpush2.msra.mxu0 0.0
    %3350 = vmatprep.subr.mxu0 0.0
    %3351 = vmatpush2.msra.mxu0 0.0
    %3352 = vmatprep.subr.mxu0 0.0
    %3353 = vmatpush2.msra.mxu0 0.0
    %3354 = vmatprep.subr.mxu0 0.0
    %3355 = vmatpush2.msra.mxu0 0.0
    %3356 = vmatprep.subr.mxu0 0.0
    %3357 = vmatpush2.msra.mxu0 0.0
    %3358 = vmatprep.subr.mxu0 0.0
    %3359 = vmatpush2.msra.mxu0 0.0
    %3360 = vmatprep.subr.mxu0 0.0
    %3361 = vmatpush2.msra.mxu0 0.0
    %3362 = vmatprep.subr.mxu0 0.0
    %3363 = vmatpush2.msra.mxu0 0.0
    %3364 = vmatprep.subr.mxu0 0.0
    %3365 = vmatpush2.msra.mxu0 0.0
    %3366 = vmatprep.subr.mxu0 0.0
    %3367 = vmatpush2.msra.mxu0 0.0
    %3368 = vmatprep.subr.mxu0 0.0
    %3369 = vmatpush2.msra.mxu0 0.0
    %3370 = vmatprep.subr.mxu0 0.0
    %3371 = vmatpush2.msra.mxu0 0.0
    %3372 = vmatprep.subr.mxu0 0.0
    %3373 = vmatpush2.msra.mxu0 0.0
    %3374 = vmatprep.subr.mxu0 0.0
    %3375 = vmatpush2.msra.mxu0 0.0
    %3376 = vmatprep.subr.mxu0 0.0
    %3377 = vmatpush2.msra.mxu0 0.0
    %3378 = vmatprep.subr.mxu0 0.0
    %3379 = vmatpush2.msra.mxu0 0.0
    %3380 = vmatprep.mubr.f32.mxu0 0.0
    %3381 = vmatmul.mubr.f32.gmra.mxu0 %v3311
    %v3382 = vpop.f32.mrf.mxu0
    %v3383 = vadd.f32 0.0, %v3382
    %v3384 = vpop.f32.mrf.mxu0
    %3385 = vdwg.mxu0
    %v3387 = vsel %vm197, %v2226, 0
    %v3390 = vsel %vm2856, %v2844, 0
    %3392 = vmatprep.subr.mxu0 0.0
    %3393 = vmatpush1.msra.mxu0 0.0
    %3394 = vmatprep.subr.mxu0 0.0
    %3395 = vmatpush1.msra.mxu0 0.0
    %3396 = vmatprep.subr.mxu0 0.0
    %3397 = vmatpush1.msra.mxu0 0.0
    %3398 = vmatprep.subr.mxu0 0.0
    %3399 = vmatpush1.msra.mxu0 0.0
    %3400 = vmatprep.subr.mxu0 0.0
    %3401 = vmatpush1.msra.mxu0 0.0
    %3402 = vmatprep.subr.mxu0 0.0
    %3403 = vmatpush1.msra.mxu0 0.0
    %3404 = vmatprep.subr.mxu0 0.0
    %3405 = vmatpush1.msra.mxu0 0.0
    %3406 = vmatprep.subr.mxu0 0.0
    %3407 = vmatpush1.msra.mxu0 0.0
    %3408 = vmatprep.subr.mxu0 0.0
    %3409 = vmatpush1.msra.mxu0 0.0
    %3410 = vmatprep.subr.mxu0 0.0
    %3411 = vmatpush1.msra.mxu0 0.0
    %3412 = vmatprep.subr.mxu0 0.0
    %3413 = vmatpush1.msra.mxu0 0.0
    %3414 = vmatprep.subr.mxu0 0.0
    %3415 = vmatpush1.msra.mxu0 0.0
    %3416 = vmatprep.subr.mxu0 0.0
    %3417 = vmatpush1.msra.mxu0 0.0
    %3418 = vmatprep.subr.mxu0 0.0
    %3419 = vmatpush1.msra.mxu0 0.0
    %3420 = vmatprep.subr.mxu0 0.0
    %3421 = vmatpush1.msra.mxu0 0.0
    %3422 = vmatprep.subr.mxu0 0.0
    %3423 = vmatpush1.msra.mxu0 %v3390
    %3424 = vmatprep.subr.mxu0 0.0
    %3425 = vmatpush2.msra.mxu0 0.0
    %3426 = vmatprep.subr.mxu0 0.0
    %3427 = vmatpush2.msra.mxu0 0.0
    %3428 = vmatprep.subr.mxu0 0.0
    %3429 = vmatpush2.msra.mxu0 0.0
    %3430 = vmatprep.subr.mxu0 0.0
    %3431 = vmatpush2.msra.mxu0 0.0
    %3432 = vmatprep.subr.mxu0 0.0
    %3433 = vmatpush2.msra.mxu0 0.0
    %3434 = vmatprep.subr.mxu0 0.0
    %3435 = vmatpush2.msra.mxu0 0.0
    %3436 = vmatprep.subr.mxu0 0.0
    %3437 = vmatpush2.msra.mxu0 0.0
    %3438 = vmatprep.subr.mxu0 0.0
    %3439 = vmatpush2.msra.mxu0 0.0
    %3440 = vmatprep.subr.mxu0 0.0
    %3441 = vmatpush2.msra.mxu0 0.0
    %3442 = vmatprep.subr.mxu0 0.0
    %3443 = vmatpush2.msra.mxu0 0.0
    %3444 = vmatprep.subr.mxu0 0.0
    %3445 = vmatpush2.msra.mxu0 0.0
    %3446 = vmatprep.subr.mxu0 0.0
    %3447 = vmatpush2.msra.mxu0 0.0
    %3448 = vmatprep.subr.mxu0 0.0
    %3449 = vmatpush2.msra.mxu0 0.0
    %3450 = vmatprep.subr.mxu0 0.0
    %3451 = vmatpush2.msra.mxu0 0.0
    %3452 = vmatprep.subr.mxu0 0.0
    %3453 = vmatpush2.msra.mxu0 0.0
    %3454 = vmatprep.subr.mxu0 0.0
    %3455 = vmatpush2.msra.mxu0 0.0
    %3456 = vmatprep.mubr.f32.mxu0 0.0
    %3457 = vmatmul.mubr.f32.gmra.mxu0 %v3387
    %v3458 = vpop.f32.mrf.mxu0
    %v3459 = vadd.f32 0.0, %v3458
    %v3460 = vpop.f32.mrf.mxu0
    %3461 = vdwg.mxu0
    %v3463 = vsel %vm197, %v2302, 0
    %v3466 = vsel %vm2856, %v2845, 0
    %3468 = vmatprep.subr.mxu0 0.0
    %3469 = vmatpush1.msra.mxu0 0.0
    %3470 = vmatprep.subr.mxu0 0.0
    %3471 = vmatpush1.msra.mxu0 0.0
    %3472 = vmatprep.subr.mxu0 0.0
    %3473 = vmatpush1.msra.mxu0 0.0
    %3474 = vmatprep.subr.mxu0 0.0
    %3475 = vmatpush1.msra.mxu0 0.0
    %3476 = vmatprep.subr.mxu0 0.0
    %3477 = vmatpush1.msra.mxu0 0.0
    %3478 = vmatprep.subr.mxu0 0.0
    %3479 = vmatpush1.msra.mxu0 0.0
    %3480 = vmatprep.subr.mxu0 0.0
    %3481 = vmatpush1.msra.mxu0 0.0
    %3482 = vmatprep.subr.mxu0 0.0
    %3483 = vmatpush1.msra.mxu0 0.0
    %3484 = vmatprep.subr.mxu0 0.0
    %3485 = vmatpush1.msra.mxu0 0.0
    %3486 = vmatprep.subr.mxu0 0.0
    %3487 = vmatpush1.msra.mxu0 0.0
    %3488 = vmatprep.subr.mxu0 0.0
    %3489 = vmatpush1.msra.mxu0 0.0
    %3490 = vmatprep.subr.mxu0 0.0
    %3491 = vmatpush1.msra.mxu0 0.0
    %3492 = vmatprep.subr.mxu0 0.0
    %3493 = vmatpush1.msra.mxu0 0.0
    %3494 = vmatprep.subr.mxu0 0.0
    %3495 = vmatpush1.msra.mxu0 0.0
    %3496 = vmatprep.subr.mxu0 0.0
    %3497 = vmatpush1.msra.mxu0 0.0
    %3498 = vmatprep.subr.mxu0 0.0
    %3499 = vmatpush1.msra.mxu0 %v3466
    %3500 = vmatprep.subr.mxu0 0.0
    %3501 = vmatpush2.msra.mxu0 0.0
    %3502 = vmatprep.subr.mxu0 0.0
    %3503 = vmatpush2.msra.mxu0 0.0
    %3504 = vmatprep.subr.mxu0 0.0
    %3505 = vmatpush2.msra.mxu0 0.0
    %3506 = vmatprep.subr.mxu0 0.0
    %3507 = vmatpush2.msra.mxu0 0.0
    %3508 = vmatprep.subr.mxu0 0.0
    %3509 = vmatpush2.msra.mxu0 0.0
    %3510 = vmatprep.subr.mxu0 0.0
    %3511 = vmatpush2.msra.mxu0 0.0
    %3512 = vmatprep.subr.mxu0 0.0
    %3513 = vmatpush2.msra.mxu0 0.0
    %3514 = vmatprep.subr.mxu0 0.0
    %3515 = vmatpush2.msra.mxu0 0.0
    %3516 = vmatprep.subr.mxu0 0.0
    %3517 = vmatpush2.msra.mxu0 0.0
    %3518 = vmatprep.subr.mxu0 0.0
    %3519 = vmatpush2.msra.mxu0 0.0
    %3520 = vmatprep.subr.mxu0 0.0
    %3521 = vmatpush2.msra.mxu0 0.0
    %3522 = vmatprep.subr.mxu0 0.0
    %3523 = vmatpush2.msra.mxu0 0.0
    %3524 = vmatprep.subr.mxu0 0.0
    %3525 = vmatpush2.msra.mxu0 0.0
    %3526 = vmatprep.subr.mxu0 0.0
    %3527 = vmatpush2.msra.mxu0 0.0
    %3528 = vmatprep.subr.mxu0 0.0
    %3529 = vmatpush2.msra.mxu0 0.0
    %3530 = vmatprep.subr.mxu0 0.0
    %3531 = vmatpush2.msra.mxu0 0.0
    %3532 = vmatprep.mubr.f32.mxu0 0.0
    %3533 = vmatmul.mubr.f32.gmra.mxu0 %v3463
    %v3534 = vpop.f32.mrf.mxu0
    %v3535 = vadd.f32 0.0, %v3534
    %v3536 = vpop.f32.mrf.mxu0
    %3537 = vdwg.mxu0
    %v3539 = vsel %vm197, %v2378, 0
    %v3542 = vsel %vm2856, %v2846, 0
    %3544 = vmatprep.subr.mxu0 0.0
    %3545 = vmatpush1.msra.mxu0 0.0
    %3546 = vmatprep.subr.mxu0 0.0
    %3547 = vmatpush1.msra.mxu0 0.0
    %3548 = vmatprep.subr.mxu0 0.0
    %3549 = vmatpush1.msra.mxu0 0.0
    %3550 = vmatprep.subr.mxu0 0.0
    %3551 = vmatpush1.msra.mxu0 0.0
    %3552 = vmatprep.subr.mxu0 0.0
    %3553 = vmatpush1.msra.mxu0 0.0
    %3554 = vmatprep.subr.mxu0 0.0
    %3555 = vmatpush1.msra.mxu0 0.0
    %3556 = vmatprep.subr.mxu0 0.0
    %3557 = vmatpush1.msra.mxu0 0.0
    %3558 = vmatprep.subr.mxu0 0.0
    %3559 = vmatpush1.msra.mxu0 0.0
    %3560 = vmatprep.subr.mxu0 0.0
    %3561 = vmatpush1.msra.mxu0 0.0
    %3562 = vmatprep.subr.mxu0 0.0
    %3563 = vmatpush1.msra.mxu0 0.0
    %3564 = vmatprep.subr.mxu0 0.0
    %3565 = vmatpush1.msra.mxu0 0.0
    %3566 = vmatprep.subr.mxu0 0.0
    %3567 = vmatpush1.msra.mxu0 0.0
    %3568 = vmatprep.subr.mxu0 0.0
    %3569 = vmatpush1.msra.mxu0 0.0
    %3570 = vmatprep.subr.mxu0 0.0
    %3571 = vmatpush1.msra.mxu0 0.0
    %3572 = vmatprep.subr.mxu0 0.0
    %3573 = vmatpush1.msra.mxu0 0.0
    %3574 = vmatprep.subr.mxu0 0.0
    %3575 = vmatpush1.msra.mxu0 %v3542
    %3576 = vmatprep.subr.mxu0 0.0
    %3577 = vmatpush2.msra.mxu0 0.0
    %3578 = vmatprep.subr.mxu0 0.0
    %3579 = vmatpush2.msra.mxu0 0.0
    %3580 = vmatprep.subr.mxu0 0.0
    %3581 = vmatpush2.msra.mxu0 0.0
    %3582 = vmatprep.subr.mxu0 0.0
    %3583 = vmatpush2.msra.mxu0 0.0
    %3584 = vmatprep.subr.mxu0 0.0
    %3585 = vmatpush2.msra.mxu0 0.0
    %3586 = vmatprep.subr.mxu0 0.0
    %3587 = vmatpush2.msra.mxu0 0.0
    %3588 = vmatprep.subr.mxu0 0.0
    %3589 = vmatpush2.msra.mxu0 0.0
    %3590 = vmatprep.subr.mxu0 0.0
    %3591 = vmatpush2.msra.mxu0 0.0
    %3592 = vmatprep.subr.mxu0 0.0
    %3593 = vmatpush2.msra.mxu0 0.0
    %3594 = vmatprep.subr.mxu0 0.0
    %3595 = vmatpush2.msra.mxu0 0.0
    %3596 = vmatprep.subr.mxu0 0.0
    %3597 = vmatpush2.msra.mxu0 0.0
    %3598 = vmatprep.subr.mxu0 0.0
    %3599 = vmatpush2.msra.mxu0 0.0
    %3600 = vmatprep.subr.mxu0 0.0
    %3601 = vmatpush2.msra.mxu0 0.0
    %3602 = vmatprep.subr.mxu0 0.0
    %3603 = vmatpush2.msra.mxu0 0.0
    %3604 = vmatprep.subr.mxu0 0.0
    %3605 = vmatpush2.msra.mxu0 0.0
    %3606 = vmatprep.subr.mxu0 0.0
    %3607 = vmatpush2.msra.mxu0 0.0
    %3608 = vmatprep.mubr.f32.mxu0 0.0
    %3609 = vmatmul.mubr.f32.gmra.mxu0 %v3539
    %v3610 = vpop.f32.mrf.mxu0
    %v3611 = vadd.f32 0.0, %v3610
    %v3612 = vpop.f32.mrf.mxu0
    %3613 = vdwg.mxu0
    %v3615 = vsel %vm197, %v2454, 0
    %v3618 = vsel %vm2856, %v2847, 0
    %3620 = vmatprep.subr.mxu0 0.0
    %3621 = vmatpush1.msra.mxu0 0.0
    %3622 = vmatprep.subr.mxu0 0.0
    %3623 = vmatpush1.msra.mxu0 0.0
    %3624 = vmatprep.subr.mxu0 0.0
    %3625 = vmatpush1.msra.mxu0 0.0
    %3626 = vmatprep.subr.mxu0 0.0
    %3627 = vmatpush1.msra.mxu0 0.0
    %3628 = vmatprep.subr.mxu0 0.0
    %3629 = vmatpush1.msra.mxu0 0.0
    %3630 = vmatprep.subr.mxu0 0.0
    %3631 = vmatpush1.msra.mxu0 0.0
    %3632 = vmatprep.subr.mxu0 0.0
    %3633 = vmatpush1.msra.mxu0 0.0
    %3634 = vmatprep.subr.mxu0 0.0
    %3635 = vmatpush1.msra.mxu0 0.0
    %3636 = vmatprep.subr.mxu0 0.0
    %3637 = vmatpush1.msra.mxu0 0.0
    %3638 = vmatprep.subr.mxu0 0.0
    %3639 = vmatpush1.msra.mxu0 0.0
    %3640 = vmatprep.subr.mxu0 0.0
    %3641 = vmatpush1.msra.mxu0 0.0
    %3642 = vmatprep.subr.mxu0 0.0
    %3643 = vmatpush1.msra.mxu0 0.0
    %3644 = vmatprep.subr.mxu0 0.0
    %3645 = vmatpush1.msra.mxu0 0.0
    %3646 = vmatprep.subr.mxu0 0.0
    %3647 = vmatpush1.msra.mxu0 0.0
    %3648 = vmatprep.subr.mxu0 0.0
    %3649 = vmatpush1.msra.mxu0 0.0
    %3650 = vmatprep.subr.mxu0 0.0
    %3651 = vmatpush1.msra.mxu0 %v3618
    %3652 = vmatprep.subr.mxu0 0.0
    %3653 = vmatpush2.msra.mxu0 0.0
    %3654 = vmatprep.subr.mxu0 0.0
    %3655 = vmatpush2.msra.mxu0 0.0
    %3656 = vmatprep.subr.mxu0 0.0
    %3657 = vmatpush2.msra.mxu0 0.0
    %3658 = vmatprep.subr.mxu0 0.0
    %3659 = vmatpush2.msra.mxu0 0.0
    %3660 = vmatprep.subr.mxu0 0.0
    %3661 = vmatpush2.msra.mxu0 0.0
    %3662 = vmatprep.subr.mxu0 0.0
    %3663 = vmatpush2.msra.mxu0 0.0
    %3664 = vmatprep.subr.mxu0 0.0
    %3665 = vmatpush2.msra.mxu0 0.0
    %3666 = vmatprep.subr.mxu0 0.0
    %3667 = vmatpush2.msra.mxu0 0.0
    %3668 = vmatprep.subr.mxu0 0.0
    %3669 = vmatpush2.msra.mxu0 0.0
    %3670 = vmatprep.subr.mxu0 0.0
    %3671 = vmatpush2.msra.mxu0 0.0
    %3672 = vmatprep.subr.mxu0 0.0
    %3673 = vmatpush2.msra.mxu0 0.0
    %3674 = vmatprep.subr.mxu0 0.0
    %3675 = vmatpush2.msra.mxu0 0.0
    %3676 = vmatprep.subr.mxu0 0.0
    %3677 = vmatpush2.msra.mxu0 0.0
    %3678 = vmatprep.subr.mxu0 0.0
    %3679 = vmatpush2.msra.mxu0 0.0
    %3680 = vmatprep.subr.mxu0 0.0
    %3681 = vmatpush2.msra.mxu0 0.0
    %3682 = vmatprep.subr.mxu0 0.0
    %3683 = vmatpush2.msra.mxu0 0.0
    %3684 = vmatprep.mubr.f32.mxu0 0.0
    %3685 = vmatmul.mubr.f32.gmra.mxu0 %v3615
    %v3686 = vpop.f32.mrf.mxu0
    %v3687 = vadd.f32 0.0, %v3686
    %v3688 = vpop.f32.mrf.mxu0
    %3689 = vdwg.mxu0
    %v3691 = vsel %vm197, %v2530, 0
    %v3694 = vsel %vm2856, %v2848, 0
    %3696 = vmatprep.subr.mxu0 0.0
    %3697 = vmatpush1.msra.mxu0 0.0
    %3698 = vmatprep.subr.mxu0 0.0
    %3699 = vmatpush1.msra.mxu0 0.0
    %3700 = vmatprep.subr.mxu0 0.0
    %3701 = vmatpush1.msra.mxu0 0.0
    %3702 = vmatprep.subr.mxu0 0.0
    %3703 = vmatpush1.msra.mxu0 0.0
    %3704 = vmatprep.subr.mxu0 0.0
    %3705 = vmatpush1.msra.mxu0 0.0
    %3706 = vmatprep.subr.mxu0 0.0
    %3707 = vmatpush1.msra.mxu0 0.0
    %3708 = vmatprep.subr.mxu0 0.0
    %3709 = vmatpush1.msra.mxu0 0.0
    %3710 = vmatprep.subr.mxu0 0.0
    %3711 = vmatpush1.msra.mxu0 0.0
    %3712 = vmatprep.subr.mxu0 0.0
    %3713 = vmatpush1.msra.mxu0 0.0
    %3714 = vmatprep.subr.mxu0 0.0
    %3715 = vmatpush1.msra.mxu0 0.0
    %3716 = vmatprep.subr.mxu0 0.0
    %3717 = vmatpush1.msra.mxu0 0.0
    %3718 = vmatprep.subr.mxu0 0.0
    %3719 = vmatpush1.msra.mxu0 0.0
    %3720 = vmatprep.subr.mxu0 0.0
    %3721 = vmatpush1.msra.mxu0 0.0
    %3722 = vmatprep.subr.mxu0 0.0
    %3723 = vmatpush1.msra.mxu0 0.0
    %3724 = vmatprep.subr.mxu0 0.0
    %3725 = vmatpush1.msra.mxu0 0.0
    %3726 = vmatprep.subr.mxu0 0.0
    %3727 = vmatpush1.msra.mxu0 %v3694
    %3728 = vmatprep.subr.mxu0 0.0
    %3729 = vmatpush2.msra.mxu0 0.0
    %3730 = vmatprep.subr.mxu0 0.0
    %3731 = vmatpush2.msra.mxu0 0.0
    %3732 = vmatprep.subr.mxu0 0.0
    %3733 = vmatpush2.msra.mxu0 0.0
    %3734 = vmatprep.subr.mxu0 0.0
    %3735 = vmatpush2.msra.mxu0 0.0
    %3736 = vmatprep.subr.mxu0 0.0
    %3737 = vmatpush2.msra.mxu0 0.0
    %3738 = vmatprep.subr.mxu0 0.0
    %3739 = vmatpush2.msra.mxu0 0.0
    %3740 = vmatprep.subr.mxu0 0.0
    %3741 = vmatpush2.msra.mxu0 0.0
    %3742 = vmatprep.subr.mxu0 0.0
    %3743 = vmatpush2.msra.mxu0 0.0
    %3744 = vmatprep.subr.mxu0 0.0
    %3745 = vmatpush2.msra.mxu0 0.0
    %3746 = vmatprep.subr.mxu0 0.0
    %3747 = vmatpush2.msra.mxu0 0.0
    %3748 = vmatprep.subr.mxu0 0.0
    %3749 = vmatpush2.msra.mxu0 0.0
    %3750 = vmatprep.subr.mxu0 0.0
    %3751 = vmatpush2.msra.mxu0 0.0
    %3752 = vmatprep.subr.mxu0 0.0
    %3753 = vmatpush2.msra.mxu0 0.0
    %3754 = vmatprep.subr.mxu0 0.0
    %3755 = vmatpush2.msra.mxu0 0.0
    %3756 = vmatprep.subr.mxu0 0.0
    %3757 = vmatpush2.msra.mxu0 0.0
    %3758 = vmatprep.subr.mxu0 0.0
    %3759 = vmatpush2.msra.mxu0 0.0
    %3760 = vmatprep.mubr.f32.mxu0 0.0
    %3761 = vmatmul.mubr.f32.gmra.mxu0 %v3691
    %v3762 = vpop.f32.mrf.mxu0
    %v3763 = vadd.f32 0.0, %v3762
    %v3764 = vpop.f32.mrf.mxu0
    %3765 = vdwg.mxu0
    %v3767 = vsel %vm197, %v2606, 0
    %v3770 = vsel %vm2856, %v2849, 0
    %3772 = vmatprep.subr.mxu0 0.0
    %3773 = vmatpush1.msra.mxu0 0.0
    %3774 = vmatprep.subr.mxu0 0.0
    %3775 = vmatpush1.msra.mxu0 0.0
    %3776 = vmatprep.subr.mxu0 0.0
    %3777 = vmatpush1.msra.mxu0 0.0
    %3778 = vmatprep.subr.mxu0 0.0
    %3779 = vmatpush1.msra.mxu0 0.0
    %3780 = vmatprep.subr.mxu0 0.0
    %3781 = vmatpush1.msra.mxu0 0.0
    %3782 = vmatprep.subr.mxu0 0.0
    %3783 = vmatpush1.msra.mxu0 0.0
    %3784 = vmatprep.subr.mxu0 0.0
    %3785 = vmatpush1.msra.mxu0 0.0
    %3786 = vmatprep.subr.mxu0 0.0
    %3787 = vmatpush1.msra.mxu0 0.0
    %3788 = vmatprep.subr.mxu0 0.0
    %3789 = vmatpush1.msra.mxu0 0.0
    %3790 = vmatprep.subr.mxu0 0.0
    %3791 = vmatpush1.msra.mxu0 0.0
    %3792 = vmatprep.subr.mxu0 0.0
    %3793 = vmatpush1.msra.mxu0 0.0
    %3794 = vmatprep.subr.mxu0 0.0
    %3795 = vmatpush1.msra.mxu0 0.0
    %3796 = vmatprep.subr.mxu0 0.0
    %3797 = vmatpush1.msra.mxu0 0.0
    %3798 = vmatprep.subr.mxu0 0.0
    %3799 = vmatpush1.msra.mxu0 0.0
    %3800 = vmatprep.subr.mxu0 0.0
    %3801 = vmatpush1.msra.mxu0 0.0
    %3802 = vmatprep.subr.mxu0 0.0
    %3803 = vmatpush1.msra.mxu0 %v3770
    %3804 = vmatprep.subr.mxu0 0.0
    %3805 = vmatpush2.msra.mxu0 0.0
    %3806 = vmatprep.subr.mxu0 0.0
    %3807 = vmatpush2.msra.mxu0 0.0
    %3808 = vmatprep.subr.mxu0 0.0
    %3809 = vmatpush2.msra.mxu0 0.0
    %3810 = vmatprep.subr.mxu0 0.0
    %3811 = vmatpush2.msra.mxu0 0.0
    %3812 = vmatprep.subr.mxu0 0.0
    %3813 = vmatpush2.msra.mxu0 0.0
    %3814 = vmatprep.subr.mxu0 0.0
    %3815 = vmatpush2.msra.mxu0 0.0
    %3816 = vmatprep.subr.mxu0 0.0
    %3817 = vmatpush2.msra.mxu0 0.0
    %3818 = vmatprep.subr.mxu0 0.0
    %3819 = vmatpush2.msra.mxu0 0.0
    %3820 = vmatprep.subr.mxu0 0.0
    %3821 = vmatpush2.msra.mxu0 0.0
    %3822 = vmatprep.subr.mxu0 0.0
    %3823 = vmatpush2.msra.mxu0 0.0
    %3824 = vmatprep.subr.mxu0 0.0
    %3825 = vmatpush2.msra.mxu0 0.0
    %3826 = vmatprep.subr.mxu0 0.0
    %3827 = vmatpush2.msra.mxu0 0.0
    %3828 = vmatprep.subr.mxu0 0.0
    %3829 = vmatpush2.msra.mxu0 0.0
    %3830 = vmatprep.subr.mxu0 0.0
    %3831 = vmatpush2.msra.mxu0 0.0
    %3832 = vmatprep.subr.mxu0 0.0
    %3833 = vmatpush2.msra.mxu0 0.0
    %3834 = vmatprep.subr.mxu0 0.0
    %3835 = vmatpush2.msra.mxu0 0.0
    %3836 = vmatprep.mubr.f32.mxu0 0.0
    %3837 = vmatmul.mubr.f32.gmra.mxu0 %v3767
    %v3838 = vpop.f32.mrf.mxu0
    %v3839 = vadd.f32 0.0, %v3838
    %v3840 = vpop.f32.mrf.mxu0
    %3841 = vdwg.mxu0
    %v3843 = vsel %vm197, %v2682, 0
    %v3846 = vsel %vm2856, %v2850, 0
    %3848 = vmatprep.subr.mxu0 0.0
    %3849 = vmatpush1.msra.mxu0 0.0
    %3850 = vmatprep.subr.mxu0 0.0
    %3851 = vmatpush1.msra.mxu0 0.0
    %3852 = vmatprep.subr.mxu0 0.0
    %3853 = vmatpush1.msra.mxu0 0.0
    %3854 = vmatprep.subr.mxu0 0.0
    %3855 = vmatpush1.msra.mxu0 0.0
    %3856 = vmatprep.subr.mxu0 0.0
    %3857 = vmatpush1.msra.mxu0 0.0
    %3858 = vmatprep.subr.mxu0 0.0
    %3859 = vmatpush1.msra.mxu0 0.0
    %3860 = vmatprep.subr.mxu0 0.0
    %3861 = vmatpush1.msra.mxu0 0.0
    %3862 = vmatprep.subr.mxu0 0.0
    %3863 = vmatpush1.msra.mxu0 0.0
    %3864 = vmatprep.subr.mxu0 0.0
    %3865 = vmatpush1.msra.mxu0 0.0
    %3866 = vmatprep.subr.mxu0 0.0
    %3867 = vmatpush1.msra.mxu0 0.0
    %3868 = vmatprep.subr.mxu0 0.0
    %3869 = vmatpush1.msra.mxu0 0.0
    %3870 = vmatprep.subr.mxu0 0.0
    %3871 = vmatpush1.msra.mxu0 0.0
    %3872 = vmatprep.subr.mxu0 0.0
    %3873 = vmatpush1.msra.mxu0 0.0
    %3874 = vmatprep.subr.mxu0 0.0
    %3875 = vmatpush1.msra.mxu0 0.0
    %3876 = vmatprep.subr.mxu0 0.0
    %3877 = vmatpush1.msra.mxu0 0.0
    %3878 = vmatprep.subr.mxu0 0.0
    %3879 = vmatpush1.msra.mxu0 %v3846
    %3880 = vmatprep.subr.mxu0 0.0
    %3881 = vmatpush2.msra.mxu0 0.0
    %3882 = vmatprep.subr.mxu0 0.0
    %3883 = vmatpush2.msra.mxu0 0.0
    %3884 = vmatprep.subr.mxu0 0.0
    %3885 = vmatpush2.msra.mxu0 0.0
    %3886 = vmatprep.subr.mxu0 0.0
    %3887 = vmatpush2.msra.mxu0 0.0
    %3888 = vmatprep.subr.mxu0 0.0
    %3889 = vmatpush2.msra.mxu0 0.0
    %3890 = vmatprep.subr.mxu0 0.0
    %3891 = vmatpush2.msra.mxu0 0.0
    %3892 = vmatprep.subr.mxu0 0.0
    %3893 = vmatpush2.msra.mxu0 0.0
    %3894 = vmatprep.subr.mxu0 0.0
    %3895 = vmatpush2.msra.mxu0 0.0
    %3896 = vmatprep.subr.mxu0 0.0
    %3897 = vmatpush2.msra.mxu0 0.0
    %3898 = vmatprep.subr.mxu0 0.0
    %3899 = vmatpush2.msra.mxu0 0.0
    %3900 = vmatprep.subr.mxu0 0.0
    %3901 = vmatpush2.msra.mxu0 0.0
    %3902 = vmatprep.subr.mxu0 0.0
    %3903 = vmatpush2.msra.mxu0 0.0
    %3904 = vmatprep.subr.mxu0 0.0
    %3905 = vmatpush2.msra.mxu0 0.0
    %3906 = vmatprep.subr.mxu0 0.0
    %3907 = vmatpush2.msra.mxu0 0.0
    %3908 = vmatprep.subr.mxu0 0.0
    %3909 = vmatpush2.msra.mxu0 0.0
    %3910 = vmatprep.subr.mxu0 0.0
    %3911 = vmatpush2.msra.mxu0 0.0
    %3912 = vmatprep.mubr.f32.mxu0 0.0
    %3913 = vmatmul.mubr.f32.gmra.mxu0 %v3843
    %v3914 = vpop.f32.mrf.mxu0
    %v3915 = vadd.f32 0.0, %v3914
    %v3916 = vpop.f32.mrf.mxu0
    %3917 = vdwg.mxu0
    %v3919 = vsel %vm197, %v2758, 0
    %v3922 = vsel %vm2856, %v2851, 0
    %3924 = vmatprep.subr.mxu0 0.0
    %3925 = vmatpush1.msra.mxu0 0.0
    %3926 = vmatprep.subr.mxu0 0.0
    %3927 = vmatpush1.msra.mxu0 0.0
    %3928 = vmatprep.subr.mxu0 0.0
    %3929 = vmatpush1.msra.mxu0 0.0
    %3930 = vmatprep.subr.mxu0 0.0
    %3931 = vmatpush1.msra.mxu0 0.0
    %3932 = vmatprep.subr.mxu0 0.0
    %3933 = vmatpush1.msra.mxu0 0.0
    %3934 = vmatprep.subr.mxu0 0.0
    %3935 = vmatpush1.msra.mxu0 0.0
    %3936 = vmatprep.subr.mxu0 0.0
    %3937 = vmatpush1.msra.mxu0 0.0
    %3938 = vmatprep.subr.mxu0 0.0
    %3939 = vmatpush1.msra.mxu0 0.0
    %3940 = vmatprep.subr.mxu0 0.0
    %3941 = vmatpush1.msra.mxu0 0.0
    %3942 = vmatprep.subr.mxu0 0.0
    %3943 = vmatpush1.msra.mxu0 0.0
    %3944 = vmatprep.subr.mxu0 0.0
    %3945 = vmatpush1.msra.mxu0 0.0
    %3946 = vmatprep.subr.mxu0 0.0
    %3947 = vmatpush1.msra.mxu0 0.0
    %3948 = vmatprep.subr.mxu0 0.0
    %3949 = vmatpush1.msra.mxu0 0.0
    %3950 = vmatprep.subr.mxu0 0.0
    %3951 = vmatpush1.msra.mxu0 0.0
    %3952 = vmatprep.subr.mxu0 0.0
    %3953 = vmatpush1.msra.mxu0 0.0
    %3954 = vmatprep.subr.mxu0 0.0
    %3955 = vmatpush1.msra.mxu0 %v3922
    %3956 = vmatprep.subr.mxu0 0.0
    %3957 = vmatpush2.msra.mxu0 0.0
    %3958 = vmatprep.subr.mxu0 0.0
    %3959 = vmatpush2.msra.mxu0 0.0
    %3960 = vmatprep.subr.mxu0 0.0
    %3961 = vmatpush2.msra.mxu0 0.0
    %3962 = vmatprep.subr.mxu0 0.0
    %3963 = vmatpush2.msra.mxu0 0.0
    %3964 = vmatprep.subr.mxu0 0.0
    %3965 = vmatpush2.msra.mxu0 0.0
    %3966 = vmatprep.subr.mxu0 0.0
    %3967 = vmatpush2.msra.mxu0 0.0
    %3968 = vmatprep.subr.mxu0 0.0
    %3969 = vmatpush2.msra.mxu0 0.0
    %3970 = vmatprep.subr.mxu0 0.0
    %3971 = vmatpush2.msra.mxu0 0.0
    %3972 = vmatprep.subr.mxu0 0.0
    %3973 = vmatpush2.msra.mxu0 0.0
    %3974 = vmatprep.subr.mxu0 0.0
    %3975 = vmatpush2.msra.mxu0 0.0
    %3976 = vmatprep.subr.mxu0 0.0
    %3977 = vmatpush2.msra.mxu0 0.0
    %3978 = vmatprep.subr.mxu0 0.0
    %3979 = vmatpush2.msra.mxu0 0.0
    %3980 = vmatprep.subr.mxu0 0.0
    %3981 = vmatpush2.msra.mxu0 0.0
    %3982 = vmatprep.subr.mxu0 0.0
    %3983 = vmatpush2.msra.mxu0 0.0
    %3984 = vmatprep.subr.mxu0 0.0
    %3985 = vmatpush2.msra.mxu0 0.0
    %3986 = vmatprep.subr.mxu0 0.0
    %3987 = vmatpush2.msra.mxu0 0.0
    %3988 = vmatprep.mubr.f32.mxu0 0.0
    %3989 = vmatmul.mubr.f32.gmra.mxu0 %v3919
    %v3990 = vpop.f32.mrf.mxu0
    %v3991 = vadd.f32 0.0, %v3990
    %v3992 = vpop.f32.mrf.mxu0
    %3993 = vdwg.mxu0
    %v3995 = vsel %vm197, %v2834, 0
    %v3998 = vsel %vm2856, %v2852, 0
    %4000 = vmatprep.subr.mxu0 0.0
    %4001 = vmatpush1.msra.mxu0 0.0
    %4002 = vmatprep.subr.mxu0 0.0
    %4003 = vmatpush1.msra.mxu0 0.0
    %4004 = vmatprep.subr.mxu0 0.0
    %4005 = vmatpush1.msra.mxu0 0.0
    %4006 = vmatprep.subr.mxu0 0.0
    %4007 = vmatpush1.msra.mxu0 0.0
    %4008 = vmatprep.subr.mxu0 0.0
    %4009 = vmatpush1.msra.mxu0 0.0
    %4010 = vmatprep.subr.mxu0 0.0
    %4011 = vmatpush1.msra.mxu0 0.0
    %4012 = vmatprep.subr.mxu0 0.0
    %4013 = vmatpush1.msra.mxu0 0.0
    %4014 = vmatprep.subr.mxu0 0.0
    %4015 = vmatpush1.msra.mxu0 0.0
    %4016 = vmatprep.subr.mxu0 0.0
    %4017 = vmatpush1.msra.mxu0 0.0
    %4018 = vmatprep.subr.mxu0 0.0
    %4019 = vmatpush1.msra.mxu0 0.0
    %4020 = vmatprep.subr.mxu0 0.0
    %4021 = vmatpush1.msra.mxu0 0.0
    %4022 = vmatprep.subr.mxu0 0.0
    %4023 = vmatpush1.msra.mxu0 0.0
    %4024 = vmatprep.subr.mxu0 0.0
    %4025 = vmatpush1.msra.mxu0 0.0
    %4026 = vmatprep.subr.mxu0 0.0
    %4027 = vmatpush1.msra.mxu0 0.0
    %4028 = vmatprep.subr.mxu0 0.0
    %4029 = vmatpush1.msra.mxu0 0.0
    %4030 = vmatprep.subr.mxu0 0.0
    %4031 = vmatpush1.msra.mxu0 %v3998
    %4032 = vmatprep.subr.mxu0 0.0
    %4033 = vmatpush2.msra.mxu0 0.0
    %4034 = vmatprep.subr.mxu0 0.0
    %4035 = vmatpush2.msra.mxu0 0.0
    %4036 = vmatprep.subr.mxu0 0.0
    %4037 = vmatpush2.msra.mxu0 0.0
    %4038 = vmatprep.subr.mxu0 0.0
    %4039 = vmatpush2.msra.mxu0 0.0
    %4040 = vmatprep.subr.mxu0 0.0
    %4041 = vmatpush2.msra.mxu0 0.0
    %4042 = vmatprep.subr.mxu0 0.0
    %4043 = vmatpush2.msra.mxu0 0.0
    %4044 = vmatprep.subr.mxu0 0.0
    %4045 = vmatpush2.msra.mxu0 0.0
    %4046 = vmatprep.subr.mxu0 0.0
    %4047 = vmatpush2.msra.mxu0 0.0
    %4048 = vmatprep.subr.mxu0 0.0
    %4049 = vmatpush2.msra.mxu0 0.0
    %4050 = vmatprep.subr.mxu0 0.0
    %4051 = vmatpush2.msra.mxu0 0.0
    %4052 = vmatprep.subr.mxu0 0.0
    %4053 = vmatpush2.msra.mxu0 0.0
    %4054 = vmatprep.subr.mxu0 0.0
    %4055 = vmatpush2.msra.mxu0 0.0
    %4056 = vmatprep.subr.mxu0 0.0
    %4057 = vmatpush2.msra.mxu0 0.0
    %4058 = vmatprep.subr.mxu0 0.0
    %4059 = vmatpush2.msra.mxu0 0.0
    %4060 = vmatprep.subr.mxu0 0.0
    %4061 = vmatpush2.msra.mxu0 0.0
    %4062 = vmatprep.subr.mxu0 0.0
    %4063 = vmatpush2.msra.mxu0 0.0
    %4064 = vmatprep.mubr.f32.mxu0 0.0
    %4065 = vmatmul.mubr.f32.gmra.mxu0 %v3995
    %v4066 = vpop.f32.mrf.mxu0
    %v4067 = vadd.f32 0.0, %v4066
    %v4068 = vpop.f32.mrf.mxu0
    %4069 = vdwg.mxu0
    %vm4070 = vcmask 130048
    %v4071 = vsel %vm4070, %v2927, 0.0
    %v4072 = vsel %vm4070, %v3079, 0.0
    %v4073 = vadd.f32 %v4071, %v4072
    %v4074 = vsel %vm4070, %v3231, 0.0
    %v4075 = vadd.f32 %v4073, %v4074
    %v4076 = vsel %vm4070, %v3383, 0.0
    %v4077 = vadd.f32 %v4075, %v4076
    %v4078 = vsel %vm4070, %v3535, 0.0
    %v4079 = vadd.f32 %v4077, %v4078
    %v4080 = vsel %vm4070, %v3687, 0.0
    %v4081 = vadd.f32 %v4079, %v4080
    %v4082 = vsel %vm4070, %v3839, 0.0
    %v4083 = vadd.f32 %v4081, %v4082
    %v4084 = vsel %vm4070, %v3991, 0.0
    %v4085 = vadd.f32 %v4083, %v4084
    %v4086 = vsel %vm4070, %v3003, 0.0
    %v4087 = vsel %vm4070, %v3155, 0.0
    %v4088 = vadd.f32 %v4086, %v4087
    %v4089 = vsel %vm4070, %v3307, 0.0
    %v4090 = vadd.f32 %v4088, %v4089
    %v4091 = vsel %vm4070, %v3459, 0.0
    %v4092 = vadd.f32 %v4090, %v4091
    %v4093 = vsel %vm4070, %v3611, 0.0
    %v4094 = vadd.f32 %v4092, %v4093
    %v4095 = vsel %vm4070, %v3763, 0.0
    %v4096 = vadd.f32 %v4094, %v4095
    %v4097 = vsel %vm4070, %v3915, 0.0
    %v4098 = vadd.f32 %v4096, %v4097
    %v4099 = vsel %vm4070, %v4067, 0.0
    %v4100 = vadd.f32 %v4098, %v4099
    %v4101 = vld [vmem:[#allocation5] sm:$0xff]
    %v4102 = vld [vmem:[#allocation5 + $0x8] sm:$0xff]
    %v4103 = vadd.f32 %v4085, %v4101
    %v4104 = vadd.f32 %v4100, %v4102
    %v4105 = vsel %vm4070, %v4103, 0.0
    %4106 = vadd.xlane.f32.xlu0 %v4105
    %v4107 = vpop.xlane.xlu0 %4106
    %v4108 = vsel %vm4070, %v4104, 0.0
    %4109 = vadd.xlane.f32.xlu0 %v4108
    %v4110 = vpop.xlane.xlu0 %4109
    %v4111 = vrcp.pop 16.0
    %v4112 = vmul.f32 %v4107, %v4111
    %v4113 = vmul.f32 %v4110, %v4111
    %v4114 = vsub.f32 %v4103, %v4112
    %v4115 = vsub.f32 %v4104, %v4113
    %v4116 = vmul.f32 %v4114, %v4114
    %v4117 = vmul.f32 %v4115, %v4115
    %v4118 = vsel %vm4070, %v4116, 0.0
    %4119 = vadd.xlane.f32.xlu0 %v4118
    %v4120 = vpop.xlane.xlu0 %4119
    %v4121 = vsel %vm4070, %v4117, 0.0
    %4122 = vadd.xlane.f32.xlu0 %v4121
    %v4123 = vpop.xlane.xlu0 %4122
    %v4124 = vmul.f32 %v4120, %v4111
    %v4125 = vmul.f32 %v4123, %v4111
    %v4126 = vadd.f32 %v4124, 1e-05
    %v4127 = vadd.f32 %v4125, 1e-05
    %v4128 = vrsqrt.pop %v4126
    %v4129 = vrsqrt.pop %v4127
    %v4130 = vmul.f32 %v4114, %v4128
    %v4131 = vmul.f32 %v4115, %v4129
    %4132 = vst.msk [vmem:[#allocation10] sm:$0xff] %vm4070, %v4130
    %4133 = vst.msk [vmem:[#allocation10 + $0x8] sm:$0xff] %vm4070, %v4131
    // Predicated region
    $region34: #{tpu_custom_call.1} parent=1 // pred_check
      _
    $region35: #{tpu_custom_call.1} parent=1 // pred_check_branch
      %4135 = sbr.rel (0) target = $region37
    $region36: #{tpu_custom_call.1} parent=1 // pred_region
      %s4137 = ssub.s32 256, 256
      %4138 = vsyncadd [#allocation4], %s4137
      %s4139 = sshll.u32 [#allocation10], 4
      %s4140 = int_to_ptr.vmem [resolvable:$true] %s4139
      %4145 = dma.vmem_to_hbm [thread:$0]  %s4140, 256, %s4, [#allocation4], 128, 128, 8
    $region37: #{tpu_custom_call.1} parent=1 // pred_fallthru
      _
    // Predicated region
    $region38: #{tpu_custom_call.1} parent=1 // pred_check
      _
    $region39: #{tpu_custom_call.1} parent=1 // pred_check_branch
      %4147 = sbr.rel (0) target = $region41
    $region40: #{tpu_custom_call.1} parent=1 // pred_region
      _
    $region41: #{tpu_custom_call.1} parent=1 // pred_fallthru
      _
    // Predicated region
    $region42: #{tpu_custom_call.1} parent=1 // pred_check
      _
    $region43: #{tpu_custom_call.1} parent=1 // pred_check_branch
      %4149 = sbr.rel (0) target = $region45
    $region44: #{tpu_custom_call.1} parent=1 // pred_region
      %4150 = dma.done [#allocation4], 256
    $region45: #{tpu_custom_call.1} parent=1 // pred_fallthru
      _
    // Predicated region
    $region46: #{tpu_custom_call.1} parent=1 // pred_check
      _
    $region47: #{tpu_custom_call.1} parent=1 // pred_check_branch
      %4152 = sbr.rel (0) target = $region49
    $region48: #{tpu_custom_call.1} parent=1 // pred_region
      _
    $region49: #{tpu_custom_call.1} parent=1 // pred_fallthru
      _
    %4153 = vsyncpa [#allocation3], 1
    %4154 = vsyncpa [#allocation6], 1
    %4155 = vsyncpa [#allocation9], 1
    %4156 = vsyncpa [#allocation4], 1

</llo_original>
